<compile_context>
chip_gen: v7x
topology: tpu7x:2x2x1
jax: 0.10.0
libtpu: 0.0.40
codegen_flags: <defaults>
</compile_context>

<pallas_src>
import math
import functools

import jax
import jax.numpy as jnp
from jax.experimental import pallas as pl
from jax.experimental.pallas import tpu as pltpu

ACTIONS = [0, 1, 2, 3, 4, 5, 6]

LANE = 128
DEFAULT_MAX_TILE_B = 1024       # multiple of 256: fills MXU M passes on all gens
SMALL_BATCH_XLA_CUTOFF = 64     # below this, pallas_call overhead dominates


def _round_up(x, m):
    return (x + m - 1) // m * m


def _num_tensorcores():
    """Best-effort: v7x has 2 TensorCores per chip; v5e/v6e have 1."""
    try:
        kind = jax.devices()[0].device_kind.lower().replace(" ", "")
        if "v7" in kind or "tpu7" in kind:
            return 2
    except Exception:
        pass
    return 1


def _choose_tile(B, max_tile_b, ncores):
    """Pick (row tile, padded batch). Single-TC: whole (<=max_tile) batch in one
    step.  Dual-TC (v7x): keep >= 2 grid steps so both cores get work."""
    b8 = _round_up(B, 8)
    max_tile_b = max(8, _round_up(max_tile_b, 8))
    if b8 > max_tile_b:
        tb = max_tile_b                      # large batch: big aligned tiles
    elif ncores > 1 and b8 >= 16:
        tb = _round_up((b8 + ncores - 1) // ncores, 8)   # split across TCs
    else:
        tb = b8                              # one grid step
    b_pad = _round_up(b8, tb)
    return tb, b_pad


def _actor_kernel(n_hidden, *refs):
    # refs = (x_ref, w0, b0, w1, b1, ..., w_out_pad, b_out_pad, out_ref)
    x_ref = refs[0]
    out_ref = refs[-1]
    params = refs[1:-1]

    h = x_ref[...]
    # hidden layers: tanh(x @ W + b)   (tanh -> EUP, matmul -> MXU)
    for i in range(n_hidden):
        w = params[2 * i][...]
        b = params[2 * i + 1][...]
        h = jnp.tanh(jnp.dot(h, w, preferred_element_type=jnp.float32) + b)

    # output layer (lane-padded head) + softmax over last dim
    wo = params[2 * n_hidden][...]
    bo = params[2 * n_hidden + 1][...]
    logits = jnp.dot(h, wo, preferred_element_type=jnp.float32) + bo

    m = jnp.max(logits, axis=-1, keepdims=True)
    e = jnp.exp(logits - m)                 # padded cols: exp(-1e30 - m) == 0
    denom = jnp.sum(e, axis=-1, keepdims=True)
    # exact divide: denom is (tb, 1) so cost is negligible; approx reciprocal
    # (~1e-4 rel err) would risk the 1e-5 reference tolerance.
    out_ref[...] = (e / denom).astype(out_ref.dtype)


def prepare_actor_params(params, *, out_lanes=LANE):
    """Pad the output head to a lane-dense width ONCE; reuse across calls.

    params: flat list [w0, b0, w1, b1, ..., wo, bo]; weights are
    [in_dim, out_dim] (transposed vs. PyTorch), biases [1, out_dim].
    Returns (kparams, meta).
    """
    n_hidden = len(params) // 2 - 1
    wo, bo = params[-2], params[-1]
    a_size = int(wo.shape[-1])
    a_pad = max(_round_up(a_size, 8), int(out_lanes))
    wo_p = jnp.zeros((wo.shape[0], a_pad), jnp.float32).at[:, :a_size].set(
        wo.astype(jnp.float32))
    bo_p = (jnp.full((1, a_pad), -1e30, jnp.float32)
            .at[:, :a_size].set(bo.reshape(1, a_size).astype(jnp.float32)))
    kparams = tuple(jnp.asarray(p, jnp.float32) for p in params[:-2]) + (wo_p, bo_p)
    meta = dict(n_hidden=n_hidden, o_size=int(params[0].shape[0]),
                a_size=a_size, a_pad=a_pad)
    return kparams, meta


def softmax_actor_forward(x, prepared, *, max_tile_b=DEFAULT_MAX_TILE_B,
                          trim=True):
    """x: [B, o_size] float32; prepared = prepare_actor_params(params).

    trim=True  -> [B, a_size] probabilities (module semantics).
    trim=False -> padded output (pad columns are exactly 0; Pallas path also
                  keeps pad rows), saving the post-kernel slice copy.
    """
    kparams, meta = prepared
    n_hidden, o_size = meta["n_hidden"], meta["o_size"]
    a_size, a_pad = meta["a_size"], meta["a_pad"]
    B = x.shape[0]
    assert x.shape[1] == o_size

    # Tiny per-timestep calls: plain XLA is lower latency than any pallas_call.
    if B < SMALL_BATCH_XLA_CUTOFF:
        h = x
        for i in range(n_hidden):
            h = jnp.tanh(h @ kparams[2 * i] + kparams[2 * i + 1])
        logits = h @ kparams[2 * n_hidden] + kparams[2 * n_hidden + 1]
        probs = jax.nn.softmax(logits, axis=-1)
        return probs[:, :a_size] if trim else probs

    tb, b_pad = _choose_tile(B, max_tile_b, _num_tensorcores())
    if b_pad != B:
        x = jnp.pad(x, ((0, b_pad - B), (0, 0)))
    grid = (b_pad // tb,)

    kernel = functools.partial(_actor_kernel, n_hidden)

    in_specs = [pl.BlockSpec((tb, o_size), lambda i: (i, 0))]
    for p in kparams:
        # full-array block, constant index -> DMA'd once, stays VMEM-resident
        in_specs.append(pl.BlockSpec(p.shape, lambda i: (0, 0)))
    out_spec = pl.BlockSpec((tb, a_pad), lambda i: (i, 0))

    out = pl.pallas_call(
        kernel,
        out_shape=jax.ShapeDtypeStruct((b_pad, a_pad), jnp.float32),
        grid=grid,
        in_specs=in_specs,
        out_specs=out_spec,
        compiler_params=pltpu.CompilerParams(
            dimension_semantics=("parallel",)),
    )(x, *kparams)

    if trim:
        return out[:B, :a_size]
    return out


def init_params(key, o_size, a_size, h_size, h_layers):
    """Deterministic init mirroring the PyTorch module's shapes.

    Hidden layers: xavier_uniform, gain = calculate_gain('tanh') = 5/3, bias 0.
    Output layer: PyTorch default nn.Linear init (uniform +-1/sqrt(fan_in))."""
    params = []
    gain = 5.0 / 3.0
    dims = [o_size] + [h_size] * h_layers
    for i in range(h_layers):
        fan_in, fan_out = dims[i], dims[i + 1]
        key, wk = jax.random.split(key)
        bound = gain * math.sqrt(6.0 / (fan_in + fan_out))
        w = jax.random.uniform(wk, (fan_in, fan_out), jnp.float32, -bound, bound)
        b = jnp.zeros((1, fan_out), jnp.float32)
        params += [w, b]
    fan_in = h_size
    bound = 1.0 / math.sqrt(fan_in)
    key, wk, bk = jax.random.split(key, 3)
    wo = jax.random.uniform(wk, (h_size, a_size), jnp.float32, -bound, bound)
    bo = jax.random.uniform(bk, (1, a_size), jnp.float32, -bound, bound)
    params += [wo, bo]
    return params


def reference_forward(x, params):
    n_hidden = len(params) // 2 - 1
    h = x
    for i in range(n_hidden):
        h = jnp.tanh(h @ params[2 * i] + params[2 * i + 1])
    logits = h @ params[2 * n_hidden] + params[2 * n_hidden + 1]
    return jax.nn.softmax(logits, axis=-1)


if __name__ == "__main__":
    # Shapes consistent with the module: o_size=32, h_size=32, h_layers=2,
    # a_size=len(ACTIONS)=7.
    o_size, h_size, h_layers, a_size = 32, 32, 2, len(ACTIONS)

    key = jax.random.PRNGKey(0)
    key, xk_big, xk_mid, xk_small = jax.random.split(key, 4)
    params = init_params(key, o_size, a_size, h_size, h_layers)
    prepared = prepare_actor_params(params)      # pad output head ONCE

    # batched rollout-style call: exercises multi-tile grid (2 x 1024 rows on
    # v5e/v6e, 2 x 1024 on v7x as well), padded (un-trimmed) output path
    x_big = jax.random.normal(xk_big, (2048, o_size), jnp.float32)
    probs_big = jax.block_until_ready(
        softmax_actor_forward(x_big, prepared, trim=False))
    ref_big = reference_forward(x_big, params)
    assert probs_big.shape[1] == prepared[1]["a_pad"]
    assert bool(jnp.all(probs_big[:, a_size:] == 0.0))          # pad cols exact 0
    assert jnp.allclose(jnp.sum(probs_big[:2048, :a_size], -1), 1.0, atol=1e-5)
    assert jnp.allclose(probs_big[:2048, :a_size], ref_big, atol=1e-5, rtol=1e-5)

    # non-multiple batch: exercises row padding + single-step (or 2-step on
    # v7x) grid, trimmed module-semantics output
    x_mid = jax.random.normal(xk_mid, (200, o_size), jnp.float32)
    probs_mid = jax.block_until_ready(softmax_actor_forward(x_mid, prepared))
    assert probs_mid.shape == (200, a_size)
    assert jnp.allclose(probs_mid, reference_forward(x_mid, params),
                        atol=1e-5, rtol=1e-5)

    # tiny per-timestep call: routed to the plain-XLA fallback path
    x_small = jax.random.normal(xk_small, (8, o_size), jnp.float32)
    probs_small = jax.block_until_ready(softmax_actor_forward(x_small, prepared))
    assert probs_small.shape == (8, a_size)
    assert jnp.allclose(probs_small, reference_forward(x_small, params),
                        atol=1e-5, rtol=1e-5)

    # TODO(synk): get_action's torch.multinomial sampling / log-prob gather /
    # entropy are consumer-side ops on the returned probs, not part of the
    # module's forward, and are left to the host-side wrapper.
    print("KERNEL_OK")
</pallas_src>

<mosaic_0001>
module attributes {stable_mosaic.version = 11 : i64} {
  func.func @_actor_kernel(%arg0: i32, %arg1: memref<1024x32xf32, #tpu.memory_space<vmem>>, %arg2: memref<32x32xf32, #tpu.memory_space<vmem>>, %arg3: memref<1x32xf32, #tpu.memory_space<vmem>>, %arg4: memref<32x32xf32, #tpu.memory_space<vmem>>, %arg5: memref<1x32xf32, #tpu.memory_space<vmem>>, %arg6: memref<32x128xf32, #tpu.memory_space<vmem>>, %arg7: memref<1x128xf32, #tpu.memory_space<vmem>>, %arg8: memref<1024x128xf32, #tpu.memory_space<vmem>>) attributes {dimension_semantics = [#tpu.dimension_semantics<parallel>], iteration_bounds = array<i64: 2>, scalar_prefetch = 0 : i64, scratch_operands = 0 : i64, tpu.core_type = #tpu.core_type<tc>, window_params = [{transform_indices = @transform_0, window_bounds = array<i64: 1024, 32>}, {pipeline_mode = #tpu.pipeline_mode<synchronous>, transform_indices = @transform_1, window_bounds = array<i64: 32, 32>}, {pipeline_mode = #tpu.pipeline_mode<synchronous>, transform_indices = @transform_2, window_bounds = array<i64: 1, 32>}, {pipeline_mode = #tpu.pipeline_mode<synchronous>, transform_indices = @transform_3, window_bounds = array<i64: 32, 32>}, {pipeline_mode = #tpu.pipeline_mode<synchronous>, transform_indices = @transform_4, window_bounds = array<i64: 1, 32>}, {pipeline_mode = #tpu.pipeline_mode<synchronous>, transform_indices = @transform_5, window_bounds = array<i64: 32, 128>}, {pipeline_mode = #tpu.pipeline_mode<synchronous>, transform_indices = @transform_6, window_bounds = array<i64: 1, 128>}, {transform_indices = @transform_7, window_bounds = array<i64: 1024, 128>}]} {
    %c0 = arith.constant 0 : index
    %c0_0 = arith.constant 0 : index
    %0 = vector.load %arg1[%c0, %c0_0] : memref<1024x32xf32, #tpu.memory_space<vmem>>, vector<1024x32xf32>
    %c0_1 = arith.constant 0 : index
    %c0_2 = arith.constant 0 : index
    %1 = vector.load %arg2[%c0_1, %c0_2] : memref<32x32xf32, #tpu.memory_space<vmem>>, vector<32x32xf32>
    %c0_3 = arith.constant 0 : index
    %c0_4 = arith.constant 0 : index
    %2 = vector.load %arg3[%c0_3, %c0_4] : memref<1x32xf32, #tpu.memory_space<vmem>>, vector<1x32xf32>
    %cst = arith.constant dense<0.000000e+00> : vector<1024x32xf32>
    %3 = tpu.matmul %0, %1, %cst {dimension_numbers = #tpu.dot_dimension_numbers<[1], [0], [0], [1], [0, 0, 1, 1], [], []>} : vector<1024x32xf32>, vector<32x32xf32>, vector<1024x32xf32> -> vector<1024x32xf32>
    %4 = vector.broadcast %2 : vector<1x32xf32> to vector<1024x32xf32>
    %5 = arith.addf %3, %4 : vector<1024x32xf32>
    %6 = math.tanh %5 : vector<1024x32xf32>
    %c0_5 = arith.constant 0 : index
    %c0_6 = arith.constant 0 : index
    %7 = vector.load %arg4[%c0_5, %c0_6] : memref<32x32xf32, #tpu.memory_space<vmem>>, vector<32x32xf32>
    %c0_7 = arith.constant 0 : index
    %c0_8 = arith.constant 0 : index
    %8 = vector.load %arg5[%c0_7, %c0_8] : memref<1x32xf32, #tpu.memory_space<vmem>>, vector<1x32xf32>
    %cst_9 = arith.constant dense<0.000000e+00> : vector<1024x32xf32>
    %9 = tpu.matmul %6, %7, %cst_9 {dimension_numbers = #tpu.dot_dimension_numbers<[1], [0], [0], [1], [0, 0, 1, 1], [], []>} : vector<1024x32xf32>, vector<32x32xf32>, vector<1024x32xf32> -> vector<1024x32xf32>
    %10 = vector.broadcast %8 : vector<1x32xf32> to vector<1024x32xf32>
    %11 = arith.addf %9, %10 : vector<1024x32xf32>
    %12 = math.tanh %11 : vector<1024x32xf32>
    %c0_10 = arith.constant 0 : index
    %c0_11 = arith.constant 0 : index
    %13 = vector.load %arg6[%c0_10, %c0_11] : memref<32x128xf32, #tpu.memory_space<vmem>>, vector<32x128xf32>
    %c0_12 = arith.constant 0 : index
    %c0_13 = arith.constant 0 : index
    %14 = vector.load %arg7[%c0_12, %c0_13] : memref<1x128xf32, #tpu.memory_space<vmem>>, vector<1x128xf32>
    %cst_14 = arith.constant dense<0.000000e+00> : vector<1024x128xf32>
    %15 = tpu.matmul %12, %13, %cst_14 {dimension_numbers = #tpu.dot_dimension_numbers<[1], [0], [0], [1], [0, 0, 1, 1], [], []>} : vector<1024x32xf32>, vector<32x128xf32>, vector<1024x128xf32> -> vector<1024x128xf32>
    %16 = vector.broadcast %14 : vector<1x128xf32> to vector<1024x128xf32>
    %17 = arith.addf %15, %16 : vector<1024x128xf32>
    %cst_15 = arith.constant dense<0xFF800000> : vector<1024xf32>
    %18 = vector.multi_reduction <maximumf>, %17, %cst_15 [1] : vector<1024x128xf32> to vector<1024xf32>
    %19 = vector.shape_cast %18 : vector<1024xf32> to vector<1024x1xf32>
    %20 = vector.broadcast %19 : vector<1024x1xf32> to vector<1024x128xf32>
    %21 = arith.subf %17, %20 : vector<1024x128xf32>
    %22 = math.exp %21 : vector<1024x128xf32>
    %cst_16 = arith.constant dense<0.000000e+00> : vector<1024xf32>
    %23 = vector.multi_reduction <add>, %22, %cst_16 [1] : vector<1024x128xf32> to vector<1024xf32>
    %24 = vector.shape_cast %23 : vector<1024xf32> to vector<1024x1xf32>
    %25 = vector.broadcast %24 : vector<1024x1xf32> to vector<1024x128xf32>
    %26 = arith.divf %22, %25 : vector<1024x128xf32>
    %c0_17 = arith.constant 0 : index
    %c0_18 = arith.constant 0 : index
    %27 = vector.load %arg8[%c0_17, %c0_18] : memref<1024x128xf32, #tpu.memory_space<vmem>>, vector<1024x128xf32>
    tpu.vector_store %arg8[%c0_17, %c0_18], %26 {strides = array<i32>} : memref<1024x128xf32, #tpu.memory_space<vmem>>, vector<1024x128xf32>,
    return
  }
  func.func @transform_0(%arg0: i32) -> (i32, i32) {
    %c0_i32 = arith.constant 0 : i32
    %c0_i32_0 = arith.constant 0 : i32
    return %arg0, %c0_i32 : i32, i32
  }
  func.func @transform_1(%arg0: i32) -> (i32, i32) {
    %c0_i32 = arith.constant 0 : i32
    %c0_i32_0 = arith.constant 0 : i32
    %c0_i32_1 = arith.constant 0 : i32
    return %c0_i32, %c0_i32_0 : i32, i32
  }
  func.func @transform_2(%arg0: i32) -> (i32, i32) {
    %c0_i32 = arith.constant 0 : i32
    %c0_i32_0 = arith.constant 0 : i32
    %c0_i32_1 = arith.constant 0 : i32
    return %c0_i32, %c0_i32_0 : i32, i32
  }
  func.func @transform_3(%arg0: i32) -> (i32, i32) {
    %c0_i32 = arith.constant 0 : i32
    %c0_i32_0 = arith.constant 0 : i32
    %c0_i32_1 = arith.constant 0 : i32
    return %c0_i32, %c0_i32_0 : i32, i32
  }
  func.func @transform_4(%arg0: i32) -> (i32, i32) {
    %c0_i32 = arith.constant 0 : i32
    %c0_i32_0 = arith.constant 0 : i32
    %c0_i32_1 = arith.constant 0 : i32
    return %c0_i32, %c0_i32_0 : i32, i32
  }
  func.func @transform_5(%arg0: i32) -> (i32, i32) {
    %c0_i32 = arith.constant 0 : i32
    %c0_i32_0 = arith.constant 0 : i32
    %c0_i32_1 = arith.constant 0 : i32
    return %c0_i32, %c0_i32_0 : i32, i32
  }
  func.func @transform_6(%arg0: i32) -> (i32, i32) {
    %c0_i32 = arith.constant 0 : i32
    %c0_i32_0 = arith.constant 0 : i32
    %c0_i32_1 = arith.constant 0 : i32
    return %c0_i32, %c0_i32_0 : i32, i32
  }
  func.func @transform_7(%arg0: i32) -> (i32, i32) {
    %c0_i32 = arith.constant 0 : i32
    %c0_i32_0 = arith.constant 0 : i32
    return %arg0, %c0_i32 : i32, i32
  }
}

</mosaic_0001>

<llo_original>
// kernel: tpu_custom_call.1
$region0: #{tpu_custom_call.1}
  #allocation0 [shape = 'u32[]', space=smem, size = 0x4, offset = 0x4, fixed_abs, tag = 'smem constant byte address 0x4 - core index']
  #allocation1 [shape = 'u32[144,128]{1,0:T(1,128)}', space=vmem, size = 0x12000, scoped, tag = 'internal scratch']
  %s0 = inlined_call_operand.vmem [shape: f32[2048,32], index: 0, kind: input, shape index: {}]
  %s1 = inlined_call_operand.vmem [shape: f32[32,32], index: 1, kind: input, shape index: {}]
  %s2 = inlined_call_operand.vmem [shape: f32[1,32], index: 2, kind: input, shape index: {}]
  %s3 = inlined_call_operand.vmem [shape: f32[32,32], index: 3, kind: input, shape index: {}]
  %s4 = inlined_call_operand.vmem [shape: f32[1,32], index: 4, kind: input, shape index: {}]
  %s5 = inlined_call_operand.vmem [shape: f32[32,128], index: 5, kind: input, shape index: {}]
  %s6 = inlined_call_operand.vmem [shape: f32[1,128], index: 6, kind: input, shape index: {}]
  %s7 = inlined_call_operand.hbm [shape: f32[2048,128], index: 7, kind: output, shape index: {}]
  %s8 = sld [smem:[#allocation0]]
  $region61: #{tpu_custom_call.1} parent=0
    _
  %s10 = ssub.s32 1, %s8
  %s11 = scalar_select 0, %s10, %s8
  $region1: #{tpu_custom_call.1} parent=0
    #allocation2 [shape = 'u8[1048576]{0}', space=vmem, size = 0x100000, scoped, tag = 'output window, operand 0']
    #allocation3 [shape = 's32[2]{0}', space=sflag, size = 0x8, scoped, tag = 'scoped memory for tpu_custom_call.1']
    %12 = vsyncpa [#allocation3], 0
    %s13 = scalar_lea.sflag [#allocation3], 1
    %14 = vsyncpa %s13, 0
    loop: start=0, step=1, limit=4
    $region2: #{tpu_custom_call.1} parent=1 // loop_pre_header
      _
    $region3: #{tpu_custom_call.1} parent=1 // loop_header
      %s16 = sphi 0, %s20
      %p17 = scmp.ge.s32.totalorder %s16, 4
      %s26 = sphi 0, %s28
      %s29 = sphi 0, %s26
      %s30 = sphi 0, %s29
      %s46 = sphi 0, %s30
      %s50 = sphi 0, %s50
      %s52 = sphi 0, %s50
      %s53 = sphi 0, %s52
      %s67 = sphi 0, %s53
      %s71 = sphi 0, %s71
      %s73 = sphi 0, %s71
      %s74 = sphi 0, %s73
      %s88 = sphi 0, %s74
      %s92 = sphi 0, %s92
      %s94 = sphi 0, %s92
      %s95 = sphi 0, %s94
      %s109 = sphi 0, %s95
      %s113 = sphi 0, %s113
      %s115 = sphi 0, %s113
      %s116 = sphi 0, %s115
      %s130 = sphi 0, %s116
      %s134 = sphi 0, %s134
      %s136 = sphi 0, %s134
      %s137 = sphi 0, %s136
      %s151 = sphi 0, %s137
      %s155 = sphi 0, %s155
      %s157 = sphi 0, %s155
      %s158 = sphi 0, %s157
      %s172 = sphi 0, %s158
      %s178 = sphi 0, %s180
      %s181 = sphi 0, %s178
      %s182 = sphi 0, %s181
      %s198 = sphi 0, %s182
    $region4: #{tpu_custom_call.1} parent=1 // loop_header_branch
      %19 = sbr.rel (%p17) target = $region8
    $region5: #{tpu_custom_call.1} parent=1 // loop_body
      %s21 = ssub.s32 %s16, 1
      %s22 = ssub.s32 %s16, 2
      %s23 = sadd.s32 %s16, 1
      %s24 = ssub.s32 %s16, %s23
      %p25 = scmp.eq.s32.totalorder %s24, 0
      %s27 = sadd.s32 %s26, 1
      %s28 = scalar_select %p25, %s26, %s27
      %p31 = pneg %p25
      %p32 = scmp.eq.s32.totalorder %s16, 1
      %p33 = por %p31, %p32
      %p34 = scmp.ne.s32.totalorder %s26, %s29
      %p35 = scmp.eq.s32.totalorder %s16, 0
      %p36 = por %p34, %p35
      %p37 = scmp.ne.s32.totalorder %s26, %s29
      %p38 = scmp.eq.s32.totalorder %s21, 1
      %p39 = por %p37, %p38
      %p40 = scmp.ne.s32.totalorder %s29, %s30
      %p41 = scmp.eq.s32.totalorder %s21, 0
      %p42 = por %p40, %p41
      %p43 = scmp.ne.s32.totalorder %s29, %s30
      %p44 = scmp.eq.s32.totalorder %s22, 1
      %p45 = por %p43, %p44
      %p47 = scmp.ne.s32.totalorder %s30, %s46
      %p48 = scmp.eq.s32.totalorder %s22, 0
      %p49 = por %p47, %p48
      %s51 = sadd.s32 %s50, 1
      %p54 = scmp.eq.s32.totalorder %s16, 1
      %p55 = scmp.ne.s32.totalorder %s50, %s52
      %p56 = scmp.eq.s32.totalorder %s16, 0
      %p57 = por %p55, %p56
      %p58 = scmp.ne.s32.totalorder %s50, %s52
      %p59 = scmp.eq.s32.totalorder %s21, 1
      %p60 = por %p58, %p59
      %p61 = scmp.ne.s32.totalorder %s52, %s53
      %p62 = scmp.eq.s32.totalorder %s21, 0
      %p63 = por %p61, %p62
      %p64 = scmp.ne.s32.totalorder %s52, %s53
      %p65 = scmp.eq.s32.totalorder %s22, 1
      %p66 = por %p64, %p65
      %p68 = scmp.ne.s32.totalorder %s53, %s67
      %p69 = scmp.eq.s32.totalorder %s22, 0
      %p70 = por %p68, %p69
      %s72 = sadd.s32 %s71, 1
      %p75 = scmp.eq.s32.totalorder %s16, 1
      %p76 = scmp.ne.s32.totalorder %s71, %s73
      %p77 = scmp.eq.s32.totalorder %s16, 0
      %p78 = por %p76, %p77
      %p79 = scmp.ne.s32.totalorder %s71, %s73
      %p80 = scmp.eq.s32.totalorder %s21, 1
      %p81 = por %p79, %p80
      %p82 = scmp.ne.s32.totalorder %s73, %s74
      %p83 = scmp.eq.s32.totalorder %s21, 0
      %p84 = por %p82, %p83
      %p85 = scmp.ne.s32.totalorder %s73, %s74
      %p86 = scmp.eq.s32.totalorder %s22, 1
      %p87 = por %p85, %p86
      %p89 = scmp.ne.s32.totalorder %s74, %s88
      %p90 = scmp.eq.s32.totalorder %s22, 0
      %p91 = por %p89, %p90
      %s93 = sadd.s32 %s92, 1
      %p96 = scmp.eq.s32.totalorder %s16, 1
      %p97 = scmp.ne.s32.totalorder %s92, %s94
      %p98 = scmp.eq.s32.totalorder %s16, 0
      %p99 = por %p97, %p98
      %p100 = scmp.ne.s32.totalorder %s92, %s94
      %p101 = scmp.eq.s32.totalorder %s21, 1
      %p102 = por %p100, %p101
      %p103 = scmp.ne.s32.totalorder %s94, %s95
      %p104 = scmp.eq.s32.totalorder %s21, 0
      %p105 = por %p103, %p104
      %p106 = scmp.ne.s32.totalorder %s94, %s95
      %p107 = scmp.eq.s32.totalorder %s22, 1
      %p108 = por %p106, %p107
      %p110 = scmp.ne.s32.totalorder %s95, %s109
      %p111 = scmp.eq.s32.totalorder %s22, 0
      %p112 = por %p110, %p111
      %s114 = sadd.s32 %s113, 1
      %p117 = scmp.eq.s32.totalorder %s16, 1
      %p118 = scmp.ne.s32.totalorder %s113, %s115
      %p119 = scmp.eq.s32.totalorder %s16, 0
      %p120 = por %p118, %p119
      %p121 = scmp.ne.s32.totalorder %s113, %s115
      %p122 = scmp.eq.s32.totalorder %s21, 1
      %p123 = por %p121, %p122
      %p124 = scmp.ne.s32.totalorder %s115, %s116
      %p125 = scmp.eq.s32.totalorder %s21, 0
      %p126 = por %p124, %p125
      %p127 = scmp.ne.s32.totalorder %s115, %s116
      %p128 = scmp.eq.s32.totalorder %s22, 1
      %p129 = por %p127, %p128
      %p131 = scmp.ne.s32.totalorder %s116, %s130
      %p132 = scmp.eq.s32.totalorder %s22, 0
      %p133 = por %p131, %p132
      %s135 = sadd.s32 %s134, 1
      %p138 = scmp.eq.s32.totalorder %s16, 1
      %p139 = scmp.ne.s32.totalorder %s134, %s136
      %p140 = scmp.eq.s32.totalorder %s16, 0
      %p141 = por %p139, %p140
      %p142 = scmp.ne.s32.totalorder %s134, %s136
      %p143 = scmp.eq.s32.totalorder %s21, 1
      %p144 = por %p142, %p143
      %p145 = scmp.ne.s32.totalorder %s136, %s137
      %p146 = scmp.eq.s32.totalorder %s21, 0
      %p147 = por %p145, %p146
      %p148 = scmp.ne.s32.totalorder %s136, %s137
      %p149 = scmp.eq.s32.totalorder %s22, 1
      %p150 = por %p148, %p149
      %p152 = scmp.ne.s32.totalorder %s137, %s151
      %p153 = scmp.eq.s32.totalorder %s22, 0
      %p154 = por %p152, %p153
      %s156 = sadd.s32 %s155, 1
      %p159 = scmp.eq.s32.totalorder %s16, 1
      %p160 = scmp.ne.s32.totalorder %s155, %s157
      %p161 = scmp.eq.s32.totalorder %s16, 0
      %p162 = por %p160, %p161
      %p163 = scmp.ne.s32.totalorder %s155, %s157
      %p164 = scmp.eq.s32.totalorder %s21, 1
      %p165 = por %p163, %p164
      %p166 = scmp.ne.s32.totalorder %s157, %s158
      %p167 = scmp.eq.s32.totalorder %s21, 0
      %p168 = por %p166, %p167
      %p169 = scmp.ne.s32.totalorder %s157, %s158
      %p170 = scmp.eq.s32.totalorder %s22, 1
      %p171 = por %p169, %p170
      %p173 = scmp.ne.s32.totalorder %s158, %s172
      %p174 = scmp.eq.s32.totalorder %s22, 0
      %p175 = por %p173, %p174
      %s176 = ssub.s32 %s16, %s23
      %p177 = scmp.eq.s32.totalorder %s176, 0
      %s179 = sadd.s32 %s178, 1
      %s180 = scalar_select %p177, %s178, %s179
      %p183 = pneg %p177
      %p184 = scmp.eq.s32.totalorder %s16, 1
      %p185 = por %p183, %p184
      %p186 = scmp.ne.s32.totalorder %s178, %s181
      %p187 = scmp.eq.s32.totalorder %s16, 0
      %p188 = por %p186, %p187
      %p189 = scmp.ne.s32.totalorder %s178, %s181
      %p190 = scmp.eq.s32.totalorder %s21, 1
      %p191 = por %p189, %p190
      %p192 = scmp.ne.s32.totalorder %s181, %s182
      %p193 = scmp.eq.s32.totalorder %s21, 0
      %p194 = por %p192, %p193
      %p195 = scmp.ne.s32.totalorder %s181, %s182
      %p196 = scmp.eq.s32.totalorder %s22, 1
      %p197 = por %p195, %p196
      %p199 = scmp.ne.s32.totalorder %s182, %s198
      %p200 = scmp.eq.s32.totalorder %s22, 0
      %p201 = por %p199, %p200
      %p202 = scmp.le.s32.totalorder 1, %s16
      %p203 = scmp.lt.s32.totalorder %s16, 3
      %p204 = pnand %p202, %p203
      %p205 = pneg %p204
      // Predicated region
      $region9: #{tpu_custom_call.1} parent=5 // pred_check
        _
      $region10: #{tpu_custom_call.1} parent=5 // pred_check_branch
        %207 = sbr.rel (%p204) target = $region12
      $region11: #{tpu_custom_call.1} parent=5 // pred_region
        %s208 = ssub.s32 %s16, 1
        // Predicated region
        $region13: #{tpu_custom_call.1} parent=11 // pred_check
          %p209 = pneg %p63
        $region14: #{tpu_custom_call.1} parent=11 // pred_check_branch
          %211 = sbr.rel (%p209) target = $region16
        $region15: #{tpu_custom_call.1} parent=11 // pred_region
          _
        $region16: #{tpu_custom_call.1} parent=11 // pred_fallthru
          _
        // Predicated region
        $region17: #{tpu_custom_call.1} parent=11 // pred_check
          %p212 = pneg %p84
        $region18: #{tpu_custom_call.1} parent=11 // pred_check_branch
          %214 = sbr.rel (%p212) target = $region20
        $region19: #{tpu_custom_call.1} parent=11 // pred_region
          _
        $region20: #{tpu_custom_call.1} parent=11 // pred_fallthru
          _
        // Predicated region
        $region21: #{tpu_custom_call.1} parent=11 // pred_check
          %p215 = pneg %p105
        $region22: #{tpu_custom_call.1} parent=11 // pred_check_branch
          %217 = sbr.rel (%p215) target = $region24
        $region23: #{tpu_custom_call.1} parent=11 // pred_region
          _
        $region24: #{tpu_custom_call.1} parent=11 // pred_fallthru
          _
        // Predicated region
        $region25: #{tpu_custom_call.1} parent=11 // pred_check
          %p218 = pneg %p126
        $region26: #{tpu_custom_call.1} parent=11 // pred_check_branch
          %220 = sbr.rel (%p218) target = $region28
        $region27: #{tpu_custom_call.1} parent=11 // pred_region
          _
        $region28: #{tpu_custom_call.1} parent=11 // pred_fallthru
          _
        // Predicated region
        $region29: #{tpu_custom_call.1} parent=11 // pred_check
          %p221 = pneg %p147
        $region30: #{tpu_custom_call.1} parent=11 // pred_check_branch
          %223 = sbr.rel (%p221) target = $region32
        $region31: #{tpu_custom_call.1} parent=11 // pred_region
          _
        $region32: #{tpu_custom_call.1} parent=11 // pred_fallthru
          _
        // Predicated region
        $region33: #{tpu_custom_call.1} parent=11 // pred_check
          %p224 = pneg %p168
        $region34: #{tpu_custom_call.1} parent=11 // pred_check_branch
          %226 = sbr.rel (%p224) target = $region36
        $region35: #{tpu_custom_call.1} parent=11 // pred_region
          _
        $region36: #{tpu_custom_call.1} parent=11 // pred_fallthru
          _
      $region12: #{tpu_custom_call.1} parent=5 // pred_fallthru
        _
      %p227 = scmp.lt.s32.totalorder %s16, 2
      // Predicated region
      $region37: #{tpu_custom_call.1} parent=5 // pred_check
        %p228 = pneg %p227
      $region38: #{tpu_custom_call.1} parent=5 // pred_check_branch
        %230 = sbr.rel (%p228) target = $region40
      $region39: #{tpu_custom_call.1} parent=5 // pred_region
        // Predicated region
        $region41: #{tpu_custom_call.1} parent=39 // pred_check
          %p231 = pneg %p36
        $region42: #{tpu_custom_call.1} parent=39 // pred_check_branch
          %233 = sbr.rel (%p231) target = $region44
        $region43: #{tpu_custom_call.1} parent=39 // pred_region
          %s234 = smul.u32 128, %s16
          %p235 = scmp.lt.s32.totalorder %s234, 255
          %s236 = scalar_select %p235, %s234, 255
          %s237 = smul.addr %s236, 8
          %s238 = scalar_lea.vmem %s0, %s237
          %s239 = smul.u32 128, %s16
        $region44: #{tpu_custom_call.1} parent=39 // pred_fallthru
          _
      $region40: #{tpu_custom_call.1} parent=5 // pred_fallthru
        _
      %p240 = scmp.le.s32.totalorder 1, %s16
      %p241 = scmp.lt.s32.totalorder %s16, 3
      %p242 = pnand %p240, %p241
      %p243 = pneg %p242
      // Predicated region
      $region45: #{tpu_custom_call.1} parent=5 // pred_check
        _
      $region46: #{tpu_custom_call.1} parent=5 // pred_check_branch
        %245 = sbr.rel (%p242) target = $region48
      $region47: #{tpu_custom_call.1} parent=5 // pred_region
        %s246 = ssub.s32 %s16, 1
        %s247 = smul.u32 128, %s21
        %p248 = scmp.lt.s32.totalorder %s247, 255
        %s249 = scalar_select %p248, %s247, 255
        %s250 = smul.addr %s249, 8
        %s251 = scalar_lea.vmem %s0, %s250
        %p252 = pneg %p42
        %p253 = pneg %p39
        %p254 = pneg %p63
        %p255 = pneg %p60
        %p256 = pneg %p84
        %p257 = pneg %p81
        %p258 = pneg %p105
        %p259 = pneg %p102
        %p260 = pneg %p126
        %p261 = pneg %p123
        %p262 = pneg %p147
        %p263 = pneg %p144
        %p264 = pneg %p168
        %p265 = pneg %p165
        %p266 = pneg %p194
        %p267 = pneg %p191
        %s268 = sand.u32 %s181, 1
        %s269 = scalar_lea.sflag [#allocation3], %s268
        %s270 = sand.u32 %s181, 1
        %s271 = smul.addr %s270, 1024
        %s272 = scalar_lea.vmem [#allocation2], %s271
        %s273 = smul.u32 128, %s21
        %p274 = scmp.lt.s32.totalorder %s273, 255
        %s275 = scalar_select %p274, %s273, 255
        %s276 = smul.addr %s275, 8
        %s277 = scalar_lea.vmem %s0, %s276
        %s278 = smul.u32 128, %s21
        %s279 = smul.u32 128, %s21
        %v280 = vld [vmem:[%s277] sm:$0xff]
        %v281 = vld [vmem:[%s277 + $0x8] sm:$0xff]
        %v282 = vld [vmem:[%s277 + $0x10] sm:$0xff]
        %v283 = vld [vmem:[%s277 + $0x18] sm:$0xff]
        %v284 = vld [vmem:[%s277 + $0x20] sm:$0xff]
        %v285 = vld [vmem:[%s277 + $0x28] sm:$0xff]
        %v286 = vld [vmem:[%s277 + $0x30] sm:$0xff]
        %v287 = vld [vmem:[%s277 + $0x38] sm:$0xff]
        %v288 = vld [vmem:[%s277 + $0x40] sm:$0xff]
        %v289 = vld [vmem:[%s277 + $0x48] sm:$0xff]
        %v290 = vld [vmem:[%s277 + $0x50] sm:$0xff]
        %v291 = vld [vmem:[%s277 + $0x58] sm:$0xff]
        %v292 = vld [vmem:[%s277 + $0x60] sm:$0xff]
        %v293 = vld [vmem:[%s277 + $0x68] sm:$0xff]
        %v294 = vld [vmem:[%s277 + $0x70] sm:$0xff]
        %v295 = vld [vmem:[%s277 + $0x78] sm:$0xff]
        %v296 = vld [vmem:[%s277 + $0x80] sm:$0xff]
        %v297 = vld [vmem:[%s277 + $0x88] sm:$0xff]
        %v298 = vld [vmem:[%s277 + $0x90] sm:$0xff]
        %v299 = vld [vmem:[%s277 + $0x98] sm:$0xff]
        %v300 = vld [vmem:[%s277 + $0xa0] sm:$0xff]
        %v301 = vld [vmem:[%s277 + $0xa8] sm:$0xff]
        %v302 = vld [vmem:[%s277 + $0xb0] sm:$0xff]
        %v303 = vld [vmem:[%s277 + $0xb8] sm:$0xff]
        %v304 = vld [vmem:[%s277 + $0xc0] sm:$0xff]
        %v305 = vld [vmem:[%s277 + $0xc8] sm:$0xff]
        %v306 = vld [vmem:[%s277 + $0xd0] sm:$0xff]
        %v307 = vld [vmem:[%s277 + $0xd8] sm:$0xff]
        %v308 = vld [vmem:[%s277 + $0xe0] sm:$0xff]
        %v309 = vld [vmem:[%s277 + $0xe8] sm:$0xff]
        %v310 = vld [vmem:[%s277 + $0xf0] sm:$0xff]
        %v311 = vld [vmem:[%s277 + $0xf8] sm:$0xff]
        %v312 = vld [vmem:[%s277 + $0x100] sm:$0xff]
        %v313 = vld [vmem:[%s277 + $0x108] sm:$0xff]
        %v314 = vld [vmem:[%s277 + $0x110] sm:$0xff]
        %v315 = vld [vmem:[%s277 + $0x118] sm:$0xff]
        %v316 = vld [vmem:[%s277 + $0x120] sm:$0xff]
        %v317 = vld [vmem:[%s277 + $0x128] sm:$0xff]
        %v318 = vld [vmem:[%s277 + $0x130] sm:$0xff]
        %v319 = vld [vmem:[%s277 + $0x138] sm:$0xff]
        %v320 = vld [vmem:[%s277 + $0x140] sm:$0xff]
        %v321 = vld [vmem:[%s277 + $0x148] sm:$0xff]
        %v322 = vld [vmem:[%s277 + $0x150] sm:$0xff]
        %v323 = vld [vmem:[%s277 + $0x158] sm:$0xff]
        %v324 = vld [vmem:[%s277 + $0x160] sm:$0xff]
        %v325 = vld [vmem:[%s277 + $0x168] sm:$0xff]
        %v326 = vld [vmem:[%s277 + $0x170] sm:$0xff]
        %v327 = vld [vmem:[%s277 + $0x178] sm:$0xff]
        %v328 = vld [vmem:[%s277 + $0x180] sm:$0xff]
        %v329 = vld [vmem:[%s277 + $0x188] sm:$0xff]
        %v330 = vld [vmem:[%s277 + $0x190] sm:$0xff]
        %v331 = vld [vmem:[%s277 + $0x198] sm:$0xff]
        %v332 = vld [vmem:[%s277 + $0x1a0] sm:$0xff]
        %v333 = vld [vmem:[%s277 + $0x1a8] sm:$0xff]
        %v334 = vld [vmem:[%s277 + $0x1b0] sm:$0xff]
        %v335 = vld [vmem:[%s277 + $0x1b8] sm:$0xff]
        %v336 = vld [vmem:[%s277 + $0x1c0] sm:$0xff]
        %v337 = vld [vmem:[%s277 + $0x1c8] sm:$0xff]
        %v338 = vld [vmem:[%s277 + $0x1d0] sm:$0xff]
        %v339 = vld [vmem:[%s277 + $0x1d8] sm:$0xff]
        %v340 = vld [vmem:[%s277 + $0x1e0] sm:$0xff]
        %v341 = vld [vmem:[%s277 + $0x1e8] sm:$0xff]
        %v342 = vld [vmem:[%s277 + $0x1f0] sm:$0xff]
        %v343 = vld [vmem:[%s277 + $0x1f8] sm:$0xff]
        %v344 = vld [vmem:[%s277 + $0x200] sm:$0xff]
        %v345 = vld [vmem:[%s277 + $0x208] sm:$0xff]
        %v346 = vld [vmem:[%s277 + $0x210] sm:$0xff]
        %v347 = vld [vmem:[%s277 + $0x218] sm:$0xff]
        %v348 = vld [vmem:[%s277 + $0x220] sm:$0xff]
        %v349 = vld [vmem:[%s277 + $0x228] sm:$0xff]
        %v350 = vld [vmem:[%s277 + $0x230] sm:$0xff]
        %v351 = vld [vmem:[%s277 + $0x238] sm:$0xff]
        %v352 = vld [vmem:[%s277 + $0x240] sm:$0xff]
        %v353 = vld [vmem:[%s277 + $0x248] sm:$0xff]
        %v354 = vld [vmem:[%s277 + $0x250] sm:$0xff]
        %v355 = vld [vmem:[%s277 + $0x258] sm:$0xff]
        %v356 = vld [vmem:[%s277 + $0x260] sm:$0xff]
        %v357 = vld [vmem:[%s277 + $0x268] sm:$0xff]
        %v358 = vld [vmem:[%s277 + $0x270] sm:$0xff]
        %v359 = vld [vmem:[%s277 + $0x278] sm:$0xff]
        %v360 = vld [vmem:[%s277 + $0x280] sm:$0xff]
        %v361 = vld [vmem:[%s277 + $0x288] sm:$0xff]
        %v362 = vld [vmem:[%s277 + $0x290] sm:$0xff]
        %v363 = vld [vmem:[%s277 + $0x298] sm:$0xff]
        %v364 = vld [vmem:[%s277 + $0x2a0] sm:$0xff]
        %v365 = vld [vmem:[%s277 + $0x2a8] sm:$0xff]
        %v366 = vld [vmem:[%s277 + $0x2b0] sm:$0xff]
        %v367 = vld [vmem:[%s277 + $0x2b8] sm:$0xff]
        %v368 = vld [vmem:[%s277 + $0x2c0] sm:$0xff]
        %v369 = vld [vmem:[%s277 + $0x2c8] sm:$0xff]
        %v370 = vld [vmem:[%s277 + $0x2d0] sm:$0xff]
        %v371 = vld [vmem:[%s277 + $0x2d8] sm:$0xff]
        %v372 = vld [vmem:[%s277 + $0x2e0] sm:$0xff]
        %v373 = vld [vmem:[%s277 + $0x2e8] sm:$0xff]
        %v374 = vld [vmem:[%s277 + $0x2f0] sm:$0xff]
        %v375 = vld [vmem:[%s277 + $0x2f8] sm:$0xff]
        %v376 = vld [vmem:[%s277 + $0x300] sm:$0xff]
        %v377 = vld [vmem:[%s277 + $0x308] sm:$0xff]
        %v378 = vld [vmem:[%s277 + $0x310] sm:$0xff]
        %v379 = vld [vmem:[%s277 + $0x318] sm:$0xff]
        %v380 = vld [vmem:[%s277 + $0x320] sm:$0xff]
        %v381 = vld [vmem:[%s277 + $0x328] sm:$0xff]
        %v382 = vld [vmem:[%s277 + $0x330] sm:$0xff]
        %v383 = vld [vmem:[%s277 + $0x338] sm:$0xff]
        %v384 = vld [vmem:[%s277 + $0x340] sm:$0xff]
        %v385 = vld [vmem:[%s277 + $0x348] sm:$0xff]
        %v386 = vld [vmem:[%s277 + $0x350] sm:$0xff]
        %v387 = vld [vmem:[%s277 + $0x358] sm:$0xff]
        %v388 = vld [vmem:[%s277 + $0x360] sm:$0xff]
        %v389 = vld [vmem:[%s277 + $0x368] sm:$0xff]
        %v390 = vld [vmem:[%s277 + $0x370] sm:$0xff]
        %v391 = vld [vmem:[%s277 + $0x378] sm:$0xff]
        %v392 = vld [vmem:[%s277 + $0x380] sm:$0xff]
        %v393 = vld [vmem:[%s277 + $0x388] sm:$0xff]
        %v394 = vld [vmem:[%s277 + $0x390] sm:$0xff]
        %v395 = vld [vmem:[%s277 + $0x398] sm:$0xff]
        %v396 = vld [vmem:[%s277 + $0x3a0] sm:$0xff]
        %v397 = vld [vmem:[%s277 + $0x3a8] sm:$0xff]
        %v398 = vld [vmem:[%s277 + $0x3b0] sm:$0xff]
        %v399 = vld [vmem:[%s277 + $0x3b8] sm:$0xff]
        %v400 = vld [vmem:[%s277 + $0x3c0] sm:$0xff]
        %v401 = vld [vmem:[%s277 + $0x3c8] sm:$0xff]
        %v402 = vld [vmem:[%s277 + $0x3d0] sm:$0xff]
        %v403 = vld [vmem:[%s277 + $0x3d8] sm:$0xff]
        %v404 = vld [vmem:[%s277 + $0x3e0] sm:$0xff]
        %v405 = vld [vmem:[%s277 + $0x3e8] sm:$0xff]
        %v406 = vld [vmem:[%s277 + $0x3f0] sm:$0xff]
        %v407 = vld [vmem:[%s277 + $0x3f8] sm:$0xff]
        %v408 = vld [vmem:[%s1] sm:$0xff]
        %v409 = vld [vmem:[%s1 + $0x8] sm:$0xff]
        %v410 = vld [vmem:[%s1 + $0x10] sm:$0xff]
        %v411 = vld [vmem:[%s1 + $0x18] sm:$0xff]
        %v412 = vld [vmem:[%s2] sm:$0x1]
        %v414 = vlaneseq
        %v415 = vshrl.u32 %v414, 7
        %v416 = vsub.s32 0, %v415
        %v417 = vrot.slane %v412, %v416
        %vm419 = vcmask 261120
        %v421 = vsel %vm419, %v280, 0
        %v424 = vsel %vm419, %v281, 0
        %v427 = vsel %vm419, %v282, 0
        %v430 = vsel %vm419, %v283, 0
        %v433 = vsel %vm419, %v284, 0
        %v436 = vsel %vm419, %v285, 0
        %v439 = vsel %vm419, %v286, 0
        %v442 = vsel %vm419, %v287, 0
        %v445 = vsel %vm419, %v288, 0
        %v448 = vsel %vm419, %v289, 0
        %v451 = vsel %vm419, %v290, 0
        %v454 = vsel %vm419, %v291, 0
        %v457 = vsel %vm419, %v292, 0
        %v460 = vsel %vm419, %v293, 0
        %v463 = vsel %vm419, %v294, 0
        %v466 = vsel %vm419, %v295, 0
        %v469 = vsel %vm419, %v296, 0
        %v472 = vsel %vm419, %v297, 0
        %v475 = vsel %vm419, %v298, 0
        %v478 = vsel %vm419, %v299, 0
        %v481 = vsel %vm419, %v300, 0
        %v484 = vsel %vm419, %v301, 0
        %v487 = vsel %vm419, %v302, 0
        %v490 = vsel %vm419, %v303, 0
        %v493 = vsel %vm419, %v304, 0
        %v496 = vsel %vm419, %v305, 0
        %v499 = vsel %vm419, %v306, 0
        %v502 = vsel %vm419, %v307, 0
        %v505 = vsel %vm419, %v308, 0
        %v508 = vsel %vm419, %v309, 0
        %v511 = vsel %vm419, %v310, 0
        %v514 = vsel %vm419, %v311, 0
        %v517 = vsel %vm419, %v312, 0
        %v520 = vsel %vm419, %v313, 0
        %v523 = vsel %vm419, %v314, 0
        %v526 = vsel %vm419, %v315, 0
        %v529 = vsel %vm419, %v316, 0
        %v532 = vsel %vm419, %v317, 0
        %v535 = vsel %vm419, %v318, 0
        %v538 = vsel %vm419, %v319, 0
        %v541 = vsel %vm419, %v320, 0
        %v544 = vsel %vm419, %v321, 0
        %v547 = vsel %vm419, %v322, 0
        %v550 = vsel %vm419, %v323, 0
        %v553 = vsel %vm419, %v324, 0
        %v556 = vsel %vm419, %v325, 0
        %v559 = vsel %vm419, %v326, 0
        %v562 = vsel %vm419, %v327, 0
        %v565 = vsel %vm419, %v328, 0
        %v568 = vsel %vm419, %v329, 0
        %v571 = vsel %vm419, %v330, 0
        %v574 = vsel %vm419, %v331, 0
        %v577 = vsel %vm419, %v332, 0
        %v580 = vsel %vm419, %v333, 0
        %v583 = vsel %vm419, %v334, 0
        %v586 = vsel %vm419, %v335, 0
        %v589 = vsel %vm419, %v336, 0
        %v592 = vsel %vm419, %v337, 0
        %v595 = vsel %vm419, %v338, 0
        %v598 = vsel %vm419, %v339, 0
        %v601 = vsel %vm419, %v340, 0
        %v604 = vsel %vm419, %v341, 0
        %v607 = vsel %vm419, %v342, 0
        %v610 = vsel %vm419, %v343, 0
        %v613 = vsel %vm419, %v344, 0
        %v616 = vsel %vm419, %v345, 0
        %v619 = vsel %vm419, %v346, 0
        %v622 = vsel %vm419, %v347, 0
        %v625 = vsel %vm419, %v348, 0
        %v628 = vsel %vm419, %v349, 0
        %v631 = vsel %vm419, %v350, 0
        %v634 = vsel %vm419, %v351, 0
        %v637 = vsel %vm419, %v352, 0
        %v640 = vsel %vm419, %v353, 0
        %v643 = vsel %vm419, %v354, 0
        %v646 = vsel %vm419, %v355, 0
        %v649 = vsel %vm419, %v356, 0
        %v652 = vsel %vm419, %v357, 0
        %v655 = vsel %vm419, %v358, 0
        %v658 = vsel %vm419, %v359, 0
        %v661 = vsel %vm419, %v360, 0
        %v664 = vsel %vm419, %v361, 0
        %v667 = vsel %vm419, %v362, 0
        %v670 = vsel %vm419, %v363, 0
        %v673 = vsel %vm419, %v364, 0
        %v676 = vsel %vm419, %v365, 0
        %v679 = vsel %vm419, %v366, 0
        %v682 = vsel %vm419, %v367, 0
        %v685 = vsel %vm419, %v368, 0
        %v688 = vsel %vm419, %v369, 0
        %v691 = vsel %vm419, %v370, 0
        %v694 = vsel %vm419, %v371, 0
        %v697 = vsel %vm419, %v372, 0
        %v700 = vsel %vm419, %v373, 0
        %v703 = vsel %vm419, %v374, 0
        %v706 = vsel %vm419, %v375, 0
        %v709 = vsel %vm419, %v376, 0
        %v712 = vsel %vm419, %v377, 0
        %v715 = vsel %vm419, %v378, 0
        %v718 = vsel %vm419, %v379, 0
        %v721 = vsel %vm419, %v380, 0
        %v724 = vsel %vm419, %v381, 0
        %v727 = vsel %vm419, %v382, 0
        %v730 = vsel %vm419, %v383, 0
        %v733 = vsel %vm419, %v384, 0
        %v736 = vsel %vm419, %v385, 0
        %v739 = vsel %vm419, %v386, 0
        %v742 = vsel %vm419, %v387, 0
        %v745 = vsel %vm419, %v388, 0
        %v748 = vsel %vm419, %v389, 0
        %v751 = vsel %vm419, %v390, 0
        %v754 = vsel %vm419, %v391, 0
        %v757 = vsel %vm419, %v392, 0
        %v760 = vsel %vm419, %v393, 0
        %v763 = vsel %vm419, %v394, 0
        %v766 = vsel %vm419, %v395, 0
        %v769 = vsel %vm419, %v396, 0
        %v772 = vsel %vm419, %v397, 0
        %v775 = vsel %vm419, %v398, 0
        %v778 = vsel %vm419, %v399, 0
        %v781 = vsel %vm419, %v400, 0
        %v784 = vsel %vm419, %v401, 0
        %v787 = vsel %vm419, %v402, 0
        %v790 = vsel %vm419, %v403, 0
        %v793 = vsel %vm419, %v404, 0
        %v796 = vsel %vm419, %v405, 0
        %v799 = vsel %vm419, %v406, 0
        %v802 = vsel %vm419, %v407, 0
        %804 = vmatprep.subr.mxu0 0.0
        %805 = vmatpush1.msra.mxu0 %v408
        %806 = vmatprep.subr.mxu0 0.0
        %807 = vmatpush1.msra.mxu0 %v409
        %808 = vmatprep.subr.mxu0 0.0
        %809 = vmatpush1.msra.mxu0 %v410
        %810 = vmatprep.subr.mxu0 0.0
        %811 = vmatpush1.msra.mxu0 %v411
        %812 = vmatprep.subr.mxu0 0.0
        %813 = vmatpush1.msra.mxu0 0.0
        %814 = vmatprep.subr.mxu0 0.0
        %815 = vmatpush1.msra.mxu0 0.0
        %816 = vmatprep.subr.mxu0 0.0
        %817 = vmatpush1.msra.mxu0 0.0
        %818 = vmatprep.subr.mxu0 0.0
        %819 = vmatpush1.msra.mxu0 0.0
        %820 = vmatprep.subr.mxu0 0.0
        %821 = vmatpush1.msra.mxu0 0.0
        %822 = vmatprep.subr.mxu0 0.0
        %823 = vmatpush1.msra.mxu0 0.0
        %824 = vmatprep.subr.mxu0 0.0
        %825 = vmatpush1.msra.mxu0 0.0
        %826 = vmatprep.subr.mxu0 0.0
        %827 = vmatpush1.msra.mxu0 0.0
        %828 = vmatprep.subr.mxu0 0.0
        %829 = vmatpush1.msra.mxu0 0.0
        %830 = vmatprep.subr.mxu0 0.0
        %831 = vmatpush1.msra.mxu0 0.0
        %832 = vmatprep.subr.mxu0 0.0
        %833 = vmatpush1.msra.mxu0 0.0
        %834 = vmatprep.subr.mxu0 0.0
        %835 = vmatpush1.msra.mxu0 0.0
        %836 = vmatprep.subr.mxu0 0.0
        %837 = vmatpush1.msra.mxu0 0.0
        %838 = vmatprep.subr.mxu0 0.0
        %839 = vmatpush1.msra.mxu0 0.0
        %840 = vmatprep.subr.mxu0 0.0
        %841 = vmatpush1.msra.mxu0 0.0
        %842 = vmatprep.subr.mxu0 0.0
        %843 = vmatpush1.msra.mxu0 0.0
        %844 = vmatprep.subr.mxu0 0.0
        %845 = vmatpush1.msra.mxu0 0.0
        %846 = vmatprep.subr.mxu0 0.0
        %847 = vmatpush1.msra.mxu0 0.0
        %848 = vmatprep.subr.mxu0 0.0
        %849 = vmatpush1.msra.mxu0 0.0
        %850 = vmatprep.subr.mxu0 0.0
        %851 = vmatpush1.msra.mxu0 0.0
        %852 = vmatprep.subr.mxu0 0.0
        %853 = vmatpush1.msra.mxu0 0.0
        %854 = vmatprep.subr.mxu0 0.0
        %855 = vmatpush1.msra.mxu0 0.0
        %856 = vmatprep.subr.mxu0 0.0
        %857 = vmatpush1.msra.mxu0 0.0
        %858 = vmatprep.subr.mxu0 0.0
        %859 = vmatpush1.msra.mxu0 0.0
        %860 = vmatprep.subr.mxu0 0.0
        %861 = vmatpush1.msra.mxu0 0.0
        %862 = vmatprep.subr.mxu0 0.0
        %863 = vmatpush1.msra.mxu0 0.0
        %864 = vmatprep.subr.mxu0 0.0
        %865 = vmatpush1.msra.mxu0 0.0
        %866 = vmatprep.subr.mxu0 0.0
        %867 = vmatpush1.msra.mxu0 0.0
        %868 = vmatprep.mubr.f32.mxu0 0.0
        %869 = vmatmul.mubr.f32.gmra.mrb[0].mxu0 %v421
        %v870 = vpop.f32.mrb[0].mxu0
        %v871 = vadd.f32 %v417, %v870
        %v872 = vpop.f32.mrb[0].mxu0
        %873 = vmatprep.mubr.f32.mxu0 0.0
        %874 = vmatmul.mubr.f32.gmra.mrb[0].mxu0 %v424
        %v875 = vpop.f32.mrb[0].mxu0
        %v876 = vadd.f32 %v417, %v875
        %v877 = vpop.f32.mrb[0].mxu0
        %878 = vmatprep.mubr.f32.mxu0 0.0
        %879 = vmatmul.mubr.f32.gmra.mrb[0].mxu0 %v427
        %v880 = vpop.f32.mrb[0].mxu0
        %v881 = vadd.f32 %v417, %v880
        %v882 = vpop.f32.mrb[0].mxu0
        %883 = vmatprep.mubr.f32.mxu0 0.0
        %884 = vmatmul.mubr.f32.gmra.mrb[0].mxu0 %v430
        %v885 = vpop.f32.mrb[0].mxu0
        %v886 = vadd.f32 %v417, %v885
        %v887 = vpop.f32.mrb[0].mxu0
        %888 = vmatprep.mubr.f32.mxu0 0.0
        %889 = vmatmul.mubr.f32.gmra.mrb[0].mxu0 %v433
        %v890 = vpop.f32.mrb[0].mxu0
        %v891 = vadd.f32 %v417, %v890
        %v892 = vpop.f32.mrb[0].mxu0
        %893 = vmatprep.mubr.f32.mxu0 0.0
        %894 = vmatmul.mubr.f32.gmra.mrb[0].mxu0 %v436
        %v895 = vpop.f32.mrb[0].mxu0
        %v896 = vadd.f32 %v417, %v895
        %v897 = vpop.f32.mrb[0].mxu0
        %898 = vmatprep.mubr.f32.mxu0 0.0
        %899 = vmatmul.mubr.f32.gmra.mrb[0].mxu0 %v439
        %v900 = vpop.f32.mrb[0].mxu0
        %v901 = vadd.f32 %v417, %v900
        %v902 = vpop.f32.mrb[0].mxu0
        %903 = vmatprep.mubr.f32.mxu0 0.0
        %904 = vmatmul.mubr.f32.gmra.mrb[0].mxu0 %v442
        %v905 = vpop.f32.mrb[0].mxu0
        %v906 = vadd.f32 %v417, %v905
        %v907 = vpop.f32.mrb[0].mxu0
        %908 = vmatprep.mubr.f32.mxu0 0.0
        %909 = vmatmul.mubr.f32.gmra.mrb[0].mxu0 %v445
        %v910 = vpop.f32.mrb[0].mxu0
        %v911 = vadd.f32 %v417, %v910
        %v912 = vpop.f32.mrb[0].mxu0
        %913 = vmatprep.mubr.f32.mxu0 0.0
        %914 = vmatmul.mubr.f32.gmra.mrb[0].mxu0 %v448
        %v915 = vpop.f32.mrb[0].mxu0
        %v916 = vadd.f32 %v417, %v915
        %v917 = vpop.f32.mrb[0].mxu0
        %918 = vmatprep.mubr.f32.mxu0 0.0
        %919 = vmatmul.mubr.f32.gmra.mrb[0].mxu0 %v451
        %v920 = vpop.f32.mrb[0].mxu0
        %v921 = vadd.f32 %v417, %v920
        %v922 = vpop.f32.mrb[0].mxu0
        %923 = vmatprep.mubr.f32.mxu0 0.0
        %924 = vmatmul.mubr.f32.gmra.mrb[0].mxu0 %v454
        %v925 = vpop.f32.mrb[0].mxu0
        %v926 = vadd.f32 %v417, %v925
        %v927 = vpop.f32.mrb[0].mxu0
        %928 = vmatprep.mubr.f32.mxu0 0.0
        %929 = vmatmul.mubr.f32.gmra.mrb[0].mxu0 %v457
        %v930 = vpop.f32.mrb[0].mxu0
        %v931 = vadd.f32 %v417, %v930
        %v932 = vpop.f32.mrb[0].mxu0
        %933 = vmatprep.mubr.f32.mxu0 0.0
        %934 = vmatmul.mubr.f32.gmra.mrb[0].mxu0 %v460
        %v935 = vpop.f32.mrb[0].mxu0
        %v936 = vadd.f32 %v417, %v935
        %v937 = vpop.f32.mrb[0].mxu0
        %938 = vmatprep.mubr.f32.mxu0 0.0
        %939 = vmatmul.mubr.f32.gmra.mrb[0].mxu0 %v463
        %v940 = vpop.f32.mrb[0].mxu0
        %v941 = vadd.f32 %v417, %v940
        %v942 = vpop.f32.mrb[0].mxu0
        %943 = vmatprep.mubr.f32.mxu0 0.0
        %944 = vmatmul.mubr.f32.gmra.mrb[0].mxu0 %v466
        %v945 = vpop.f32.mrb[0].mxu0
        %v946 = vadd.f32 %v417, %v945
        %v947 = vpop.f32.mrb[0].mxu0
        %948 = vmatprep.mubr.f32.mxu0 0.0
        %949 = vmatmul.mubr.f32.gmra.mrb[0].mxu0 %v469
        %v950 = vpop.f32.mrb[0].mxu0
        %v951 = vadd.f32 %v417, %v950
        %v952 = vpop.f32.mrb[0].mxu0
        %953 = vmatprep.mubr.f32.mxu0 0.0
        %954 = vmatmul.mubr.f32.gmra.mrb[0].mxu0 %v472
        %v955 = vpop.f32.mrb[0].mxu0
        %v956 = vadd.f32 %v417, %v955
        %v957 = vpop.f32.mrb[0].mxu0
        %958 = vmatprep.mubr.f32.mxu0 0.0
        %959 = vmatmul.mubr.f32.gmra.mrb[0].mxu0 %v475
        %v960 = vpop.f32.mrb[0].mxu0
        %v961 = vadd.f32 %v417, %v960
        %v962 = vpop.f32.mrb[0].mxu0
        %963 = vmatprep.mubr.f32.mxu0 0.0
        %964 = vmatmul.mubr.f32.gmra.mrb[0].mxu0 %v478
        %v965 = vpop.f32.mrb[0].mxu0
        %v966 = vadd.f32 %v417, %v965
        %v967 = vpop.f32.mrb[0].mxu0
        %968 = vmatprep.mubr.f32.mxu0 0.0
        %969 = vmatmul.mubr.f32.gmra.mrb[0].mxu0 %v481
        %v970 = vpop.f32.mrb[0].mxu0
        %v971 = vadd.f32 %v417, %v970
        %v972 = vpop.f32.mrb[0].mxu0
        %973 = vmatprep.mubr.f32.mxu0 0.0
        %974 = vmatmul.mubr.f32.gmra.mrb[0].mxu0 %v484
        %v975 = vpop.f32.mrb[0].mxu0
        %v976 = vadd.f32 %v417, %v975
        %v977 = vpop.f32.mrb[0].mxu0
        %978 = vmatprep.mubr.f32.mxu0 0.0
        %979 = vmatmul.mubr.f32.gmra.mrb[0].mxu0 %v487
        %v980 = vpop.f32.mrb[0].mxu0
        %v981 = vadd.f32 %v417, %v980
        %v982 = vpop.f32.mrb[0].mxu0
        %983 = vmatprep.mubr.f32.mxu0 0.0
        %984 = vmatmul.mubr.f32.gmra.mrb[0].mxu0 %v490
        %v985 = vpop.f32.mrb[0].mxu0
        %v986 = vadd.f32 %v417, %v985
        %v987 = vpop.f32.mrb[0].mxu0
        %988 = vmatprep.mubr.f32.mxu0 0.0
        %989 = vmatmul.mubr.f32.gmra.mrb[0].mxu0 %v493
        %v990 = vpop.f32.mrb[0].mxu0
        %v991 = vadd.f32 %v417, %v990
        %v992 = vpop.f32.mrb[0].mxu0
        %993 = vmatprep.mubr.f32.mxu0 0.0
        %994 = vmatmul.mubr.f32.gmra.mrb[0].mxu0 %v496
        %v995 = vpop.f32.mrb[0].mxu0
        %v996 = vadd.f32 %v417, %v995
        %v997 = vpop.f32.mrb[0].mxu0
        %998 = vmatprep.mubr.f32.mxu0 0.0
        %999 = vmatmul.mubr.f32.gmra.mrb[0].mxu0 %v499
        %v1000 = vpop.f32.mrb[0].mxu0
        %v1001 = vadd.f32 %v417, %v1000
        %v1002 = vpop.f32.mrb[0].mxu0
        %1003 = vmatprep.mubr.f32.mxu0 0.0
        %1004 = vmatmul.mubr.f32.gmra.mrb[0].mxu0 %v502
        %v1005 = vpop.f32.mrb[0].mxu0
        %v1006 = vadd.f32 %v417, %v1005
        %v1007 = vpop.f32.mrb[0].mxu0
        %1008 = vmatprep.mubr.f32.mxu0 0.0
        %1009 = vmatmul.mubr.f32.gmra.mrb[0].mxu0 %v505
        %v1010 = vpop.f32.mrb[0].mxu0
        %v1011 = vadd.f32 %v417, %v1010
        %v1012 = vpop.f32.mrb[0].mxu0
        %1013 = vmatprep.mubr.f32.mxu0 0.0
        %1014 = vmatmul.mubr.f32.gmra.mrb[0].mxu0 %v508
        %v1015 = vpop.f32.mrb[0].mxu0
        %v1016 = vadd.f32 %v417, %v1015
        %v1017 = vpop.f32.mrb[0].mxu0
        %1018 = vmatprep.mubr.f32.mxu0 0.0
        %1019 = vmatmul.mubr.f32.gmra.mrb[0].mxu0 %v511
        %v1020 = vpop.f32.mrb[0].mxu0
        %v1021 = vadd.f32 %v417, %v1020
        %v1022 = vpop.f32.mrb[0].mxu0
        %1023 = vmatprep.mubr.f32.mxu0 0.0
        %1024 = vmatmul.mubr.f32.gmra.mrb[0].mxu0 %v514
        %v1025 = vpop.f32.mrb[0].mxu0
        %v1026 = vadd.f32 %v417, %v1025
        %v1027 = vpop.f32.mrb[0].mxu0
        %1028 = vmatprep.mubr.f32.mxu0 0.0
        %1029 = vmatmul.mubr.f32.gmra.mrb[0].mxu0 %v517
        %v1030 = vpop.f32.mrb[0].mxu0
        %v1031 = vadd.f32 %v417, %v1030
        %v1032 = vpop.f32.mrb[0].mxu0
        %1033 = vmatprep.mubr.f32.mxu0 0.0
        %1034 = vmatmul.mubr.f32.gmra.mrb[0].mxu0 %v520
        %v1035 = vpop.f32.mrb[0].mxu0
        %v1036 = vadd.f32 %v417, %v1035
        %v1037 = vpop.f32.mrb[0].mxu0
        %1038 = vmatprep.mubr.f32.mxu0 0.0
        %1039 = vmatmul.mubr.f32.gmra.mrb[0].mxu0 %v523
        %v1040 = vpop.f32.mrb[0].mxu0
        %v1041 = vadd.f32 %v417, %v1040
        %v1042 = vpop.f32.mrb[0].mxu0
        %1043 = vmatprep.mubr.f32.mxu0 0.0
        %1044 = vmatmul.mubr.f32.gmra.mrb[0].mxu0 %v526
        %v1045 = vpop.f32.mrb[0].mxu0
        %v1046 = vadd.f32 %v417, %v1045
        %v1047 = vpop.f32.mrb[0].mxu0
        %1048 = vmatprep.mubr.f32.mxu0 0.0
        %1049 = vmatmul.mubr.f32.gmra.mrb[0].mxu0 %v529
        %v1050 = vpop.f32.mrb[0].mxu0
        %v1051 = vadd.f32 %v417, %v1050
        %v1052 = vpop.f32.mrb[0].mxu0
        %1053 = vmatprep.mubr.f32.mxu0 0.0
        %1054 = vmatmul.mubr.f32.gmra.mrb[0].mxu0 %v532
        %v1055 = vpop.f32.mrb[0].mxu0
        %v1056 = vadd.f32 %v417, %v1055
        %v1057 = vpop.f32.mrb[0].mxu0
        %1058 = vmatprep.mubr.f32.mxu0 0.0
        %1059 = vmatmul.mubr.f32.gmra.mrb[0].mxu0 %v535
        %v1060 = vpop.f32.mrb[0].mxu0
        %v1061 = vadd.f32 %v417, %v1060
        %v1062 = vpop.f32.mrb[0].mxu0
        %1063 = vmatprep.mubr.f32.mxu0 0.0
        %1064 = vmatmul.mubr.f32.gmra.mrb[0].mxu0 %v538
        %v1065 = vpop.f32.mrb[0].mxu0
        %v1066 = vadd.f32 %v417, %v1065
        %v1067 = vpop.f32.mrb[0].mxu0
        %1068 = vmatprep.mubr.f32.mxu0 0.0
        %1069 = vmatmul.mubr.f32.gmra.mrb[0].mxu0 %v541
        %v1070 = vpop.f32.mrb[0].mxu0
        %v1071 = vadd.f32 %v417, %v1070
        %v1072 = vpop.f32.mrb[0].mxu0
        %1073 = vmatprep.mubr.f32.mxu0 0.0
        %1074 = vmatmul.mubr.f32.gmra.mrb[0].mxu0 %v544
        %v1075 = vpop.f32.mrb[0].mxu0
        %v1076 = vadd.f32 %v417, %v1075
        %v1077 = vpop.f32.mrb[0].mxu0
        %1078 = vmatprep.mubr.f32.mxu0 0.0
        %1079 = vmatmul.mubr.f32.gmra.mrb[0].mxu0 %v547
        %v1080 = vpop.f32.mrb[0].mxu0
        %v1081 = vadd.f32 %v417, %v1080
        %v1082 = vpop.f32.mrb[0].mxu0
        %1083 = vmatprep.mubr.f32.mxu0 0.0
        %1084 = vmatmul.mubr.f32.gmra.mrb[0].mxu0 %v550
        %v1085 = vpop.f32.mrb[0].mxu0
        %v1086 = vadd.f32 %v417, %v1085
        %v1087 = vpop.f32.mrb[0].mxu0
        %1088 = vmatprep.mubr.f32.mxu0 0.0
        %1089 = vmatmul.mubr.f32.gmra.mrb[0].mxu0 %v553
        %v1090 = vpop.f32.mrb[0].mxu0
        %v1091 = vadd.f32 %v417, %v1090
        %v1092 = vpop.f32.mrb[0].mxu0
        %1093 = vmatprep.mubr.f32.mxu0 0.0
        %1094 = vmatmul.mubr.f32.gmra.mrb[0].mxu0 %v556
        %v1095 = vpop.f32.mrb[0].mxu0
        %v1096 = vadd.f32 %v417, %v1095
        %v1097 = vpop.f32.mrb[0].mxu0
        %1098 = vmatprep.mubr.f32.mxu0 0.0
        %1099 = vmatmul.mubr.f32.gmra.mrb[0].mxu0 %v559
        %v1100 = vpop.f32.mrb[0].mxu0
        %v1101 = vadd.f32 %v417, %v1100
        %v1102 = vpop.f32.mrb[0].mxu0
        %1103 = vmatprep.mubr.f32.mxu0 0.0
        %1104 = vmatmul.mubr.f32.gmra.mrb[0].mxu0 %v562
        %v1105 = vpop.f32.mrb[0].mxu0
        %v1106 = vadd.f32 %v417, %v1105
        %v1107 = vpop.f32.mrb[0].mxu0
        %1108 = vmatprep.mubr.f32.mxu0 0.0
        %1109 = vmatmul.mubr.f32.gmra.mrb[0].mxu0 %v565
        %v1110 = vpop.f32.mrb[0].mxu0
        %v1111 = vadd.f32 %v417, %v1110
        %v1112 = vpop.f32.mrb[0].mxu0
        %1113 = vmatprep.mubr.f32.mxu0 0.0
        %1114 = vmatmul.mubr.f32.gmra.mrb[0].mxu0 %v568
        %v1115 = vpop.f32.mrb[0].mxu0
        %v1116 = vadd.f32 %v417, %v1115
        %v1117 = vpop.f32.mrb[0].mxu0
        %1118 = vmatprep.mubr.f32.mxu0 0.0
        %1119 = vmatmul.mubr.f32.gmra.mrb[0].mxu0 %v571
        %v1120 = vpop.f32.mrb[0].mxu0
        %v1121 = vadd.f32 %v417, %v1120
        %v1122 = vpop.f32.mrb[0].mxu0
        %1123 = vmatprep.mubr.f32.mxu0 0.0
        %1124 = vmatmul.mubr.f32.gmra.mrb[0].mxu0 %v574
        %v1125 = vpop.f32.mrb[0].mxu0
        %v1126 = vadd.f32 %v417, %v1125
        %v1127 = vpop.f32.mrb[0].mxu0
        %1128 = vmatprep.mubr.f32.mxu0 0.0
        %1129 = vmatmul.mubr.f32.gmra.mrb[0].mxu0 %v577
        %v1130 = vpop.f32.mrb[0].mxu0
        %v1131 = vadd.f32 %v417, %v1130
        %v1132 = vpop.f32.mrb[0].mxu0
        %1133 = vmatprep.mubr.f32.mxu0 0.0
        %1134 = vmatmul.mubr.f32.gmra.mrb[0].mxu0 %v580
        %v1135 = vpop.f32.mrb[0].mxu0
        %v1136 = vadd.f32 %v417, %v1135
        %v1137 = vpop.f32.mrb[0].mxu0
        %1138 = vmatprep.mubr.f32.mxu0 0.0
        %1139 = vmatmul.mubr.f32.gmra.mrb[0].mxu0 %v583
        %v1140 = vpop.f32.mrb[0].mxu0
        %v1141 = vadd.f32 %v417, %v1140
        %v1142 = vpop.f32.mrb[0].mxu0
        %1143 = vmatprep.mubr.f32.mxu0 0.0
        %1144 = vmatmul.mubr.f32.gmra.mrb[0].mxu0 %v586
        %v1145 = vpop.f32.mrb[0].mxu0
        %v1146 = vadd.f32 %v417, %v1145
        %v1147 = vpop.f32.mrb[0].mxu0
        %1148 = vmatprep.mubr.f32.mxu0 0.0
        %1149 = vmatmul.mubr.f32.gmra.mrb[0].mxu0 %v589
        %v1150 = vpop.f32.mrb[0].mxu0
        %v1151 = vadd.f32 %v417, %v1150
        %v1152 = vpop.f32.mrb[0].mxu0
        %1153 = vmatprep.mubr.f32.mxu0 0.0
        %1154 = vmatmul.mubr.f32.gmra.mrb[0].mxu0 %v592
        %v1155 = vpop.f32.mrb[0].mxu0
        %v1156 = vadd.f32 %v417, %v1155
        %v1157 = vpop.f32.mrb[0].mxu0
        %1158 = vmatprep.mubr.f32.mxu0 0.0
        %1159 = vmatmul.mubr.f32.gmra.mrb[0].mxu0 %v595
        %v1160 = vpop.f32.mrb[0].mxu0
        %v1161 = vadd.f32 %v417, %v1160
        %v1162 = vpop.f32.mrb[0].mxu0
        %1163 = vmatprep.mubr.f32.mxu0 0.0
        %1164 = vmatmul.mubr.f32.gmra.mrb[0].mxu0 %v598
        %v1165 = vpop.f32.mrb[0].mxu0
        %v1166 = vadd.f32 %v417, %v1165
        %v1167 = vpop.f32.mrb[0].mxu0
        %1168 = vmatprep.mubr.f32.mxu0 0.0
        %1169 = vmatmul.mubr.f32.gmra.mrb[0].mxu0 %v601
        %v1170 = vpop.f32.mrb[0].mxu0
        %v1171 = vadd.f32 %v417, %v1170
        %v1172 = vpop.f32.mrb[0].mxu0
        %1173 = vmatprep.mubr.f32.mxu0 0.0
        %1174 = vmatmul.mubr.f32.gmra.mrb[0].mxu0 %v604
        %v1175 = vpop.f32.mrb[0].mxu0
        %v1176 = vadd.f32 %v417, %v1175
        %v1177 = vpop.f32.mrb[0].mxu0
        %1178 = vmatprep.mubr.f32.mxu0 0.0
        %1179 = vmatmul.mubr.f32.gmra.mrb[0].mxu0 %v607
        %v1180 = vpop.f32.mrb[0].mxu0
        %v1181 = vadd.f32 %v417, %v1180
        %v1182 = vpop.f32.mrb[0].mxu0
        %1183 = vmatprep.mubr.f32.mxu0 0.0
        %1184 = vmatmul.mubr.f32.gmra.mrb[0].mxu0 %v610
        %v1185 = vpop.f32.mrb[0].mxu0
        %v1186 = vadd.f32 %v417, %v1185
        %v1187 = vpop.f32.mrb[0].mxu0
        %1188 = vmatprep.mubr.f32.mxu0 0.0
        %1189 = vmatmul.mubr.f32.gmra.mrb[0].mxu0 %v613
        %v1190 = vpop.f32.mrb[0].mxu0
        %v1191 = vadd.f32 %v417, %v1190
        %v1192 = vpop.f32.mrb[0].mxu0
        %1193 = vmatprep.mubr.f32.mxu0 0.0
        %1194 = vmatmul.mubr.f32.gmra.mrb[0].mxu0 %v616
        %v1195 = vpop.f32.mrb[0].mxu0
        %v1196 = vadd.f32 %v417, %v1195
        %v1197 = vpop.f32.mrb[0].mxu0
        %1198 = vmatprep.mubr.f32.mxu0 0.0
        %1199 = vmatmul.mubr.f32.gmra.mrb[0].mxu0 %v619
        %v1200 = vpop.f32.mrb[0].mxu0
        %v1201 = vadd.f32 %v417, %v1200
        %v1202 = vpop.f32.mrb[0].mxu0
        %1203 = vmatprep.mubr.f32.mxu0 0.0
        %1204 = vmatmul.mubr.f32.gmra.mrb[0].mxu0 %v622
        %v1205 = vpop.f32.mrb[0].mxu0
        %v1206 = vadd.f32 %v417, %v1205
        %v1207 = vpop.f32.mrb[0].mxu0
        %1208 = vmatprep.mubr.f32.mxu0 0.0
        %1209 = vmatmul.mubr.f32.gmra.mrb[0].mxu0 %v625
        %v1210 = vpop.f32.mrb[0].mxu0
        %v1211 = vadd.f32 %v417, %v1210
        %v1212 = vpop.f32.mrb[0].mxu0
        %1213 = vmatprep.mubr.f32.mxu0 0.0
        %1214 = vmatmul.mubr.f32.gmra.mrb[0].mxu0 %v628
        %v1215 = vpop.f32.mrb[0].mxu0
        %v1216 = vadd.f32 %v417, %v1215
        %v1217 = vpop.f32.mrb[0].mxu0
        %1218 = vmatprep.mubr.f32.mxu0 0.0
        %1219 = vmatmul.mubr.f32.gmra.mrb[0].mxu0 %v631
        %v1220 = vpop.f32.mrb[0].mxu0
        %v1221 = vadd.f32 %v417, %v1220
        %v1222 = vpop.f32.mrb[0].mxu0
        %1223 = vmatprep.mubr.f32.mxu0 0.0
        %1224 = vmatmul.mubr.f32.gmra.mrb[0].mxu0 %v634
        %v1225 = vpop.f32.mrb[0].mxu0
        %v1226 = vadd.f32 %v417, %v1225
        %v1227 = vpop.f32.mrb[0].mxu0
        %1228 = vmatprep.mubr.f32.mxu0 0.0
        %1229 = vmatmul.mubr.f32.gmra.mrb[0].mxu0 %v637
        %v1230 = vpop.f32.mrb[0].mxu0
        %v1231 = vadd.f32 %v417, %v1230
        %v1232 = vpop.f32.mrb[0].mxu0
        %1233 = vmatprep.mubr.f32.mxu0 0.0
        %1234 = vmatmul.mubr.f32.gmra.mrb[0].mxu0 %v640
        %v1235 = vpop.f32.mrb[0].mxu0
        %v1236 = vadd.f32 %v417, %v1235
        %v1237 = vpop.f32.mrb[0].mxu0
        %1238 = vmatprep.mubr.f32.mxu0 0.0
        %1239 = vmatmul.mubr.f32.gmra.mrb[0].mxu0 %v643
        %v1240 = vpop.f32.mrb[0].mxu0
        %v1241 = vadd.f32 %v417, %v1240
        %v1242 = vpop.f32.mrb[0].mxu0
        %1243 = vmatprep.mubr.f32.mxu0 0.0
        %1244 = vmatmul.mubr.f32.gmra.mrb[0].mxu0 %v646
        %v1245 = vpop.f32.mrb[0].mxu0
        %v1246 = vadd.f32 %v417, %v1245
        %v1247 = vpop.f32.mrb[0].mxu0
        %1248 = vmatprep.mubr.f32.mxu0 0.0
        %1249 = vmatmul.mubr.f32.gmra.mrb[0].mxu0 %v649
        %v1250 = vpop.f32.mrb[0].mxu0
        %v1251 = vadd.f32 %v417, %v1250
        %v1252 = vpop.f32.mrb[0].mxu0
        %1253 = vmatprep.mubr.f32.mxu0 0.0
        %1254 = vmatmul.mubr.f32.gmra.mrb[0].mxu0 %v652
        %v1255 = vpop.f32.mrb[0].mxu0
        %v1256 = vadd.f32 %v417, %v1255
        %v1257 = vpop.f32.mrb[0].mxu0
        %1258 = vmatprep.mubr.f32.mxu0 0.0
        %1259 = vmatmul.mubr.f32.gmra.mrb[0].mxu0 %v655
        %v1260 = vpop.f32.mrb[0].mxu0
        %v1261 = vadd.f32 %v417, %v1260
        %v1262 = vpop.f32.mrb[0].mxu0
        %1263 = vmatprep.mubr.f32.mxu0 0.0
        %1264 = vmatmul.mubr.f32.gmra.mrb[0].mxu0 %v658
        %v1265 = vpop.f32.mrb[0].mxu0
        %v1266 = vadd.f32 %v417, %v1265
        %v1267 = vpop.f32.mrb[0].mxu0
        %1268 = vmatprep.mubr.f32.mxu0 0.0
        %1269 = vmatmul.mubr.f32.gmra.mrb[0].mxu0 %v661
        %v1270 = vpop.f32.mrb[0].mxu0
        %v1271 = vadd.f32 %v417, %v1270
        %v1272 = vpop.f32.mrb[0].mxu0
        %1273 = vmatprep.mubr.f32.mxu0 0.0
        %1274 = vmatmul.mubr.f32.gmra.mrb[0].mxu0 %v664
        %v1275 = vpop.f32.mrb[0].mxu0
        %v1276 = vadd.f32 %v417, %v1275
        %v1277 = vpop.f32.mrb[0].mxu0
        %1278 = vmatprep.mubr.f32.mxu0 0.0
        %1279 = vmatmul.mubr.f32.gmra.mrb[0].mxu0 %v667
        %v1280 = vpop.f32.mrb[0].mxu0
        %v1281 = vadd.f32 %v417, %v1280
        %v1282 = vpop.f32.mrb[0].mxu0
        %1283 = vmatprep.mubr.f32.mxu0 0.0
        %1284 = vmatmul.mubr.f32.gmra.mrb[0].mxu0 %v670
        %v1285 = vpop.f32.mrb[0].mxu0
        %v1286 = vadd.f32 %v417, %v1285
        %v1287 = vpop.f32.mrb[0].mxu0
        %1288 = vmatprep.mubr.f32.mxu0 0.0
        %1289 = vmatmul.mubr.f32.gmra.mrb[0].mxu0 %v673
        %v1290 = vpop.f32.mrb[0].mxu0
        %v1291 = vadd.f32 %v417, %v1290
        %v1292 = vpop.f32.mrb[0].mxu0
        %1293 = vmatprep.mubr.f32.mxu0 0.0
        %1294 = vmatmul.mubr.f32.gmra.mrb[0].mxu0 %v676
        %v1295 = vpop.f32.mrb[0].mxu0
        %v1296 = vadd.f32 %v417, %v1295
        %v1297 = vpop.f32.mrb[0].mxu0
        %1298 = vmatprep.mubr.f32.mxu0 0.0
        %1299 = vmatmul.mubr.f32.gmra.mrb[0].mxu0 %v679
        %v1300 = vpop.f32.mrb[0].mxu0
        %v1301 = vadd.f32 %v417, %v1300
        %v1302 = vpop.f32.mrb[0].mxu0
        %1303 = vmatprep.mubr.f32.mxu0 0.0
        %1304 = vmatmul.mubr.f32.gmra.mrb[0].mxu0 %v682
        %v1305 = vpop.f32.mrb[0].mxu0
        %v1306 = vadd.f32 %v417, %v1305
        %v1307 = vpop.f32.mrb[0].mxu0
        %1308 = vmatprep.mubr.f32.mxu0 0.0
        %1309 = vmatmul.mubr.f32.gmra.mrb[0].mxu0 %v685
        %v1310 = vpop.f32.mrb[0].mxu0
        %v1311 = vadd.f32 %v417, %v1310
        %v1312 = vpop.f32.mrb[0].mxu0
        %1313 = vmatprep.mubr.f32.mxu0 0.0
        %1314 = vmatmul.mubr.f32.gmra.mrb[0].mxu0 %v688
        %v1315 = vpop.f32.mrb[0].mxu0
        %v1316 = vadd.f32 %v417, %v1315
        %v1317 = vpop.f32.mrb[0].mxu0
        %1318 = vmatprep.mubr.f32.mxu0 0.0
        %1319 = vmatmul.mubr.f32.gmra.mrb[0].mxu0 %v691
        %v1320 = vpop.f32.mrb[0].mxu0
        %v1321 = vadd.f32 %v417, %v1320
        %v1322 = vpop.f32.mrb[0].mxu0
        %1323 = vmatprep.mubr.f32.mxu0 0.0
        %1324 = vmatmul.mubr.f32.gmra.mrb[0].mxu0 %v694
        %v1325 = vpop.f32.mrb[0].mxu0
        %v1326 = vadd.f32 %v417, %v1325
        %v1327 = vpop.f32.mrb[0].mxu0
        %1328 = vmatprep.mubr.f32.mxu0 0.0
        %1329 = vmatmul.mubr.f32.gmra.mrb[0].mxu0 %v697
        %v1330 = vpop.f32.mrb[0].mxu0
        %v1331 = vadd.f32 %v417, %v1330
        %v1332 = vpop.f32.mrb[0].mxu0
        %1333 = vmatprep.mubr.f32.mxu0 0.0
        %1334 = vmatmul.mubr.f32.gmra.mrb[0].mxu0 %v700
        %v1335 = vpop.f32.mrb[0].mxu0
        %v1336 = vadd.f32 %v417, %v1335
        %v1337 = vpop.f32.mrb[0].mxu0
        %1338 = vmatprep.mubr.f32.mxu0 0.0
        %1339 = vmatmul.mubr.f32.gmra.mrb[0].mxu0 %v703
        %v1340 = vpop.f32.mrb[0].mxu0
        %v1341 = vadd.f32 %v417, %v1340
        %v1342 = vpop.f32.mrb[0].mxu0
        %1343 = vmatprep.mubr.f32.mxu0 0.0
        %1344 = vmatmul.mubr.f32.gmra.mrb[0].mxu0 %v706
        %v1345 = vpop.f32.mrb[0].mxu0
        %v1346 = vadd.f32 %v417, %v1345
        %v1347 = vpop.f32.mrb[0].mxu0
        %1348 = vmatprep.mubr.f32.mxu0 0.0
        %1349 = vmatmul.mubr.f32.gmra.mrb[0].mxu0 %v709
        %v1350 = vpop.f32.mrb[0].mxu0
        %v1351 = vadd.f32 %v417, %v1350
        %v1352 = vpop.f32.mrb[0].mxu0
        %1353 = vmatprep.mubr.f32.mxu0 0.0
        %1354 = vmatmul.mubr.f32.gmra.mrb[0].mxu0 %v712
        %v1355 = vpop.f32.mrb[0].mxu0
        %v1356 = vadd.f32 %v417, %v1355
        %v1357 = vpop.f32.mrb[0].mxu0
        %1358 = vmatprep.mubr.f32.mxu0 0.0
        %1359 = vmatmul.mubr.f32.gmra.mrb[0].mxu0 %v715
        %v1360 = vpop.f32.mrb[0].mxu0
        %v1361 = vadd.f32 %v417, %v1360
        %v1362 = vpop.f32.mrb[0].mxu0
        %1363 = vmatprep.mubr.f32.mxu0 0.0
        %1364 = vmatmul.mubr.f32.gmra.mrb[0].mxu0 %v718
        %v1365 = vpop.f32.mrb[0].mxu0
        %v1366 = vadd.f32 %v417, %v1365
        %v1367 = vpop.f32.mrb[0].mxu0
        %1368 = vmatprep.mubr.f32.mxu0 0.0
        %1369 = vmatmul.mubr.f32.gmra.mrb[0].mxu0 %v721
        %v1370 = vpop.f32.mrb[0].mxu0
        %v1371 = vadd.f32 %v417, %v1370
        %v1372 = vpop.f32.mrb[0].mxu0
        %1373 = vmatprep.mubr.f32.mxu0 0.0
        %1374 = vmatmul.mubr.f32.gmra.mrb[0].mxu0 %v724
        %v1375 = vpop.f32.mrb[0].mxu0
        %v1376 = vadd.f32 %v417, %v1375
        %v1377 = vpop.f32.mrb[0].mxu0
        %1378 = vmatprep.mubr.f32.mxu0 0.0
        %1379 = vmatmul.mubr.f32.gmra.mrb[0].mxu0 %v727
        %v1380 = vpop.f32.mrb[0].mxu0
        %v1381 = vadd.f32 %v417, %v1380
        %v1382 = vpop.f32.mrb[0].mxu0
        %1383 = vmatprep.mubr.f32.mxu0 0.0
        %1384 = vmatmul.mubr.f32.gmra.mrb[0].mxu0 %v730
        %v1385 = vpop.f32.mrb[0].mxu0
        %v1386 = vadd.f32 %v417, %v1385
        %v1387 = vpop.f32.mrb[0].mxu0
        %1388 = vmatprep.mubr.f32.mxu0 0.0
        %1389 = vmatmul.mubr.f32.gmra.mrb[0].mxu0 %v733
        %v1390 = vpop.f32.mrb[0].mxu0
        %v1391 = vadd.f32 %v417, %v1390
        %v1392 = vpop.f32.mrb[0].mxu0
        %1393 = vmatprep.mubr.f32.mxu0 0.0
        %1394 = vmatmul.mubr.f32.gmra.mrb[0].mxu0 %v736
        %v1395 = vpop.f32.mrb[0].mxu0
        %v1396 = vadd.f32 %v417, %v1395
        %v1397 = vpop.f32.mrb[0].mxu0
        %1398 = vmatprep.mubr.f32.mxu0 0.0
        %1399 = vmatmul.mubr.f32.gmra.mrb[0].mxu0 %v739
        %v1400 = vpop.f32.mrb[0].mxu0
        %v1401 = vadd.f32 %v417, %v1400
        %v1402 = vpop.f32.mrb[0].mxu0
        %1403 = vmatprep.mubr.f32.mxu0 0.0
        %1404 = vmatmul.mubr.f32.gmra.mrb[0].mxu0 %v742
        %v1405 = vpop.f32.mrb[0].mxu0
        %v1406 = vadd.f32 %v417, %v1405
        %v1407 = vpop.f32.mrb[0].mxu0
        %1408 = vmatprep.mubr.f32.mxu0 0.0
        %1409 = vmatmul.mubr.f32.gmra.mrb[0].mxu0 %v745
        %v1410 = vpop.f32.mrb[0].mxu0
        %v1411 = vadd.f32 %v417, %v1410
        %v1412 = vpop.f32.mrb[0].mxu0
        %1413 = vmatprep.mubr.f32.mxu0 0.0
        %1414 = vmatmul.mubr.f32.gmra.mrb[0].mxu0 %v748
        %v1415 = vpop.f32.mrb[0].mxu0
        %v1416 = vadd.f32 %v417, %v1415
        %v1417 = vpop.f32.mrb[0].mxu0
        %1418 = vmatprep.mubr.f32.mxu0 0.0
        %1419 = vmatmul.mubr.f32.gmra.mrb[0].mxu0 %v751
        %v1420 = vpop.f32.mrb[0].mxu0
        %v1421 = vadd.f32 %v417, %v1420
        %v1422 = vpop.f32.mrb[0].mxu0
        %1423 = vmatprep.mubr.f32.mxu0 0.0
        %1424 = vmatmul.mubr.f32.gmra.mrb[0].mxu0 %v754
        %v1425 = vpop.f32.mrb[0].mxu0
        %v1426 = vadd.f32 %v417, %v1425
        %v1427 = vpop.f32.mrb[0].mxu0
        %1428 = vmatprep.mubr.f32.mxu0 0.0
        %1429 = vmatmul.mubr.f32.gmra.mrb[0].mxu0 %v757
        %v1430 = vpop.f32.mrb[0].mxu0
        %v1431 = vadd.f32 %v417, %v1430
        %v1432 = vpop.f32.mrb[0].mxu0
        %1433 = vmatprep.mubr.f32.mxu0 0.0
        %1434 = vmatmul.mubr.f32.gmra.mrb[0].mxu0 %v760
        %v1435 = vpop.f32.mrb[0].mxu0
        %v1436 = vadd.f32 %v417, %v1435
        %v1437 = vpop.f32.mrb[0].mxu0
        %1438 = vmatprep.mubr.f32.mxu0 0.0
        %1439 = vmatmul.mubr.f32.gmra.mrb[0].mxu0 %v763
        %v1440 = vpop.f32.mrb[0].mxu0
        %v1441 = vadd.f32 %v417, %v1440
        %v1442 = vpop.f32.mrb[0].mxu0
        %1443 = vmatprep.mubr.f32.mxu0 0.0
        %1444 = vmatmul.mubr.f32.gmra.mrb[0].mxu0 %v766
        %v1445 = vpop.f32.mrb[0].mxu0
        %v1446 = vadd.f32 %v417, %v1445
        %v1447 = vpop.f32.mrb[0].mxu0
        %1448 = vmatprep.mubr.f32.mxu0 0.0
        %1449 = vmatmul.mubr.f32.gmra.mrb[0].mxu0 %v769
        %v1450 = vpop.f32.mrb[0].mxu0
        %v1451 = vadd.f32 %v417, %v1450
        %v1452 = vpop.f32.mrb[0].mxu0
        %1453 = vmatprep.mubr.f32.mxu0 0.0
        %1454 = vmatmul.mubr.f32.gmra.mrb[0].mxu0 %v772
        %v1455 = vpop.f32.mrb[0].mxu0
        %v1456 = vadd.f32 %v417, %v1455
        %v1457 = vpop.f32.mrb[0].mxu0
        %1458 = vmatprep.mubr.f32.mxu0 0.0
        %1459 = vmatmul.mubr.f32.gmra.mrb[0].mxu0 %v775
        %v1460 = vpop.f32.mrb[0].mxu0
        %v1461 = vadd.f32 %v417, %v1460
        %v1462 = vpop.f32.mrb[0].mxu0
        %1463 = vmatprep.mubr.f32.mxu0 0.0
        %1464 = vmatmul.mubr.f32.gmra.mrb[0].mxu0 %v778
        %v1465 = vpop.f32.mrb[0].mxu0
        %v1466 = vadd.f32 %v417, %v1465
        %v1467 = vpop.f32.mrb[0].mxu0
        %1468 = vmatprep.mubr.f32.mxu0 0.0
        %1469 = vmatmul.mubr.f32.gmra.mrb[0].mxu0 %v781
        %v1470 = vpop.f32.mrb[0].mxu0
        %v1471 = vadd.f32 %v417, %v1470
        %v1472 = vpop.f32.mrb[0].mxu0
        %1473 = vmatprep.mubr.f32.mxu0 0.0
        %1474 = vmatmul.mubr.f32.gmra.mrb[0].mxu0 %v784
        %v1475 = vpop.f32.mrb[0].mxu0
        %v1476 = vadd.f32 %v417, %v1475
        %v1477 = vpop.f32.mrb[0].mxu0
        %1478 = vmatprep.mubr.f32.mxu0 0.0
        %1479 = vmatmul.mubr.f32.gmra.mrb[0].mxu0 %v787
        %v1480 = vpop.f32.mrb[0].mxu0
        %v1481 = vadd.f32 %v417, %v1480
        %v1482 = vpop.f32.mrb[0].mxu0
        %1483 = vmatprep.mubr.f32.mxu0 0.0
        %1484 = vmatmul.mubr.f32.gmra.mrb[0].mxu0 %v790
        %v1485 = vpop.f32.mrb[0].mxu0
        %v1486 = vadd.f32 %v417, %v1485
        %v1487 = vpop.f32.mrb[0].mxu0
        %1488 = vmatprep.mubr.f32.mxu0 0.0
        %1489 = vmatmul.mubr.f32.gmra.mrb[0].mxu0 %v793
        %v1490 = vpop.f32.mrb[0].mxu0
        %v1491 = vadd.f32 %v417, %v1490
        %v1492 = vpop.f32.mrb[0].mxu0
        %1493 = vmatprep.mubr.f32.mxu0 0.0
        %1494 = vmatmul.mubr.f32.gmra.mrb[0].mxu0 %v796
        %v1495 = vpop.f32.mrb[0].mxu0
        %v1496 = vadd.f32 %v417, %v1495
        %v1497 = vpop.f32.mrb[0].mxu0
        %1498 = vmatprep.mubr.f32.mxu0 0.0
        %1499 = vmatmul.mubr.f32.gmra.mrb[0].mxu0 %v799
        %v1500 = vpop.f32.mrb[0].mxu0
        %v1501 = vadd.f32 %v417, %v1500
        %v1502 = vpop.f32.mrb[0].mxu0
        %1503 = vmatprep.mubr.f32.mxu0 0.0
        %1504 = vmatmul.mubr.f32.gmra.mrb[0].mxu0 %v802
        %v1505 = vpop.f32.mrb[0].mxu0
        %v1506 = vadd.f32 %v417, %v1505
        %v1507 = vpop.f32.mrb[0].mxu0
        %1508 = vdwg.mxu0
        %v1509 = vtanh.pop %v871
        %v1510 = vtanh.pop %v876
        %v1511 = vtanh.pop %v881
        %v1512 = vtanh.pop %v886
        %v1513 = vtanh.pop %v891
        %v1514 = vtanh.pop %v896
        %v1515 = vtanh.pop %v901
        %v1516 = vtanh.pop %v906
        %v1517 = vtanh.pop %v911
        %v1518 = vtanh.pop %v916
        %v1519 = vtanh.pop %v921
        %v1520 = vtanh.pop %v926
        %v1521 = vtanh.pop %v931
        %v1522 = vtanh.pop %v936
        %v1523 = vtanh.pop %v941
        %v1524 = vtanh.pop %v946
        %v1525 = vtanh.pop %v951
        %v1526 = vtanh.pop %v956
        %v1527 = vtanh.pop %v961
        %v1528 = vtanh.pop %v966
        %v1529 = vtanh.pop %v971
        %v1530 = vtanh.pop %v976
        %v1531 = vtanh.pop %v981
        %v1532 = vtanh.pop %v986
        %v1533 = vtanh.pop %v991
        %v1534 = vtanh.pop %v996
        %v1535 = vtanh.pop %v1001
        %v1536 = vtanh.pop %v1006
        %v1537 = vtanh.pop %v1011
        %v1538 = vtanh.pop %v1016
        %v1539 = vtanh.pop %v1021
        %v1540 = vtanh.pop %v1026
        %v1541 = vtanh.pop %v1031
        %v1542 = vtanh.pop %v1036
        %v1543 = vtanh.pop %v1041
        %v1544 = vtanh.pop %v1046
        %v1545 = vtanh.pop %v1051
        %v1546 = vtanh.pop %v1056
        %v1547 = vtanh.pop %v1061
        %v1548 = vtanh.pop %v1066
        %v1549 = vtanh.pop %v1071
        %v1550 = vtanh.pop %v1076
        %v1551 = vtanh.pop %v1081
        %v1552 = vtanh.pop %v1086
        %v1553 = vtanh.pop %v1091
        %v1554 = vtanh.pop %v1096
        %v1555 = vtanh.pop %v1101
        %v1556 = vtanh.pop %v1106
        %v1557 = vtanh.pop %v1111
        %v1558 = vtanh.pop %v1116
        %v1559 = vtanh.pop %v1121
        %v1560 = vtanh.pop %v1126
        %v1561 = vtanh.pop %v1131
        %v1562 = vtanh.pop %v1136
        %v1563 = vtanh.pop %v1141
        %v1564 = vtanh.pop %v1146
        %v1565 = vtanh.pop %v1151
        %v1566 = vtanh.pop %v1156
        %v1567 = vtanh.pop %v1161
        %v1568 = vtanh.pop %v1166
        %v1569 = vtanh.pop %v1171
        %v1570 = vtanh.pop %v1176
        %v1571 = vtanh.pop %v1181
        %v1572 = vtanh.pop %v1186
        %v1573 = vtanh.pop %v1191
        %v1574 = vtanh.pop %v1196
        %v1575 = vtanh.pop %v1201
        %v1576 = vtanh.pop %v1206
        %v1577 = vtanh.pop %v1211
        %v1578 = vtanh.pop %v1216
        %v1579 = vtanh.pop %v1221
        %v1580 = vtanh.pop %v1226
        %v1581 = vtanh.pop %v1231
        %v1582 = vtanh.pop %v1236
        %v1583 = vtanh.pop %v1241
        %v1584 = vtanh.pop %v1246
        %v1585 = vtanh.pop %v1251
        %v1586 = vtanh.pop %v1256
        %v1587 = vtanh.pop %v1261
        %v1588 = vtanh.pop %v1266
        %v1589 = vtanh.pop %v1271
        %v1590 = vtanh.pop %v1276
        %v1591 = vtanh.pop %v1281
        %v1592 = vtanh.pop %v1286
        %v1593 = vtanh.pop %v1291
        %v1594 = vtanh.pop %v1296
        %v1595 = vtanh.pop %v1301
        %v1596 = vtanh.pop %v1306
        %v1597 = vtanh.pop %v1311
        %v1598 = vtanh.pop %v1316
        %v1599 = vtanh.pop %v1321
        %v1600 = vtanh.pop %v1326
        %v1601 = vtanh.pop %v1331
        %v1602 = vtanh.pop %v1336
        %v1603 = vtanh.pop %v1341
        %v1604 = vtanh.pop %v1346
        %v1605 = vtanh.pop %v1351
        %v1606 = vtanh.pop %v1356
        %v1607 = vtanh.pop %v1361
        %v1608 = vtanh.pop %v1366
        %v1609 = vtanh.pop %v1371
        %v1610 = vtanh.pop %v1376
        %v1611 = vtanh.pop %v1381
        %v1612 = vtanh.pop %v1386
        %v1613 = vtanh.pop %v1391
        %v1614 = vtanh.pop %v1396
        %v1615 = vtanh.pop %v1401
        %v1616 = vtanh.pop %v1406
        %v1617 = vtanh.pop %v1411
        %v1618 = vtanh.pop %v1416
        %v1619 = vtanh.pop %v1421
        %v1620 = vtanh.pop %v1426
        %v1621 = vtanh.pop %v1431
        %v1622 = vtanh.pop %v1436
        %v1623 = vtanh.pop %v1441
        %v1624 = vtanh.pop %v1446
        %v1625 = vtanh.pop %v1451
        %v1626 = vtanh.pop %v1456
        %v1627 = vtanh.pop %v1461
        %v1628 = vtanh.pop %v1466
        %v1629 = vtanh.pop %v1471
        %v1630 = vtanh.pop %v1476
        %v1631 = vtanh.pop %v1481
        %v1632 = vtanh.pop %v1486
        %v1633 = vtanh.pop %v1491
        %v1634 = vtanh.pop %v1496
        %v1635 = vtanh.pop %v1501
        %v1636 = vtanh.pop %v1506
        %v1637 = vld [vmem:[%s3] sm:$0xff]
        %v1638 = vld [vmem:[%s3 + $0x8] sm:$0xff]
        %v1639 = vld [vmem:[%s3 + $0x10] sm:$0xff]
        %v1640 = vld [vmem:[%s3 + $0x18] sm:$0xff]
        %v1641 = vld [vmem:[%s4] sm:$0x1]
        %v1643 = vlaneseq
        %v1644 = vshrl.u32 %v1643, 7
        %v1645 = vsub.s32 0, %v1644
        %v1646 = vrot.slane %v1641, %v1645
        %v1649 = vsel %vm419, %v1509, 0
        %v1652 = vsel %vm419, %v1510, 0
        %v1655 = vsel %vm419, %v1511, 0
        %v1658 = vsel %vm419, %v1512, 0
        %v1661 = vsel %vm419, %v1513, 0
        %v1664 = vsel %vm419, %v1514, 0
        %v1667 = vsel %vm419, %v1515, 0
        %v1670 = vsel %vm419, %v1516, 0
        %v1673 = vsel %vm419, %v1517, 0
        %v1676 = vsel %vm419, %v1518, 0
        %v1679 = vsel %vm419, %v1519, 0
        %v1682 = vsel %vm419, %v1520, 0
        %v1685 = vsel %vm419, %v1521, 0
        %v1688 = vsel %vm419, %v1522, 0
        %v1691 = vsel %vm419, %v1523, 0
        %v1694 = vsel %vm419, %v1524, 0
        %v1697 = vsel %vm419, %v1525, 0
        %v1700 = vsel %vm419, %v1526, 0
        %v1703 = vsel %vm419, %v1527, 0
        %v1706 = vsel %vm419, %v1528, 0
        %v1709 = vsel %vm419, %v1529, 0
        %v1712 = vsel %vm419, %v1530, 0
        %v1715 = vsel %vm419, %v1531, 0
        %v1718 = vsel %vm419, %v1532, 0
        %v1721 = vsel %vm419, %v1533, 0
        %v1724 = vsel %vm419, %v1534, 0
        %v1727 = vsel %vm419, %v1535, 0
        %v1730 = vsel %vm419, %v1536, 0
        %v1733 = vsel %vm419, %v1537, 0
        %v1736 = vsel %vm419, %v1538, 0
        %v1739 = vsel %vm419, %v1539, 0
        %v1742 = vsel %vm419, %v1540, 0
        %v1745 = vsel %vm419, %v1541, 0
        %v1748 = vsel %vm419, %v1542, 0
        %v1751 = vsel %vm419, %v1543, 0
        %v1754 = vsel %vm419, %v1544, 0
        %v1757 = vsel %vm419, %v1545, 0
        %v1760 = vsel %vm419, %v1546, 0
        %v1763 = vsel %vm419, %v1547, 0
        %v1766 = vsel %vm419, %v1548, 0
        %v1769 = vsel %vm419, %v1549, 0
        %v1772 = vsel %vm419, %v1550, 0
        %v1775 = vsel %vm419, %v1551, 0
        %v1778 = vsel %vm419, %v1552, 0
        %v1781 = vsel %vm419, %v1553, 0
        %v1784 = vsel %vm419, %v1554, 0
        %v1787 = vsel %vm419, %v1555, 0
        %v1790 = vsel %vm419, %v1556, 0
        %v1793 = vsel %vm419, %v1557, 0
        %v1796 = vsel %vm419, %v1558, 0
        %v1799 = vsel %vm419, %v1559, 0
        %v1802 = vsel %vm419, %v1560, 0
        %v1805 = vsel %vm419, %v1561, 0
        %v1808 = vsel %vm419, %v1562, 0
        %v1811 = vsel %vm419, %v1563, 0
        %v1814 = vsel %vm419, %v1564, 0
        %v1817 = vsel %vm419, %v1565, 0
        %v1820 = vsel %vm419, %v1566, 0
        %v1823 = vsel %vm419, %v1567, 0
        %v1826 = vsel %vm419, %v1568, 0
        %v1829 = vsel %vm419, %v1569, 0
        %v1832 = vsel %vm419, %v1570, 0
        %v1835 = vsel %vm419, %v1571, 0
        %v1838 = vsel %vm419, %v1572, 0
        %v1841 = vsel %vm419, %v1573, 0
        %v1844 = vsel %vm419, %v1574, 0
        %v1847 = vsel %vm419, %v1575, 0
        %v1850 = vsel %vm419, %v1576, 0
        %v1853 = vsel %vm419, %v1577, 0
        %v1856 = vsel %vm419, %v1578, 0
        %v1859 = vsel %vm419, %v1579, 0
        %v1862 = vsel %vm419, %v1580, 0
        %v1865 = vsel %vm419, %v1581, 0
        %v1868 = vsel %vm419, %v1582, 0
        %v1871 = vsel %vm419, %v1583, 0
        %v1874 = vsel %vm419, %v1584, 0
        %v1877 = vsel %vm419, %v1585, 0
        %v1880 = vsel %vm419, %v1586, 0
        %v1883 = vsel %vm419, %v1587, 0
        %v1886 = vsel %vm419, %v1588, 0
        %v1889 = vsel %vm419, %v1589, 0
        %v1892 = vsel %vm419, %v1590, 0
        %v1895 = vsel %vm419, %v1591, 0
        %v1898 = vsel %vm419, %v1592, 0
        %v1901 = vsel %vm419, %v1593, 0
        %v1904 = vsel %vm419, %v1594, 0
        %v1907 = vsel %vm419, %v1595, 0
        %v1910 = vsel %vm419, %v1596, 0
        %v1913 = vsel %vm419, %v1597, 0
        %v1916 = vsel %vm419, %v1598, 0
        %v1919 = vsel %vm419, %v1599, 0
        %v1922 = vsel %vm419, %v1600, 0
        %v1925 = vsel %vm419, %v1601, 0
        %v1928 = vsel %vm419, %v1602, 0
        %v1931 = vsel %vm419, %v1603, 0
        %v1934 = vsel %vm419, %v1604, 0
        %v1937 = vsel %vm419, %v1605, 0
        %v1940 = vsel %vm419, %v1606, 0
        %v1943 = vsel %vm419, %v1607, 0
        %v1946 = vsel %vm419, %v1608, 0
        %v1949 = vsel %vm419, %v1609, 0
        %v1952 = vsel %vm419, %v1610, 0
        %v1955 = vsel %vm419, %v1611, 0
        %v1958 = vsel %vm419, %v1612, 0
        %v1961 = vsel %vm419, %v1613, 0
        %v1964 = vsel %vm419, %v1614, 0
        %v1967 = vsel %vm419, %v1615, 0
        %v1970 = vsel %vm419, %v1616, 0
        %v1973 = vsel %vm419, %v1617, 0
        %v1976 = vsel %vm419, %v1618, 0
        %v1979 = vsel %vm419, %v1619, 0
        %v1982 = vsel %vm419, %v1620, 0
        %v1985 = vsel %vm419, %v1621, 0
        %v1988 = vsel %vm419, %v1622, 0
        %v1991 = vsel %vm419, %v1623, 0
        %v1994 = vsel %vm419, %v1624, 0
        %v1997 = vsel %vm419, %v1625, 0
        %v2000 = vsel %vm419, %v1626, 0
        %v2003 = vsel %vm419, %v1627, 0
        %v2006 = vsel %vm419, %v1628, 0
        %v2009 = vsel %vm419, %v1629, 0
        %v2012 = vsel %vm419, %v1630, 0
        %v2015 = vsel %vm419, %v1631, 0
        %v2018 = vsel %vm419, %v1632, 0
        %v2021 = vsel %vm419, %v1633, 0
        %v2024 = vsel %vm419, %v1634, 0
        %v2027 = vsel %vm419, %v1635, 0
        %v2030 = vsel %vm419, %v1636, 0
        %2032 = vmatprep.subr.mxu0 0.0
        %2033 = vmatpush1.msra.mxu0 %v1637
        %2034 = vmatprep.subr.mxu0 0.0
        %2035 = vmatpush1.msra.mxu0 %v1638
        %2036 = vmatprep.subr.mxu0 0.0
        %2037 = vmatpush1.msra.mxu0 %v1639
        %2038 = vmatprep.subr.mxu0 0.0
        %2039 = vmatpush1.msra.mxu0 %v1640
        %2040 = vmatprep.subr.mxu0 0.0
        %2041 = vmatpush1.msra.mxu0 0.0
        %2042 = vmatprep.subr.mxu0 0.0
        %2043 = vmatpush1.msra.mxu0 0.0
        %2044 = vmatprep.subr.mxu0 0.0
        %2045 = vmatpush1.msra.mxu0 0.0
        %2046 = vmatprep.subr.mxu0 0.0
        %2047 = vmatpush1.msra.mxu0 0.0
        %2048 = vmatprep.subr.mxu0 0.0
        %2049 = vmatpush1.msra.mxu0 0.0
        %2050 = vmatprep.subr.mxu0 0.0
        %2051 = vmatpush1.msra.mxu0 0.0
        %2052 = vmatprep.subr.mxu0 0.0
        %2053 = vmatpush1.msra.mxu0 0.0
        %2054 = vmatprep.subr.mxu0 0.0
        %2055 = vmatpush1.msra.mxu0 0.0
        %2056 = vmatprep.subr.mxu0 0.0
        %2057 = vmatpush1.msra.mxu0 0.0
        %2058 = vmatprep.subr.mxu0 0.0
        %2059 = vmatpush1.msra.mxu0 0.0
        %2060 = vmatprep.subr.mxu0 0.0
        %2061 = vmatpush1.msra.mxu0 0.0
        %2062 = vmatprep.subr.mxu0 0.0
        %2063 = vmatpush1.msra.mxu0 0.0
        %2064 = vmatprep.subr.mxu0 0.0
        %2065 = vmatpush1.msra.mxu0 0.0
        %2066 = vmatprep.subr.mxu0 0.0
        %2067 = vmatpush1.msra.mxu0 0.0
        %2068 = vmatprep.subr.mxu0 0.0
        %2069 = vmatpush1.msra.mxu0 0.0
        %2070 = vmatprep.subr.mxu0 0.0
        %2071 = vmatpush1.msra.mxu0 0.0
        %2072 = vmatprep.subr.mxu0 0.0
        %2073 = vmatpush1.msra.mxu0 0.0
        %2074 = vmatprep.subr.mxu0 0.0
        %2075 = vmatpush1.msra.mxu0 0.0
        %2076 = vmatprep.subr.mxu0 0.0
        %2077 = vmatpush1.msra.mxu0 0.0
        %2078 = vmatprep.subr.mxu0 0.0
        %2079 = vmatpush1.msra.mxu0 0.0
        %2080 = vmatprep.subr.mxu0 0.0
        %2081 = vmatpush1.msra.mxu0 0.0
        %2082 = vmatprep.subr.mxu0 0.0
        %2083 = vmatpush1.msra.mxu0 0.0
        %2084 = vmatprep.subr.mxu0 0.0
        %2085 = vmatpush1.msra.mxu0 0.0
        %2086 = vmatprep.subr.mxu0 0.0
        %2087 = vmatpush1.msra.mxu0 0.0
        %2088 = vmatprep.subr.mxu0 0.0
        %2089 = vmatpush1.msra.mxu0 0.0
        %2090 = vmatprep.subr.mxu0 0.0
        %2091 = vmatpush1.msra.mxu0 0.0
        %2092 = vmatprep.subr.mxu0 0.0
        %2093 = vmatpush1.msra.mxu0 0.0
        %2094 = vmatprep.subr.mxu0 0.0
        %2095 = vmatpush1.msra.mxu0 0.0
        %2096 = vmatprep.mubr.f32.mxu0 0.0
        %2097 = vmatmul.mubr.f32.gmra.mrb[0].mxu0 %v1649
        %v2098 = vpop.f32.mrb[0].mxu0
        %v2099 = vadd.f32 %v1646, %v2098
        %v2100 = vpop.f32.mrb[0].mxu0
        %2101 = vmatprep.mubr.f32.mxu0 0.0
        %2102 = vmatmul.mubr.f32.gmra.mrb[0].mxu0 %v1652
        %v2103 = vpop.f32.mrb[0].mxu0
        %v2104 = vadd.f32 %v1646, %v2103
        %v2105 = vpop.f32.mrb[0].mxu0
        %2106 = vmatprep.mubr.f32.mxu0 0.0
        %2107 = vmatmul.mubr.f32.gmra.mrb[0].mxu0 %v1655
        %v2108 = vpop.f32.mrb[0].mxu0
        %v2109 = vadd.f32 %v1646, %v2108
        %v2110 = vpop.f32.mrb[0].mxu0
        %2111 = vmatprep.mubr.f32.mxu0 0.0
        %2112 = vmatmul.mubr.f32.gmra.mrb[0].mxu0 %v1658
        %v2113 = vpop.f32.mrb[0].mxu0
        %v2114 = vadd.f32 %v1646, %v2113
        %v2115 = vpop.f32.mrb[0].mxu0
        %2116 = vmatprep.mubr.f32.mxu0 0.0
        %2117 = vmatmul.mubr.f32.gmra.mrb[0].mxu0 %v1661
        %v2118 = vpop.f32.mrb[0].mxu0
        %v2119 = vadd.f32 %v1646, %v2118
        %v2120 = vpop.f32.mrb[0].mxu0
        %2121 = vmatprep.mubr.f32.mxu0 0.0
        %2122 = vmatmul.mubr.f32.gmra.mrb[0].mxu0 %v1664
        %v2123 = vpop.f32.mrb[0].mxu0
        %v2124 = vadd.f32 %v1646, %v2123
        %v2125 = vpop.f32.mrb[0].mxu0
        %2126 = vmatprep.mubr.f32.mxu0 0.0
        %2127 = vmatmul.mubr.f32.gmra.mrb[0].mxu0 %v1667
        %v2128 = vpop.f32.mrb[0].mxu0
        %v2129 = vadd.f32 %v1646, %v2128
        %v2130 = vpop.f32.mrb[0].mxu0
        %2131 = vmatprep.mubr.f32.mxu0 0.0
        %2132 = vmatmul.mubr.f32.gmra.mrb[0].mxu0 %v1670
        %v2133 = vpop.f32.mrb[0].mxu0
        %v2134 = vadd.f32 %v1646, %v2133
        %v2135 = vpop.f32.mrb[0].mxu0
        %2136 = vmatprep.mubr.f32.mxu0 0.0
        %2137 = vmatmul.mubr.f32.gmra.mrb[0].mxu0 %v1673
        %v2138 = vpop.f32.mrb[0].mxu0
        %v2139 = vadd.f32 %v1646, %v2138
        %v2140 = vpop.f32.mrb[0].mxu0
        %2141 = vmatprep.mubr.f32.mxu0 0.0
        %2142 = vmatmul.mubr.f32.gmra.mrb[0].mxu0 %v1676
        %v2143 = vpop.f32.mrb[0].mxu0
        %v2144 = vadd.f32 %v1646, %v2143
        %v2145 = vpop.f32.mrb[0].mxu0
        %2146 = vmatprep.mubr.f32.mxu0 0.0
        %2147 = vmatmul.mubr.f32.gmra.mrb[0].mxu0 %v1679
        %v2148 = vpop.f32.mrb[0].mxu0
        %v2149 = vadd.f32 %v1646, %v2148
        %v2150 = vpop.f32.mrb[0].mxu0
        %2151 = vmatprep.mubr.f32.mxu0 0.0
        %2152 = vmatmul.mubr.f32.gmra.mrb[0].mxu0 %v1682
        %v2153 = vpop.f32.mrb[0].mxu0
        %v2154 = vadd.f32 %v1646, %v2153
        %v2155 = vpop.f32.mrb[0].mxu0
        %2156 = vmatprep.mubr.f32.mxu0 0.0
        %2157 = vmatmul.mubr.f32.gmra.mrb[0].mxu0 %v1685
        %v2158 = vpop.f32.mrb[0].mxu0
        %v2159 = vadd.f32 %v1646, %v2158
        %v2160 = vpop.f32.mrb[0].mxu0
        %2161 = vmatprep.mubr.f32.mxu0 0.0
        %2162 = vmatmul.mubr.f32.gmra.mrb[0].mxu0 %v1688
        %v2163 = vpop.f32.mrb[0].mxu0
        %v2164 = vadd.f32 %v1646, %v2163
        %v2165 = vpop.f32.mrb[0].mxu0
        %2166 = vmatprep.mubr.f32.mxu0 0.0
        %2167 = vmatmul.mubr.f32.gmra.mrb[0].mxu0 %v1691
        %v2168 = vpop.f32.mrb[0].mxu0
        %v2169 = vadd.f32 %v1646, %v2168
        %v2170 = vpop.f32.mrb[0].mxu0
        %2171 = vmatprep.mubr.f32.mxu0 0.0
        %2172 = vmatmul.mubr.f32.gmra.mrb[0].mxu0 %v1694
        %v2173 = vpop.f32.mrb[0].mxu0
        %v2174 = vadd.f32 %v1646, %v2173
        %v2175 = vpop.f32.mrb[0].mxu0
        %2176 = vmatprep.mubr.f32.mxu0 0.0
        %2177 = vmatmul.mubr.f32.gmra.mrb[0].mxu0 %v1697
        %v2178 = vpop.f32.mrb[0].mxu0
        %v2179 = vadd.f32 %v1646, %v2178
        %v2180 = vpop.f32.mrb[0].mxu0
        %2181 = vmatprep.mubr.f32.mxu0 0.0
        %2182 = vmatmul.mubr.f32.gmra.mrb[0].mxu0 %v1700
        %v2183 = vpop.f32.mrb[0].mxu0
        %v2184 = vadd.f32 %v1646, %v2183
        %v2185 = vpop.f32.mrb[0].mxu0
        %2186 = vmatprep.mubr.f32.mxu0 0.0
        %2187 = vmatmul.mubr.f32.gmra.mrb[0].mxu0 %v1703
        %v2188 = vpop.f32.mrb[0].mxu0
        %v2189 = vadd.f32 %v1646, %v2188
        %v2190 = vpop.f32.mrb[0].mxu0
        %2191 = vmatprep.mubr.f32.mxu0 0.0
        %2192 = vmatmul.mubr.f32.gmra.mrb[0].mxu0 %v1706
        %v2193 = vpop.f32.mrb[0].mxu0
        %v2194 = vadd.f32 %v1646, %v2193
        %v2195 = vpop.f32.mrb[0].mxu0
        %2196 = vmatprep.mubr.f32.mxu0 0.0
        %2197 = vmatmul.mubr.f32.gmra.mrb[0].mxu0 %v1709
        %v2198 = vpop.f32.mrb[0].mxu0
        %v2199 = vadd.f32 %v1646, %v2198
        %v2200 = vpop.f32.mrb[0].mxu0
        %2201 = vmatprep.mubr.f32.mxu0 0.0
        %2202 = vmatmul.mubr.f32.gmra.mrb[0].mxu0 %v1712
        %v2203 = vpop.f32.mrb[0].mxu0
        %v2204 = vadd.f32 %v1646, %v2203
        %v2205 = vpop.f32.mrb[0].mxu0
        %2206 = vmatprep.mubr.f32.mxu0 0.0
        %2207 = vmatmul.mubr.f32.gmra.mrb[0].mxu0 %v1715
        %v2208 = vpop.f32.mrb[0].mxu0
        %v2209 = vadd.f32 %v1646, %v2208
        %v2210 = vpop.f32.mrb[0].mxu0
        %2211 = vmatprep.mubr.f32.mxu0 0.0
        %2212 = vmatmul.mubr.f32.gmra.mrb[0].mxu0 %v1718
        %v2213 = vpop.f32.mrb[0].mxu0
        %v2214 = vadd.f32 %v1646, %v2213
        %v2215 = vpop.f32.mrb[0].mxu0
        %2216 = vmatprep.mubr.f32.mxu0 0.0
        %2217 = vmatmul.mubr.f32.gmra.mrb[0].mxu0 %v1721
        %v2218 = vpop.f32.mrb[0].mxu0
        %v2219 = vadd.f32 %v1646, %v2218
        %v2220 = vpop.f32.mrb[0].mxu0
        %2221 = vmatprep.mubr.f32.mxu0 0.0
        %2222 = vmatmul.mubr.f32.gmra.mrb[0].mxu0 %v1724
        %v2223 = vpop.f32.mrb[0].mxu0
        %v2224 = vadd.f32 %v1646, %v2223
        %v2225 = vpop.f32.mrb[0].mxu0
        %2226 = vmatprep.mubr.f32.mxu0 0.0
        %2227 = vmatmul.mubr.f32.gmra.mrb[0].mxu0 %v1727
        %v2228 = vpop.f32.mrb[0].mxu0
        %v2229 = vadd.f32 %v1646, %v2228
        %v2230 = vpop.f32.mrb[0].mxu0
        %2231 = vmatprep.mubr.f32.mxu0 0.0
        %2232 = vmatmul.mubr.f32.gmra.mrb[0].mxu0 %v1730
        %v2233 = vpop.f32.mrb[0].mxu0
        %v2234 = vadd.f32 %v1646, %v2233
        %v2235 = vpop.f32.mrb[0].mxu0
        %2236 = vmatprep.mubr.f32.mxu0 0.0
        %2237 = vmatmul.mubr.f32.gmra.mrb[0].mxu0 %v1733
        %v2238 = vpop.f32.mrb[0].mxu0
        %v2239 = vadd.f32 %v1646, %v2238
        %v2240 = vpop.f32.mrb[0].mxu0
        %2241 = vmatprep.mubr.f32.mxu0 0.0
        %2242 = vmatmul.mubr.f32.gmra.mrb[0].mxu0 %v1736
        %v2243 = vpop.f32.mrb[0].mxu0
        %v2244 = vadd.f32 %v1646, %v2243
        %v2245 = vpop.f32.mrb[0].mxu0
        %2246 = vmatprep.mubr.f32.mxu0 0.0
        %2247 = vmatmul.mubr.f32.gmra.mrb[0].mxu0 %v1739
        %v2248 = vpop.f32.mrb[0].mxu0
        %v2249 = vadd.f32 %v1646, %v2248
        %v2250 = vpop.f32.mrb[0].mxu0
        %2251 = vmatprep.mubr.f32.mxu0 0.0
        %2252 = vmatmul.mubr.f32.gmra.mrb[0].mxu0 %v1742
        %v2253 = vpop.f32.mrb[0].mxu0
        %v2254 = vadd.f32 %v1646, %v2253
        %v2255 = vpop.f32.mrb[0].mxu0
        %2256 = vmatprep.mubr.f32.mxu0 0.0
        %2257 = vmatmul.mubr.f32.gmra.mrb[0].mxu0 %v1745
        %v2258 = vpop.f32.mrb[0].mxu0
        %v2259 = vadd.f32 %v1646, %v2258
        %v2260 = vpop.f32.mrb[0].mxu0
        %2261 = vmatprep.mubr.f32.mxu0 0.0
        %2262 = vmatmul.mubr.f32.gmra.mrb[0].mxu0 %v1748
        %v2263 = vpop.f32.mrb[0].mxu0
        %v2264 = vadd.f32 %v1646, %v2263
        %v2265 = vpop.f32.mrb[0].mxu0
        %2266 = vmatprep.mubr.f32.mxu0 0.0
        %2267 = vmatmul.mubr.f32.gmra.mrb[0].mxu0 %v1751
        %v2268 = vpop.f32.mrb[0].mxu0
        %v2269 = vadd.f32 %v1646, %v2268
        %v2270 = vpop.f32.mrb[0].mxu0
        %2271 = vmatprep.mubr.f32.mxu0 0.0
        %2272 = vmatmul.mubr.f32.gmra.mrb[0].mxu0 %v1754
        %v2273 = vpop.f32.mrb[0].mxu0
        %v2274 = vadd.f32 %v1646, %v2273
        %v2275 = vpop.f32.mrb[0].mxu0
        %2276 = vmatprep.mubr.f32.mxu0 0.0
        %2277 = vmatmul.mubr.f32.gmra.mrb[0].mxu0 %v1757
        %v2278 = vpop.f32.mrb[0].mxu0
        %v2279 = vadd.f32 %v1646, %v2278
        %v2280 = vpop.f32.mrb[0].mxu0
        %2281 = vmatprep.mubr.f32.mxu0 0.0
        %2282 = vmatmul.mubr.f32.gmra.mrb[0].mxu0 %v1760
        %v2283 = vpop.f32.mrb[0].mxu0
        %v2284 = vadd.f32 %v1646, %v2283
        %v2285 = vpop.f32.mrb[0].mxu0
        %2286 = vmatprep.mubr.f32.mxu0 0.0
        %2287 = vmatmul.mubr.f32.gmra.mrb[0].mxu0 %v1763
        %v2288 = vpop.f32.mrb[0].mxu0
        %v2289 = vadd.f32 %v1646, %v2288
        %v2290 = vpop.f32.mrb[0].mxu0
        %2291 = vmatprep.mubr.f32.mxu0 0.0
        %2292 = vmatmul.mubr.f32.gmra.mrb[0].mxu0 %v1766
        %v2293 = vpop.f32.mrb[0].mxu0
        %v2294 = vadd.f32 %v1646, %v2293
        %v2295 = vpop.f32.mrb[0].mxu0
        %2296 = vmatprep.mubr.f32.mxu0 0.0
        %2297 = vmatmul.mubr.f32.gmra.mrb[0].mxu0 %v1769
        %v2298 = vpop.f32.mrb[0].mxu0
        %v2299 = vadd.f32 %v1646, %v2298
        %v2300 = vpop.f32.mrb[0].mxu0
        %2301 = vmatprep.mubr.f32.mxu0 0.0
        %2302 = vmatmul.mubr.f32.gmra.mrb[0].mxu0 %v1772
        %v2303 = vpop.f32.mrb[0].mxu0
        %v2304 = vadd.f32 %v1646, %v2303
        %v2305 = vpop.f32.mrb[0].mxu0
        %2306 = vmatprep.mubr.f32.mxu0 0.0
        %2307 = vmatmul.mubr.f32.gmra.mrb[0].mxu0 %v1775
        %v2308 = vpop.f32.mrb[0].mxu0
        %v2309 = vadd.f32 %v1646, %v2308
        %v2310 = vpop.f32.mrb[0].mxu0
        %2311 = vmatprep.mubr.f32.mxu0 0.0
        %2312 = vmatmul.mubr.f32.gmra.mrb[0].mxu0 %v1778
        %v2313 = vpop.f32.mrb[0].mxu0
        %v2314 = vadd.f32 %v1646, %v2313
        %v2315 = vpop.f32.mrb[0].mxu0
        %2316 = vmatprep.mubr.f32.mxu0 0.0
        %2317 = vmatmul.mubr.f32.gmra.mrb[0].mxu0 %v1781
        %v2318 = vpop.f32.mrb[0].mxu0
        %v2319 = vadd.f32 %v1646, %v2318
        %v2320 = vpop.f32.mrb[0].mxu0
        %2321 = vmatprep.mubr.f32.mxu0 0.0
        %2322 = vmatmul.mubr.f32.gmra.mrb[0].mxu0 %v1784
        %v2323 = vpop.f32.mrb[0].mxu0
        %v2324 = vadd.f32 %v1646, %v2323
        %v2325 = vpop.f32.mrb[0].mxu0
        %2326 = vmatprep.mubr.f32.mxu0 0.0
        %2327 = vmatmul.mubr.f32.gmra.mrb[0].mxu0 %v1787
        %v2328 = vpop.f32.mrb[0].mxu0
        %v2329 = vadd.f32 %v1646, %v2328
        %v2330 = vpop.f32.mrb[0].mxu0
        %2331 = vmatprep.mubr.f32.mxu0 0.0
        %2332 = vmatmul.mubr.f32.gmra.mrb[0].mxu0 %v1790
        %v2333 = vpop.f32.mrb[0].mxu0
        %v2334 = vadd.f32 %v1646, %v2333
        %v2335 = vpop.f32.mrb[0].mxu0
        %2336 = vmatprep.mubr.f32.mxu0 0.0
        %2337 = vmatmul.mubr.f32.gmra.mrb[0].mxu0 %v1793
        %v2338 = vpop.f32.mrb[0].mxu0
        %v2339 = vadd.f32 %v1646, %v2338
        %v2340 = vpop.f32.mrb[0].mxu0
        %2341 = vmatprep.mubr.f32.mxu0 0.0
        %2342 = vmatmul.mubr.f32.gmra.mrb[0].mxu0 %v1796
        %v2343 = vpop.f32.mrb[0].mxu0
        %v2344 = vadd.f32 %v1646, %v2343
        %v2345 = vpop.f32.mrb[0].mxu0
        %2346 = vmatprep.mubr.f32.mxu0 0.0
        %2347 = vmatmul.mubr.f32.gmra.mrb[0].mxu0 %v1799
        %v2348 = vpop.f32.mrb[0].mxu0
        %v2349 = vadd.f32 %v1646, %v2348
        %v2350 = vpop.f32.mrb[0].mxu0
        %2351 = vmatprep.mubr.f32.mxu0 0.0
        %2352 = vmatmul.mubr.f32.gmra.mrb[0].mxu0 %v1802
        %v2353 = vpop.f32.mrb[0].mxu0
        %v2354 = vadd.f32 %v1646, %v2353
        %v2355 = vpop.f32.mrb[0].mxu0
        %2356 = vmatprep.mubr.f32.mxu0 0.0
        %2357 = vmatmul.mubr.f32.gmra.mrb[0].mxu0 %v1805
        %v2358 = vpop.f32.mrb[0].mxu0
        %v2359 = vadd.f32 %v1646, %v2358
        %v2360 = vpop.f32.mrb[0].mxu0
        %2361 = vmatprep.mubr.f32.mxu0 0.0
        %2362 = vmatmul.mubr.f32.gmra.mrb[0].mxu0 %v1808
        %v2363 = vpop.f32.mrb[0].mxu0
        %v2364 = vadd.f32 %v1646, %v2363
        %v2365 = vpop.f32.mrb[0].mxu0
        %2366 = vmatprep.mubr.f32.mxu0 0.0
        %2367 = vmatmul.mubr.f32.gmra.mrb[0].mxu0 %v1811
        %v2368 = vpop.f32.mrb[0].mxu0
        %v2369 = vadd.f32 %v1646, %v2368
        %v2370 = vpop.f32.mrb[0].mxu0
        %2371 = vmatprep.mubr.f32.mxu0 0.0
        %2372 = vmatmul.mubr.f32.gmra.mrb[0].mxu0 %v1814
        %v2373 = vpop.f32.mrb[0].mxu0
        %v2374 = vadd.f32 %v1646, %v2373
        %v2375 = vpop.f32.mrb[0].mxu0
        %2376 = vmatprep.mubr.f32.mxu0 0.0
        %2377 = vmatmul.mubr.f32.gmra.mrb[0].mxu0 %v1817
        %v2378 = vpop.f32.mrb[0].mxu0
        %v2379 = vadd.f32 %v1646, %v2378
        %v2380 = vpop.f32.mrb[0].mxu0
        %2381 = vmatprep.mubr.f32.mxu0 0.0
        %2382 = vmatmul.mubr.f32.gmra.mrb[0].mxu0 %v1820
        %v2383 = vpop.f32.mrb[0].mxu0
        %v2384 = vadd.f32 %v1646, %v2383
        %v2385 = vpop.f32.mrb[0].mxu0
        %2386 = vmatprep.mubr.f32.mxu0 0.0
        %2387 = vmatmul.mubr.f32.gmra.mrb[0].mxu0 %v1823
        %v2388 = vpop.f32.mrb[0].mxu0
        %v2389 = vadd.f32 %v1646, %v2388
        %v2390 = vpop.f32.mrb[0].mxu0
        %2391 = vmatprep.mubr.f32.mxu0 0.0
        %2392 = vmatmul.mubr.f32.gmra.mrb[0].mxu0 %v1826
        %v2393 = vpop.f32.mrb[0].mxu0
        %v2394 = vadd.f32 %v1646, %v2393
        %v2395 = vpop.f32.mrb[0].mxu0
        %2396 = vmatprep.mubr.f32.mxu0 0.0
        %2397 = vmatmul.mubr.f32.gmra.mrb[0].mxu0 %v1829
        %v2398 = vpop.f32.mrb[0].mxu0
        %v2399 = vadd.f32 %v1646, %v2398
        %v2400 = vpop.f32.mrb[0].mxu0
        %2401 = vmatprep.mubr.f32.mxu0 0.0
        %2402 = vmatmul.mubr.f32.gmra.mrb[0].mxu0 %v1832
        %v2403 = vpop.f32.mrb[0].mxu0
        %v2404 = vadd.f32 %v1646, %v2403
        %v2405 = vpop.f32.mrb[0].mxu0
        %2406 = vmatprep.mubr.f32.mxu0 0.0
        %2407 = vmatmul.mubr.f32.gmra.mrb[0].mxu0 %v1835
        %v2408 = vpop.f32.mrb[0].mxu0
        %v2409 = vadd.f32 %v1646, %v2408
        %v2410 = vpop.f32.mrb[0].mxu0
        %2411 = vmatprep.mubr.f32.mxu0 0.0
        %2412 = vmatmul.mubr.f32.gmra.mrb[0].mxu0 %v1838
        %v2413 = vpop.f32.mrb[0].mxu0
        %v2414 = vadd.f32 %v1646, %v2413
        %v2415 = vpop.f32.mrb[0].mxu0
        %2416 = vmatprep.mubr.f32.mxu0 0.0
        %2417 = vmatmul.mubr.f32.gmra.mrb[0].mxu0 %v1841
        %v2418 = vpop.f32.mrb[0].mxu0
        %v2419 = vadd.f32 %v1646, %v2418
        %v2420 = vpop.f32.mrb[0].mxu0
        %2421 = vmatprep.mubr.f32.mxu0 0.0
        %2422 = vmatmul.mubr.f32.gmra.mrb[0].mxu0 %v1844
        %v2423 = vpop.f32.mrb[0].mxu0
        %v2424 = vadd.f32 %v1646, %v2423
        %v2425 = vpop.f32.mrb[0].mxu0
        %2426 = vmatprep.mubr.f32.mxu0 0.0
        %2427 = vmatmul.mubr.f32.gmra.mrb[0].mxu0 %v1847
        %v2428 = vpop.f32.mrb[0].mxu0
        %v2429 = vadd.f32 %v1646, %v2428
        %v2430 = vpop.f32.mrb[0].mxu0
        %2431 = vmatprep.mubr.f32.mxu0 0.0
        %2432 = vmatmul.mubr.f32.gmra.mrb[0].mxu0 %v1850
        %v2433 = vpop.f32.mrb[0].mxu0
        %v2434 = vadd.f32 %v1646, %v2433
        %v2435 = vpop.f32.mrb[0].mxu0
        %2436 = vmatprep.mubr.f32.mxu0 0.0
        %2437 = vmatmul.mubr.f32.gmra.mrb[0].mxu0 %v1853
        %v2438 = vpop.f32.mrb[0].mxu0
        %v2439 = vadd.f32 %v1646, %v2438
        %v2440 = vpop.f32.mrb[0].mxu0
        %2441 = vmatprep.mubr.f32.mxu0 0.0
        %2442 = vmatmul.mubr.f32.gmra.mrb[0].mxu0 %v1856
        %v2443 = vpop.f32.mrb[0].mxu0
        %v2444 = vadd.f32 %v1646, %v2443
        %v2445 = vpop.f32.mrb[0].mxu0
        %2446 = vmatprep.mubr.f32.mxu0 0.0
        %2447 = vmatmul.mubr.f32.gmra.mrb[0].mxu0 %v1859
        %v2448 = vpop.f32.mrb[0].mxu0
        %v2449 = vadd.f32 %v1646, %v2448
        %v2450 = vpop.f32.mrb[0].mxu0
        %2451 = vmatprep.mubr.f32.mxu0 0.0
        %2452 = vmatmul.mubr.f32.gmra.mrb[0].mxu0 %v1862
        %v2453 = vpop.f32.mrb[0].mxu0
        %v2454 = vadd.f32 %v1646, %v2453
        %v2455 = vpop.f32.mrb[0].mxu0
        %2456 = vmatprep.mubr.f32.mxu0 0.0
        %2457 = vmatmul.mubr.f32.gmra.mrb[0].mxu0 %v1865
        %v2458 = vpop.f32.mrb[0].mxu0
        %v2459 = vadd.f32 %v1646, %v2458
        %v2460 = vpop.f32.mrb[0].mxu0
        %2461 = vmatprep.mubr.f32.mxu0 0.0
        %2462 = vmatmul.mubr.f32.gmra.mrb[0].mxu0 %v1868
        %v2463 = vpop.f32.mrb[0].mxu0
        %v2464 = vadd.f32 %v1646, %v2463
        %v2465 = vpop.f32.mrb[0].mxu0
        %2466 = vmatprep.mubr.f32.mxu0 0.0
        %2467 = vmatmul.mubr.f32.gmra.mrb[0].mxu0 %v1871
        %v2468 = vpop.f32.mrb[0].mxu0
        %v2469 = vadd.f32 %v1646, %v2468
        %v2470 = vpop.f32.mrb[0].mxu0
        %2471 = vmatprep.mubr.f32.mxu0 0.0
        %2472 = vmatmul.mubr.f32.gmra.mrb[0].mxu0 %v1874
        %v2473 = vpop.f32.mrb[0].mxu0
        %v2474 = vadd.f32 %v1646, %v2473
        %v2475 = vpop.f32.mrb[0].mxu0
        %2476 = vmatprep.mubr.f32.mxu0 0.0
        %2477 = vmatmul.mubr.f32.gmra.mrb[0].mxu0 %v1877
        %v2478 = vpop.f32.mrb[0].mxu0
        %v2479 = vadd.f32 %v1646, %v2478
        %v2480 = vpop.f32.mrb[0].mxu0
        %2481 = vmatprep.mubr.f32.mxu0 0.0
        %2482 = vmatmul.mubr.f32.gmra.mrb[0].mxu0 %v1880
        %v2483 = vpop.f32.mrb[0].mxu0
        %v2484 = vadd.f32 %v1646, %v2483
        %v2485 = vpop.f32.mrb[0].mxu0
        %2486 = vmatprep.mubr.f32.mxu0 0.0
        %2487 = vmatmul.mubr.f32.gmra.mrb[0].mxu0 %v1883
        %v2488 = vpop.f32.mrb[0].mxu0
        %v2489 = vadd.f32 %v1646, %v2488
        %v2490 = vpop.f32.mrb[0].mxu0
        %2491 = vmatprep.mubr.f32.mxu0 0.0
        %2492 = vmatmul.mubr.f32.gmra.mrb[0].mxu0 %v1886
        %v2493 = vpop.f32.mrb[0].mxu0
        %v2494 = vadd.f32 %v1646, %v2493
        %v2495 = vpop.f32.mrb[0].mxu0
        %2496 = vmatprep.mubr.f32.mxu0 0.0
        %2497 = vmatmul.mubr.f32.gmra.mrb[0].mxu0 %v1889
        %v2498 = vpop.f32.mrb[0].mxu0
        %v2499 = vadd.f32 %v1646, %v2498
        %v2500 = vpop.f32.mrb[0].mxu0
        %2501 = vmatprep.mubr.f32.mxu0 0.0
        %2502 = vmatmul.mubr.f32.gmra.mrb[0].mxu0 %v1892
        %v2503 = vpop.f32.mrb[0].mxu0
        %v2504 = vadd.f32 %v1646, %v2503
        %v2505 = vpop.f32.mrb[0].mxu0
        %2506 = vmatprep.mubr.f32.mxu0 0.0
        %2507 = vmatmul.mubr.f32.gmra.mrb[0].mxu0 %v1895
        %v2508 = vpop.f32.mrb[0].mxu0
        %v2509 = vadd.f32 %v1646, %v2508
        %v2510 = vpop.f32.mrb[0].mxu0
        %2511 = vmatprep.mubr.f32.mxu0 0.0
        %2512 = vmatmul.mubr.f32.gmra.mrb[0].mxu0 %v1898
        %v2513 = vpop.f32.mrb[0].mxu0
        %v2514 = vadd.f32 %v1646, %v2513
        %v2515 = vpop.f32.mrb[0].mxu0
        %2516 = vmatprep.mubr.f32.mxu0 0.0
        %2517 = vmatmul.mubr.f32.gmra.mrb[0].mxu0 %v1901
        %v2518 = vpop.f32.mrb[0].mxu0
        %v2519 = vadd.f32 %v1646, %v2518
        %v2520 = vpop.f32.mrb[0].mxu0
        %2521 = vmatprep.mubr.f32.mxu0 0.0
        %2522 = vmatmul.mubr.f32.gmra.mrb[0].mxu0 %v1904
        %v2523 = vpop.f32.mrb[0].mxu0
        %v2524 = vadd.f32 %v1646, %v2523
        %v2525 = vpop.f32.mrb[0].mxu0
        %2526 = vmatprep.mubr.f32.mxu0 0.0
        %2527 = vmatmul.mubr.f32.gmra.mrb[0].mxu0 %v1907
        %v2528 = vpop.f32.mrb[0].mxu0
        %v2529 = vadd.f32 %v1646, %v2528
        %v2530 = vpop.f32.mrb[0].mxu0
        %2531 = vmatprep.mubr.f32.mxu0 0.0
        %2532 = vmatmul.mubr.f32.gmra.mrb[0].mxu0 %v1910
        %v2533 = vpop.f32.mrb[0].mxu0
        %v2534 = vadd.f32 %v1646, %v2533
        %v2535 = vpop.f32.mrb[0].mxu0
        %2536 = vmatprep.mubr.f32.mxu0 0.0
        %2537 = vmatmul.mubr.f32.gmra.mrb[0].mxu0 %v1913
        %v2538 = vpop.f32.mrb[0].mxu0
        %v2539 = vadd.f32 %v1646, %v2538
        %v2540 = vpop.f32.mrb[0].mxu0
        %2541 = vmatprep.mubr.f32.mxu0 0.0
        %2542 = vmatmul.mubr.f32.gmra.mrb[0].mxu0 %v1916
        %v2543 = vpop.f32.mrb[0].mxu0
        %v2544 = vadd.f32 %v1646, %v2543
        %v2545 = vpop.f32.mrb[0].mxu0
        %2546 = vmatprep.mubr.f32.mxu0 0.0
        %2547 = vmatmul.mubr.f32.gmra.mrb[0].mxu0 %v1919
        %v2548 = vpop.f32.mrb[0].mxu0
        %v2549 = vadd.f32 %v1646, %v2548
        %v2550 = vpop.f32.mrb[0].mxu0
        %2551 = vmatprep.mubr.f32.mxu0 0.0
        %2552 = vmatmul.mubr.f32.gmra.mrb[0].mxu0 %v1922
        %v2553 = vpop.f32.mrb[0].mxu0
        %v2554 = vadd.f32 %v1646, %v2553
        %v2555 = vpop.f32.mrb[0].mxu0
        %2556 = vmatprep.mubr.f32.mxu0 0.0
        %2557 = vmatmul.mubr.f32.gmra.mrb[0].mxu0 %v1925
        %v2558 = vpop.f32.mrb[0].mxu0
        %v2559 = vadd.f32 %v1646, %v2558
        %v2560 = vpop.f32.mrb[0].mxu0
        %2561 = vmatprep.mubr.f32.mxu0 0.0
        %2562 = vmatmul.mubr.f32.gmra.mrb[0].mxu0 %v1928
        %v2563 = vpop.f32.mrb[0].mxu0
        %v2564 = vadd.f32 %v1646, %v2563
        %v2565 = vpop.f32.mrb[0].mxu0
        %2566 = vmatprep.mubr.f32.mxu0 0.0
        %2567 = vmatmul.mubr.f32.gmra.mrb[0].mxu0 %v1931
        %v2568 = vpop.f32.mrb[0].mxu0
        %v2569 = vadd.f32 %v1646, %v2568
        %v2570 = vpop.f32.mrb[0].mxu0
        %2571 = vmatprep.mubr.f32.mxu0 0.0
        %2572 = vmatmul.mubr.f32.gmra.mrb[0].mxu0 %v1934
        %v2573 = vpop.f32.mrb[0].mxu0
        %v2574 = vadd.f32 %v1646, %v2573
        %v2575 = vpop.f32.mrb[0].mxu0
        %2576 = vmatprep.mubr.f32.mxu0 0.0
        %2577 = vmatmul.mubr.f32.gmra.mrb[0].mxu0 %v1937
        %v2578 = vpop.f32.mrb[0].mxu0
        %v2579 = vadd.f32 %v1646, %v2578
        %v2580 = vpop.f32.mrb[0].mxu0
        %2581 = vmatprep.mubr.f32.mxu0 0.0
        %2582 = vmatmul.mubr.f32.gmra.mrb[0].mxu0 %v1940
        %v2583 = vpop.f32.mrb[0].mxu0
        %v2584 = vadd.f32 %v1646, %v2583
        %v2585 = vpop.f32.mrb[0].mxu0
        %2586 = vmatprep.mubr.f32.mxu0 0.0
        %2587 = vmatmul.mubr.f32.gmra.mrb[0].mxu0 %v1943
        %v2588 = vpop.f32.mrb[0].mxu0
        %v2589 = vadd.f32 %v1646, %v2588
        %v2590 = vpop.f32.mrb[0].mxu0
        %2591 = vmatprep.mubr.f32.mxu0 0.0
        %2592 = vmatmul.mubr.f32.gmra.mrb[0].mxu0 %v1946
        %v2593 = vpop.f32.mrb[0].mxu0
        %v2594 = vadd.f32 %v1646, %v2593
        %v2595 = vpop.f32.mrb[0].mxu0
        %2596 = vmatprep.mubr.f32.mxu0 0.0
        %2597 = vmatmul.mubr.f32.gmra.mrb[0].mxu0 %v1949
        %v2598 = vpop.f32.mrb[0].mxu0
        %v2599 = vadd.f32 %v1646, %v2598
        %v2600 = vpop.f32.mrb[0].mxu0
        %2601 = vmatprep.mubr.f32.mxu0 0.0
        %2602 = vmatmul.mubr.f32.gmra.mrb[0].mxu0 %v1952
        %v2603 = vpop.f32.mrb[0].mxu0
        %v2604 = vadd.f32 %v1646, %v2603
        %v2605 = vpop.f32.mrb[0].mxu0
        %2606 = vmatprep.mubr.f32.mxu0 0.0
        %2607 = vmatmul.mubr.f32.gmra.mrb[0].mxu0 %v1955
        %v2608 = vpop.f32.mrb[0].mxu0
        %v2609 = vadd.f32 %v1646, %v2608
        %v2610 = vpop.f32.mrb[0].mxu0
        %2611 = vmatprep.mubr.f32.mxu0 0.0
        %2612 = vmatmul.mubr.f32.gmra.mrb[0].mxu0 %v1958
        %v2613 = vpop.f32.mrb[0].mxu0
        %v2614 = vadd.f32 %v1646, %v2613
        %v2615 = vpop.f32.mrb[0].mxu0
        %2616 = vmatprep.mubr.f32.mxu0 0.0
        %2617 = vmatmul.mubr.f32.gmra.mrb[0].mxu0 %v1961
        %v2618 = vpop.f32.mrb[0].mxu0
        %v2619 = vadd.f32 %v1646, %v2618
        %v2620 = vpop.f32.mrb[0].mxu0
        %2621 = vmatprep.mubr.f32.mxu0 0.0
        %2622 = vmatmul.mubr.f32.gmra.mrb[0].mxu0 %v1964
        %v2623 = vpop.f32.mrb[0].mxu0
        %v2624 = vadd.f32 %v1646, %v2623
        %v2625 = vpop.f32.mrb[0].mxu0
        %2626 = vmatprep.mubr.f32.mxu0 0.0
        %2627 = vmatmul.mubr.f32.gmra.mrb[0].mxu0 %v1967
        %v2628 = vpop.f32.mrb[0].mxu0
        %v2629 = vadd.f32 %v1646, %v2628
        %v2630 = vpop.f32.mrb[0].mxu0
        %2631 = vmatprep.mubr.f32.mxu0 0.0
        %2632 = vmatmul.mubr.f32.gmra.mrb[0].mxu0 %v1970
        %v2633 = vpop.f32.mrb[0].mxu0
        %v2634 = vadd.f32 %v1646, %v2633
        %v2635 = vpop.f32.mrb[0].mxu0
        %2636 = vmatprep.mubr.f32.mxu0 0.0
        %2637 = vmatmul.mubr.f32.gmra.mrb[0].mxu0 %v1973
        %v2638 = vpop.f32.mrb[0].mxu0
        %v2639 = vadd.f32 %v1646, %v2638
        %v2640 = vpop.f32.mrb[0].mxu0
        %2641 = vmatprep.mubr.f32.mxu0 0.0
        %2642 = vmatmul.mubr.f32.gmra.mrb[0].mxu0 %v1976
        %v2643 = vpop.f32.mrb[0].mxu0
        %v2644 = vadd.f32 %v1646, %v2643
        %v2645 = vpop.f32.mrb[0].mxu0
        %2646 = vmatprep.mubr.f32.mxu0 0.0
        %2647 = vmatmul.mubr.f32.gmra.mrb[0].mxu0 %v1979
        %v2648 = vpop.f32.mrb[0].mxu0
        %v2649 = vadd.f32 %v1646, %v2648
        %v2650 = vpop.f32.mrb[0].mxu0
        %2651 = vmatprep.mubr.f32.mxu0 0.0
        %2652 = vmatmul.mubr.f32.gmra.mrb[0].mxu0 %v1982
        %v2653 = vpop.f32.mrb[0].mxu0
        %v2654 = vadd.f32 %v1646, %v2653
        %v2655 = vpop.f32.mrb[0].mxu0
        %2656 = vmatprep.mubr.f32.mxu0 0.0
        %2657 = vmatmul.mubr.f32.gmra.mrb[0].mxu0 %v1985
        %v2658 = vpop.f32.mrb[0].mxu0
        %v2659 = vadd.f32 %v1646, %v2658
        %v2660 = vpop.f32.mrb[0].mxu0
        %2661 = vmatprep.mubr.f32.mxu0 0.0
        %2662 = vmatmul.mubr.f32.gmra.mrb[0].mxu0 %v1988
        %v2663 = vpop.f32.mrb[0].mxu0
        %v2664 = vadd.f32 %v1646, %v2663
        %v2665 = vpop.f32.mrb[0].mxu0
        %2666 = vmatprep.mubr.f32.mxu0 0.0
        %2667 = vmatmul.mubr.f32.gmra.mrb[0].mxu0 %v1991
        %v2668 = vpop.f32.mrb[0].mxu0
        %v2669 = vadd.f32 %v1646, %v2668
        %v2670 = vpop.f32.mrb[0].mxu0
        %2671 = vmatprep.mubr.f32.mxu0 0.0
        %2672 = vmatmul.mubr.f32.gmra.mrb[0].mxu0 %v1994
        %v2673 = vpop.f32.mrb[0].mxu0
        %v2674 = vadd.f32 %v1646, %v2673
        %v2675 = vpop.f32.mrb[0].mxu0
        %2676 = vmatprep.mubr.f32.mxu0 0.0
        %2677 = vmatmul.mubr.f32.gmra.mrb[0].mxu0 %v1997
        %v2678 = vpop.f32.mrb[0].mxu0
        %v2679 = vadd.f32 %v1646, %v2678
        %v2680 = vpop.f32.mrb[0].mxu0
        %2681 = vmatprep.mubr.f32.mxu0 0.0
        %2682 = vmatmul.mubr.f32.gmra.mrb[0].mxu0 %v2000
        %v2683 = vpop.f32.mrb[0].mxu0
        %v2684 = vadd.f32 %v1646, %v2683
        %v2685 = vpop.f32.mrb[0].mxu0
        %2686 = vmatprep.mubr.f32.mxu0 0.0
        %2687 = vmatmul.mubr.f32.gmra.mrb[0].mxu0 %v2003
        %v2688 = vpop.f32.mrb[0].mxu0
        %v2689 = vadd.f32 %v1646, %v2688
        %v2690 = vpop.f32.mrb[0].mxu0
        %2691 = vmatprep.mubr.f32.mxu0 0.0
        %2692 = vmatmul.mubr.f32.gmra.mrb[0].mxu0 %v2006
        %v2693 = vpop.f32.mrb[0].mxu0
        %v2694 = vadd.f32 %v1646, %v2693
        %v2695 = vpop.f32.mrb[0].mxu0
        %2696 = vmatprep.mubr.f32.mxu0 0.0
        %2697 = vmatmul.mubr.f32.gmra.mrb[0].mxu0 %v2009
        %v2698 = vpop.f32.mrb[0].mxu0
        %v2699 = vadd.f32 %v1646, %v2698
        %v2700 = vpop.f32.mrb[0].mxu0
        %2701 = vmatprep.mubr.f32.mxu0 0.0
        %2702 = vmatmul.mubr.f32.gmra.mrb[0].mxu0 %v2012
        %v2703 = vpop.f32.mrb[0].mxu0
        %v2704 = vadd.f32 %v1646, %v2703
        %v2705 = vpop.f32.mrb[0].mxu0
        %2706 = vmatprep.mubr.f32.mxu0 0.0
        %2707 = vmatmul.mubr.f32.gmra.mrb[0].mxu0 %v2015
        %v2708 = vpop.f32.mrb[0].mxu0
        %v2709 = vadd.f32 %v1646, %v2708
        %v2710 = vpop.f32.mrb[0].mxu0
        %2711 = vmatprep.mubr.f32.mxu0 0.0
        %2712 = vmatmul.mubr.f32.gmra.mrb[0].mxu0 %v2018
        %v2713 = vpop.f32.mrb[0].mxu0
        %v2714 = vadd.f32 %v1646, %v2713
        %v2715 = vpop.f32.mrb[0].mxu0
        %2716 = vmatprep.mubr.f32.mxu0 0.0
        %2717 = vmatmul.mubr.f32.gmra.mrb[0].mxu0 %v2021
        %v2718 = vpop.f32.mrb[0].mxu0
        %v2719 = vadd.f32 %v1646, %v2718
        %v2720 = vpop.f32.mrb[0].mxu0
        %2721 = vmatprep.mubr.f32.mxu0 0.0
        %2722 = vmatmul.mubr.f32.gmra.mrb[0].mxu0 %v2024
        %v2723 = vpop.f32.mrb[0].mxu0
        %v2724 = vadd.f32 %v1646, %v2723
        %v2725 = vpop.f32.mrb[0].mxu0
        %2726 = vmatprep.mubr.f32.mxu0 0.0
        %2727 = vmatmul.mubr.f32.gmra.mrb[0].mxu0 %v2027
        %v2728 = vpop.f32.mrb[0].mxu0
        %v2729 = vadd.f32 %v1646, %v2728
        %v2730 = vpop.f32.mrb[0].mxu0
        %2731 = vmatprep.mubr.f32.mxu0 0.0
        %2732 = vmatmul.mubr.f32.gmra.mrb[0].mxu0 %v2030
        %v2733 = vpop.f32.mrb[0].mxu0
        %v2734 = vadd.f32 %v1646, %v2733
        %v2735 = vpop.f32.mrb[0].mxu0
        %2736 = vdwg.mxu0
        %v2737 = vtanh.pop %v2099
        %v2738 = vtanh.pop %v2104
        %v2739 = vtanh.pop %v2109
        %v2740 = vtanh.pop %v2114
        %v2741 = vtanh.pop %v2119
        %v2742 = vtanh.pop %v2124
        %v2743 = vtanh.pop %v2129
        %v2744 = vtanh.pop %v2134
        %v2745 = vtanh.pop %v2139
        %v2746 = vtanh.pop %v2144
        %v2747 = vtanh.pop %v2149
        %v2748 = vtanh.pop %v2154
        %v2749 = vtanh.pop %v2159
        %v2750 = vtanh.pop %v2164
        %v2751 = vtanh.pop %v2169
        %v2752 = vtanh.pop %v2174
        %v2753 = vtanh.pop %v2179
        %v2754 = vtanh.pop %v2184
        %v2755 = vtanh.pop %v2189
        %v2756 = vtanh.pop %v2194
        %v2757 = vtanh.pop %v2199
        %v2758 = vtanh.pop %v2204
        %v2759 = vtanh.pop %v2209
        %v2760 = vtanh.pop %v2214
        %v2761 = vtanh.pop %v2219
        %v2762 = vtanh.pop %v2224
        %v2763 = vtanh.pop %v2229
        %v2764 = vtanh.pop %v2234
        %v2765 = vtanh.pop %v2239
        %v2766 = vtanh.pop %v2244
        %v2767 = vtanh.pop %v2249
        %v2768 = vtanh.pop %v2254
        %v2769 = vtanh.pop %v2259
        %v2770 = vtanh.pop %v2264
        %v2771 = vtanh.pop %v2269
        %v2772 = vtanh.pop %v2274
        %v2773 = vtanh.pop %v2279
        %v2774 = vtanh.pop %v2284
        %v2775 = vtanh.pop %v2289
        %v2776 = vtanh.pop %v2294
        %v2777 = vtanh.pop %v2299
        %v2778 = vtanh.pop %v2304
        %v2779 = vtanh.pop %v2309
        %v2780 = vtanh.pop %v2314
        %v2781 = vtanh.pop %v2319
        %v2782 = vtanh.pop %v2324
        %v2783 = vtanh.pop %v2329
        %v2784 = vtanh.pop %v2334
        %v2785 = vtanh.pop %v2339
        %v2786 = vtanh.pop %v2344
        %v2787 = vtanh.pop %v2349
        %v2788 = vtanh.pop %v2354
        %v2789 = vtanh.pop %v2359
        %v2790 = vtanh.pop %v2364
        %v2791 = vtanh.pop %v2369
        %v2792 = vtanh.pop %v2374
        %v2793 = vtanh.pop %v2379
        %v2794 = vtanh.pop %v2384
        %v2795 = vtanh.pop %v2389
        %v2796 = vtanh.pop %v2394
        %v2797 = vtanh.pop %v2399
        %v2798 = vtanh.pop %v2404
        %v2799 = vtanh.pop %v2409
        %v2800 = vtanh.pop %v2414
        %v2801 = vtanh.pop %v2419
        %v2802 = vtanh.pop %v2424
        %v2803 = vtanh.pop %v2429
        %v2804 = vtanh.pop %v2434
        %v2805 = vtanh.pop %v2439
        %v2806 = vtanh.pop %v2444
        %v2807 = vtanh.pop %v2449
        %v2808 = vtanh.pop %v2454
        %v2809 = vtanh.pop %v2459
        %v2810 = vtanh.pop %v2464
        %v2811 = vtanh.pop %v2469
        %v2812 = vtanh.pop %v2474
        %v2813 = vtanh.pop %v2479
        %v2814 = vtanh.pop %v2484
        %v2815 = vtanh.pop %v2489
        %v2816 = vtanh.pop %v2494
        %v2817 = vtanh.pop %v2499
        %v2818 = vtanh.pop %v2504
        %v2819 = vtanh.pop %v2509
        %v2820 = vtanh.pop %v2514
        %v2821 = vtanh.pop %v2519
        %v2822 = vtanh.pop %v2524
        %v2823 = vtanh.pop %v2529
        %v2824 = vtanh.pop %v2534
        %v2825 = vtanh.pop %v2539
        %v2826 = vtanh.pop %v2544
        %v2827 = vtanh.pop %v2549
        %v2828 = vtanh.pop %v2554
        %v2829 = vtanh.pop %v2559
        %v2830 = vtanh.pop %v2564
        %v2831 = vtanh.pop %v2569
        %v2832 = vtanh.pop %v2574
        %v2833 = vtanh.pop %v2579
        %v2834 = vtanh.pop %v2584
        %v2835 = vtanh.pop %v2589
        %v2836 = vtanh.pop %v2594
        %v2837 = vtanh.pop %v2599
        %v2838 = vtanh.pop %v2604
        %v2839 = vtanh.pop %v2609
        %v2840 = vtanh.pop %v2614
        %v2841 = vtanh.pop %v2619
        %v2842 = vtanh.pop %v2624
        %v2843 = vtanh.pop %v2629
        %v2844 = vtanh.pop %v2634
        %v2845 = vtanh.pop %v2639
        %v2846 = vtanh.pop %v2644
        %v2847 = vtanh.pop %v2649
        %v2848 = vtanh.pop %v2654
        %v2849 = vtanh.pop %v2659
        %v2850 = vtanh.pop %v2664
        %v2851 = vtanh.pop %v2669
        %v2852 = vtanh.pop %v2674
        %v2853 = vtanh.pop %v2679
        %v2854 = vtanh.pop %v2684
        %v2855 = vtanh.pop %v2689
        %v2856 = vtanh.pop %v2694
        %v2857 = vtanh.pop %v2699
        %v2858 = vtanh.pop %v2704
        %v2859 = vtanh.pop %v2709
        %v2860 = vtanh.pop %v2714
        %v2861 = vtanh.pop %v2719
        %v2862 = vtanh.pop %v2724
        %v2863 = vtanh.pop %v2729
        %v2864 = vtanh.pop %v2734
        %v2865 = vld [vmem:[%s5] sm:$0xff]
        %v2866 = vld [vmem:[%s5 + $0x8] sm:$0xff]
        %v2867 = vld [vmem:[%s5 + $0x10] sm:$0xff]
        %v2868 = vld [vmem:[%s5 + $0x18] sm:$0xff]
        %v2869 = vld [vmem:[%s6] sm:$0x1]
        %v2871 = vlaneseq
        %v2872 = vshrl.u32 %v2871, 7
        %v2873 = vsub.s32 0, %v2872
        %v2874 = vrot.slane %v2869, %v2873
        %v2877 = vsel %vm419, %v2737, 0
        %v2880 = vsel %vm419, %v2738, 0
        %v2883 = vsel %vm419, %v2739, 0
        %v2886 = vsel %vm419, %v2740, 0
        %v2889 = vsel %vm419, %v2741, 0
        %v2892 = vsel %vm419, %v2742, 0
        %v2895 = vsel %vm419, %v2743, 0
        %v2898 = vsel %vm419, %v2744, 0
        %v2901 = vsel %vm419, %v2745, 0
        %v2904 = vsel %vm419, %v2746, 0
        %v2907 = vsel %vm419, %v2747, 0
        %v2910 = vsel %vm419, %v2748, 0
        %v2913 = vsel %vm419, %v2749, 0
        %v2916 = vsel %vm419, %v2750, 0
        %v2919 = vsel %vm419, %v2751, 0
        %v2922 = vsel %vm419, %v2752, 0
        %v2925 = vsel %vm419, %v2753, 0
        %v2928 = vsel %vm419, %v2754, 0
        %v2931 = vsel %vm419, %v2755, 0
        %v2934 = vsel %vm419, %v2756, 0
        %v2937 = vsel %vm419, %v2757, 0
        %v2940 = vsel %vm419, %v2758, 0
        %v2943 = vsel %vm419, %v2759, 0
        %v2946 = vsel %vm419, %v2760, 0
        %v2949 = vsel %vm419, %v2761, 0
        %v2952 = vsel %vm419, %v2762, 0
        %v2955 = vsel %vm419, %v2763, 0
        %v2958 = vsel %vm419, %v2764, 0
        %v2961 = vsel %vm419, %v2765, 0
        %v2964 = vsel %vm419, %v2766, 0
        %v2967 = vsel %vm419, %v2767, 0
        %v2970 = vsel %vm419, %v2768, 0
        %v2973 = vsel %vm419, %v2769, 0
        %v2976 = vsel %vm419, %v2770, 0
        %v2979 = vsel %vm419, %v2771, 0
        %v2982 = vsel %vm419, %v2772, 0
        %v2985 = vsel %vm419, %v2773, 0
        %v2988 = vsel %vm419, %v2774, 0
        %v2991 = vsel %vm419, %v2775, 0
        %v2994 = vsel %vm419, %v2776, 0
        %v2997 = vsel %vm419, %v2777, 0
        %v3000 = vsel %vm419, %v2778, 0
        %v3003 = vsel %vm419, %v2779, 0
        %v3006 = vsel %vm419, %v2780, 0
        %v3009 = vsel %vm419, %v2781, 0
        %v3012 = vsel %vm419, %v2782, 0
        %v3015 = vsel %vm419, %v2783, 0
        %v3018 = vsel %vm419, %v2784, 0
        %v3021 = vsel %vm419, %v2785, 0
        %v3024 = vsel %vm419, %v2786, 0
        %v3027 = vsel %vm419, %v2787, 0
        %v3030 = vsel %vm419, %v2788, 0
        %v3033 = vsel %vm419, %v2789, 0
        %v3036 = vsel %vm419, %v2790, 0
        %v3039 = vsel %vm419, %v2791, 0
        %v3042 = vsel %vm419, %v2792, 0
        %v3045 = vsel %vm419, %v2793, 0
        %v3048 = vsel %vm419, %v2794, 0
        %v3051 = vsel %vm419, %v2795, 0
        %v3054 = vsel %vm419, %v2796, 0
        %v3057 = vsel %vm419, %v2797, 0
        %v3060 = vsel %vm419, %v2798, 0
        %v3063 = vsel %vm419, %v2799, 0
        %v3066 = vsel %vm419, %v2800, 0
        %v3069 = vsel %vm419, %v2801, 0
        %v3072 = vsel %vm419, %v2802, 0
        %v3075 = vsel %vm419, %v2803, 0
        %v3078 = vsel %vm419, %v2804, 0
        %v3081 = vsel %vm419, %v2805, 0
        %v3084 = vsel %vm419, %v2806, 0
        %v3087 = vsel %vm419, %v2807, 0
        %v3090 = vsel %vm419, %v2808, 0
        %v3093 = vsel %vm419, %v2809, 0
        %v3096 = vsel %vm419, %v2810, 0
        %v3099 = vsel %vm419, %v2811, 0
        %v3102 = vsel %vm419, %v2812, 0
        %v3105 = vsel %vm419, %v2813, 0
        %v3108 = vsel %vm419, %v2814, 0
        %v3111 = vsel %vm419, %v2815, 0
        %v3114 = vsel %vm419, %v2816, 0
        %v3117 = vsel %vm419, %v2817, 0
        %v3120 = vsel %vm419, %v2818, 0
        %v3123 = vsel %vm419, %v2819, 0
        %v3126 = vsel %vm419, %v2820, 0
        %v3129 = vsel %vm419, %v2821, 0
        %v3132 = vsel %vm419, %v2822, 0
        %v3135 = vsel %vm419, %v2823, 0
        %v3138 = vsel %vm419, %v2824, 0
        %v3141 = vsel %vm419, %v2825, 0
        %v3144 = vsel %vm419, %v2826, 0
        %v3147 = vsel %vm419, %v2827, 0
        %v3150 = vsel %vm419, %v2828, 0
        %v3153 = vsel %vm419, %v2829, 0
        %v3156 = vsel %vm419, %v2830, 0
        %v3159 = vsel %vm419, %v2831, 0
        %v3162 = vsel %vm419, %v2832, 0
        %v3165 = vsel %vm419, %v2833, 0
        %v3168 = vsel %vm419, %v2834, 0
        %v3171 = vsel %vm419, %v2835, 0
        %v3174 = vsel %vm419, %v2836, 0
        %v3177 = vsel %vm419, %v2837, 0
        %v3180 = vsel %vm419, %v2838, 0
        %v3183 = vsel %vm419, %v2839, 0
        %v3186 = vsel %vm419, %v2840, 0
        %v3189 = vsel %vm419, %v2841, 0
        %v3192 = vsel %vm419, %v2842, 0
        %v3195 = vsel %vm419, %v2843, 0
        %v3198 = vsel %vm419, %v2844, 0
        %v3201 = vsel %vm419, %v2845, 0
        %v3204 = vsel %vm419, %v2846, 0
        %v3207 = vsel %vm419, %v2847, 0
        %v3210 = vsel %vm419, %v2848, 0
        %v3213 = vsel %vm419, %v2849, 0
        %v3216 = vsel %vm419, %v2850, 0
        %v3219 = vsel %vm419, %v2851, 0
        %v3222 = vsel %vm419, %v2852, 0
        %v3225 = vsel %vm419, %v2853, 0
        %v3228 = vsel %vm419, %v2854, 0
        %v3231 = vsel %vm419, %v2855, 0
        %v3234 = vsel %vm419, %v2856, 0
        %v3237 = vsel %vm419, %v2857, 0
        %v3240 = vsel %vm419, %v2858, 0
        %v3243 = vsel %vm419, %v2859, 0
        %v3246 = vsel %vm419, %v2860, 0
        %v3249 = vsel %vm419, %v2861, 0
        %v3252 = vsel %vm419, %v2862, 0
        %v3255 = vsel %vm419, %v2863, 0
        %v3258 = vsel %vm419, %v2864, 0
        %3260 = vmatprep.subr.mxu0 0.0
        %3261 = vmatpush1.msra.mxu0 %v2865
        %3262 = vmatprep.subr.mxu0 0.0
        %3263 = vmatpush1.msra.mxu0 %v2866
        %3264 = vmatprep.subr.mxu0 0.0
        %3265 = vmatpush1.msra.mxu0 %v2867
        %3266 = vmatprep.subr.mxu0 0.0
        %3267 = vmatpush1.msra.mxu0 %v2868
        %3268 = vmatprep.subr.mxu0 0.0
        %3269 = vmatpush1.msra.mxu0 0.0
        %3270 = vmatprep.subr.mxu0 0.0
        %3271 = vmatpush1.msra.mxu0 0.0
        %3272 = vmatprep.subr.mxu0 0.0
        %3273 = vmatpush1.msra.mxu0 0.0
        %3274 = vmatprep.subr.mxu0 0.0
        %3275 = vmatpush1.msra.mxu0 0.0
        %3276 = vmatprep.subr.mxu0 0.0
        %3277 = vmatpush1.msra.mxu0 0.0
        %3278 = vmatprep.subr.mxu0 0.0
        %3279 = vmatpush1.msra.mxu0 0.0
        %3280 = vmatprep.subr.mxu0 0.0
        %3281 = vmatpush1.msra.mxu0 0.0
        %3282 = vmatprep.subr.mxu0 0.0
        %3283 = vmatpush1.msra.mxu0 0.0
        %3284 = vmatprep.subr.mxu0 0.0
        %3285 = vmatpush1.msra.mxu0 0.0
        %3286 = vmatprep.subr.mxu0 0.0
        %3287 = vmatpush1.msra.mxu0 0.0
        %3288 = vmatprep.subr.mxu0 0.0
        %3289 = vmatpush1.msra.mxu0 0.0
        %3290 = vmatprep.subr.mxu0 0.0
        %3291 = vmatpush1.msra.mxu0 0.0
        %3292 = vmatprep.subr.mxu0 0.0
        %3293 = vmatpush1.msra.mxu0 0.0
        %3294 = vmatprep.subr.mxu0 0.0
        %3295 = vmatpush1.msra.mxu0 0.0
        %3296 = vmatprep.subr.mxu0 0.0
        %3297 = vmatpush1.msra.mxu0 0.0
        %3298 = vmatprep.subr.mxu0 0.0
        %3299 = vmatpush1.msra.mxu0 0.0
        %3300 = vmatprep.subr.mxu0 0.0
        %3301 = vmatpush1.msra.mxu0 0.0
        %3302 = vmatprep.subr.mxu0 0.0
        %3303 = vmatpush1.msra.mxu0 0.0
        %3304 = vmatprep.subr.mxu0 0.0
        %3305 = vmatpush1.msra.mxu0 0.0
        %3306 = vmatprep.subr.mxu0 0.0
        %3307 = vmatpush1.msra.mxu0 0.0
        %3308 = vmatprep.subr.mxu0 0.0
        %3309 = vmatpush1.msra.mxu0 0.0
        %3310 = vmatprep.subr.mxu0 0.0
        %3311 = vmatpush1.msra.mxu0 0.0
        %3312 = vmatprep.subr.mxu0 0.0
        %3313 = vmatpush1.msra.mxu0 0.0
        %3314 = vmatprep.subr.mxu0 0.0
        %3315 = vmatpush1.msra.mxu0 0.0
        %3316 = vmatprep.subr.mxu0 0.0
        %3317 = vmatpush1.msra.mxu0 0.0
        %3318 = vmatprep.subr.mxu0 0.0
        %3319 = vmatpush1.msra.mxu0 0.0
        %3320 = vmatprep.subr.mxu0 0.0
        %3321 = vmatpush1.msra.mxu0 0.0
        %3322 = vmatprep.subr.mxu0 0.0
        %3323 = vmatpush1.msra.mxu0 0.0
        %3324 = vmatprep.mubr.f32.mxu0 0.0
        %3325 = vmatmul.mubr.f32.gmra.mrb[0].mxu0 %v2877
        %v3326 = vpop.f32.mrb[0].mxu0
        %v3327 = vadd.f32 %v2874, %v3326
        %v3328 = vpop.f32.mrb[0].mxu0
        %3329 = vmatprep.mubr.f32.mxu0 0.0
        %3330 = vmatmul.mubr.f32.gmra.mrb[0].mxu0 %v2880
        %v3331 = vpop.f32.mrb[0].mxu0
        %v3332 = vadd.f32 %v2874, %v3331
        %v3333 = vpop.f32.mrb[0].mxu0
        %3334 = vmatprep.mubr.f32.mxu0 0.0
        %3335 = vmatmul.mubr.f32.gmra.mrb[0].mxu0 %v2883
        %v3336 = vpop.f32.mrb[0].mxu0
        %v3337 = vadd.f32 %v2874, %v3336
        %v3338 = vpop.f32.mrb[0].mxu0
        %3339 = vmatprep.mubr.f32.mxu0 0.0
        %3340 = vmatmul.mubr.f32.gmra.mrb[0].mxu0 %v2886
        %v3341 = vpop.f32.mrb[0].mxu0
        %v3342 = vadd.f32 %v2874, %v3341
        %v3343 = vpop.f32.mrb[0].mxu0
        %3344 = vmatprep.mubr.f32.mxu0 0.0
        %3345 = vmatmul.mubr.f32.gmra.mrb[0].mxu0 %v2889
        %v3346 = vpop.f32.mrb[0].mxu0
        %v3347 = vadd.f32 %v2874, %v3346
        %v3348 = vpop.f32.mrb[0].mxu0
        %3349 = vmatprep.mubr.f32.mxu0 0.0
        %3350 = vmatmul.mubr.f32.gmra.mrb[0].mxu0 %v2892
        %v3351 = vpop.f32.mrb[0].mxu0
        %v3352 = vadd.f32 %v2874, %v3351
        %v3353 = vpop.f32.mrb[0].mxu0
        %3354 = vmatprep.mubr.f32.mxu0 0.0
        %3355 = vmatmul.mubr.f32.gmra.mrb[0].mxu0 %v2895
        %v3356 = vpop.f32.mrb[0].mxu0
        %v3357 = vadd.f32 %v2874, %v3356
        %v3358 = vpop.f32.mrb[0].mxu0
        %3359 = vmatprep.mubr.f32.mxu0 0.0
        %3360 = vmatmul.mubr.f32.gmra.mrb[0].mxu0 %v2898
        %v3361 = vpop.f32.mrb[0].mxu0
        %v3362 = vadd.f32 %v2874, %v3361
        %v3363 = vpop.f32.mrb[0].mxu0
        %3364 = vmatprep.mubr.f32.mxu0 0.0
        %3365 = vmatmul.mubr.f32.gmra.mrb[0].mxu0 %v2901
        %v3366 = vpop.f32.mrb[0].mxu0
        %v3367 = vadd.f32 %v2874, %v3366
        %v3368 = vpop.f32.mrb[0].mxu0
        %3369 = vmatprep.mubr.f32.mxu0 0.0
        %3370 = vmatmul.mubr.f32.gmra.mrb[0].mxu0 %v2904
        %v3371 = vpop.f32.mrb[0].mxu0
        %v3372 = vadd.f32 %v2874, %v3371
        %v3373 = vpop.f32.mrb[0].mxu0
        %3374 = vmatprep.mubr.f32.mxu0 0.0
        %3375 = vmatmul.mubr.f32.gmra.mrb[0].mxu0 %v2907
        %v3376 = vpop.f32.mrb[0].mxu0
        %v3377 = vadd.f32 %v2874, %v3376
        %v3378 = vpop.f32.mrb[0].mxu0
        %3379 = vmatprep.mubr.f32.mxu0 0.0
        %3380 = vmatmul.mubr.f32.gmra.mrb[0].mxu0 %v2910
        %v3381 = vpop.f32.mrb[0].mxu0
        %v3382 = vadd.f32 %v2874, %v3381
        %v3383 = vpop.f32.mrb[0].mxu0
        %3384 = vmatprep.mubr.f32.mxu0 0.0
        %3385 = vmatmul.mubr.f32.gmra.mrb[0].mxu0 %v2913
        %v3386 = vpop.f32.mrb[0].mxu0
        %v3387 = vadd.f32 %v2874, %v3386
        %v3388 = vpop.f32.mrb[0].mxu0
        %3389 = vmatprep.mubr.f32.mxu0 0.0
        %3390 = vmatmul.mubr.f32.gmra.mrb[0].mxu0 %v2916
        %v3391 = vpop.f32.mrb[0].mxu0
        %v3392 = vadd.f32 %v2874, %v3391
        %v3393 = vpop.f32.mrb[0].mxu0
        %3394 = vmatprep.mubr.f32.mxu0 0.0
        %3395 = vmatmul.mubr.f32.gmra.mrb[0].mxu0 %v2919
        %v3396 = vpop.f32.mrb[0].mxu0
        %v3397 = vadd.f32 %v2874, %v3396
        %v3398 = vpop.f32.mrb[0].mxu0
        %3399 = vmatprep.mubr.f32.mxu0 0.0
        %3400 = vmatmul.mubr.f32.gmra.mrb[0].mxu0 %v2922
        %v3401 = vpop.f32.mrb[0].mxu0
        %v3402 = vadd.f32 %v2874, %v3401
        %v3403 = vpop.f32.mrb[0].mxu0
        %3404 = vmatprep.mubr.f32.mxu0 0.0
        %3405 = vmatmul.mubr.f32.gmra.mrb[0].mxu0 %v2925
        %v3406 = vpop.f32.mrb[0].mxu0
        %v3407 = vadd.f32 %v2874, %v3406
        %v3408 = vpop.f32.mrb[0].mxu0
        %3409 = vmatprep.mubr.f32.mxu0 0.0
        %3410 = vmatmul.mubr.f32.gmra.mrb[0].mxu0 %v2928
        %v3411 = vpop.f32.mrb[0].mxu0
        %v3412 = vadd.f32 %v2874, %v3411
        %v3413 = vpop.f32.mrb[0].mxu0
        %3414 = vmatprep.mubr.f32.mxu0 0.0
        %3415 = vmatmul.mubr.f32.gmra.mrb[0].mxu0 %v2931
        %v3416 = vpop.f32.mrb[0].mxu0
        %v3417 = vadd.f32 %v2874, %v3416
        %v3418 = vpop.f32.mrb[0].mxu0
        %3419 = vmatprep.mubr.f32.mxu0 0.0
        %3420 = vmatmul.mubr.f32.gmra.mrb[0].mxu0 %v2934
        %v3421 = vpop.f32.mrb[0].mxu0
        %v3422 = vadd.f32 %v2874, %v3421
        %v3423 = vpop.f32.mrb[0].mxu0
        %3424 = vmatprep.mubr.f32.mxu0 0.0
        %3425 = vmatmul.mubr.f32.gmra.mrb[0].mxu0 %v2937
        %v3426 = vpop.f32.mrb[0].mxu0
        %v3427 = vadd.f32 %v2874, %v3426
        %v3428 = vpop.f32.mrb[0].mxu0
        %3429 = vmatprep.mubr.f32.mxu0 0.0
        %3430 = vmatmul.mubr.f32.gmra.mrb[0].mxu0 %v2940
        %v3431 = vpop.f32.mrb[0].mxu0
        %v3432 = vadd.f32 %v2874, %v3431
        %v3433 = vpop.f32.mrb[0].mxu0
        %3434 = vmatprep.mubr.f32.mxu0 0.0
        %3435 = vmatmul.mubr.f32.gmra.mrb[0].mxu0 %v2943
        %v3436 = vpop.f32.mrb[0].mxu0
        %v3437 = vadd.f32 %v2874, %v3436
        %v3438 = vpop.f32.mrb[0].mxu0
        %3439 = vmatprep.mubr.f32.mxu0 0.0
        %3440 = vmatmul.mubr.f32.gmra.mrb[0].mxu0 %v2946
        %v3441 = vpop.f32.mrb[0].mxu0
        %v3442 = vadd.f32 %v2874, %v3441
        %v3443 = vpop.f32.mrb[0].mxu0
        %3444 = vmatprep.mubr.f32.mxu0 0.0
        %3445 = vmatmul.mubr.f32.gmra.mrb[0].mxu0 %v2949
        %v3446 = vpop.f32.mrb[0].mxu0
        %v3447 = vadd.f32 %v2874, %v3446
        %v3448 = vpop.f32.mrb[0].mxu0
        %3449 = vmatprep.mubr.f32.mxu0 0.0
        %3450 = vmatmul.mubr.f32.gmra.mrb[0].mxu0 %v2952
        %v3451 = vpop.f32.mrb[0].mxu0
        %v3452 = vadd.f32 %v2874, %v3451
        %v3453 = vpop.f32.mrb[0].mxu0
        %3454 = vmatprep.mubr.f32.mxu0 0.0
        %3455 = vmatmul.mubr.f32.gmra.mrb[0].mxu0 %v2955
        %v3456 = vpop.f32.mrb[0].mxu0
        %v3457 = vadd.f32 %v2874, %v3456
        %v3458 = vpop.f32.mrb[0].mxu0
        %3459 = vmatprep.mubr.f32.mxu0 0.0
        %3460 = vmatmul.mubr.f32.gmra.mrb[0].mxu0 %v2958
        %v3461 = vpop.f32.mrb[0].mxu0
        %v3462 = vadd.f32 %v2874, %v3461
        %v3463 = vpop.f32.mrb[0].mxu0
        %3464 = vmatprep.mubr.f32.mxu0 0.0
        %3465 = vmatmul.mubr.f32.gmra.mrb[0].mxu0 %v2961
        %v3466 = vpop.f32.mrb[0].mxu0
        %v3467 = vadd.f32 %v2874, %v3466
        %v3468 = vpop.f32.mrb[0].mxu0
        %3469 = vmatprep.mubr.f32.mxu0 0.0
        %3470 = vmatmul.mubr.f32.gmra.mrb[0].mxu0 %v2964
        %v3471 = vpop.f32.mrb[0].mxu0
        %v3472 = vadd.f32 %v2874, %v3471
        %v3473 = vpop.f32.mrb[0].mxu0
        %3474 = vmatprep.mubr.f32.mxu0 0.0
        %3475 = vmatmul.mubr.f32.gmra.mrb[0].mxu0 %v2967
        %v3476 = vpop.f32.mrb[0].mxu0
        %v3477 = vadd.f32 %v2874, %v3476
        %v3478 = vpop.f32.mrb[0].mxu0
        %3479 = vmatprep.mubr.f32.mxu0 0.0
        %3480 = vmatmul.mubr.f32.gmra.mrb[0].mxu0 %v2970
        %v3481 = vpop.f32.mrb[0].mxu0
        %v3482 = vadd.f32 %v2874, %v3481
        %v3483 = vpop.f32.mrb[0].mxu0
        %3484 = vmatprep.mubr.f32.mxu0 0.0
        %3485 = vmatmul.mubr.f32.gmra.mrb[0].mxu0 %v2973
        %v3486 = vpop.f32.mrb[0].mxu0
        %v3487 = vadd.f32 %v2874, %v3486
        %v3488 = vpop.f32.mrb[0].mxu0
        %3489 = vmatprep.mubr.f32.mxu0 0.0
        %3490 = vmatmul.mubr.f32.gmra.mrb[0].mxu0 %v2976
        %v3491 = vpop.f32.mrb[0].mxu0
        %v3492 = vadd.f32 %v2874, %v3491
        %v3493 = vpop.f32.mrb[0].mxu0
        %3494 = vmatprep.mubr.f32.mxu0 0.0
        %3495 = vmatmul.mubr.f32.gmra.mrb[0].mxu0 %v2979
        %v3496 = vpop.f32.mrb[0].mxu0
        %v3497 = vadd.f32 %v2874, %v3496
        %v3498 = vpop.f32.mrb[0].mxu0
        %3499 = vmatprep.mubr.f32.mxu0 0.0
        %3500 = vmatmul.mubr.f32.gmra.mrb[0].mxu0 %v2982
        %v3501 = vpop.f32.mrb[0].mxu0
        %v3502 = vadd.f32 %v2874, %v3501
        %v3503 = vpop.f32.mrb[0].mxu0
        %3504 = vmatprep.mubr.f32.mxu0 0.0
        %3505 = vmatmul.mubr.f32.gmra.mrb[0].mxu0 %v2985
        %v3506 = vpop.f32.mrb[0].mxu0
        %v3507 = vadd.f32 %v2874, %v3506
        %v3508 = vpop.f32.mrb[0].mxu0
        %3509 = vmatprep.mubr.f32.mxu0 0.0
        %3510 = vmatmul.mubr.f32.gmra.mrb[0].mxu0 %v2988
        %v3511 = vpop.f32.mrb[0].mxu0
        %v3512 = vadd.f32 %v2874, %v3511
        %v3513 = vpop.f32.mrb[0].mxu0
        %3514 = vmatprep.mubr.f32.mxu0 0.0
        %3515 = vmatmul.mubr.f32.gmra.mrb[0].mxu0 %v2991
        %v3516 = vpop.f32.mrb[0].mxu0
        %v3517 = vadd.f32 %v2874, %v3516
        %v3518 = vpop.f32.mrb[0].mxu0
        %3519 = vmatprep.mubr.f32.mxu0 0.0
        %3520 = vmatmul.mubr.f32.gmra.mrb[0].mxu0 %v2994
        %v3521 = vpop.f32.mrb[0].mxu0
        %v3522 = vadd.f32 %v2874, %v3521
        %v3523 = vpop.f32.mrb[0].mxu0
        %3524 = vmatprep.mubr.f32.mxu0 0.0
        %3525 = vmatmul.mubr.f32.gmra.mrb[0].mxu0 %v2997
        %v3526 = vpop.f32.mrb[0].mxu0
        %v3527 = vadd.f32 %v2874, %v3526
        %v3528 = vpop.f32.mrb[0].mxu0
        %3529 = vmatprep.mubr.f32.mxu0 0.0
        %3530 = vmatmul.mubr.f32.gmra.mrb[0].mxu0 %v3000
        %v3531 = vpop.f32.mrb[0].mxu0
        %v3532 = vadd.f32 %v2874, %v3531
        %v3533 = vpop.f32.mrb[0].mxu0
        %3534 = vmatprep.mubr.f32.mxu0 0.0
        %3535 = vmatmul.mubr.f32.gmra.mrb[0].mxu0 %v3003
        %v3536 = vpop.f32.mrb[0].mxu0
        %v3537 = vadd.f32 %v2874, %v3536
        %v3538 = vpop.f32.mrb[0].mxu0
        %3539 = vmatprep.mubr.f32.mxu0 0.0
        %3540 = vmatmul.mubr.f32.gmra.mrb[0].mxu0 %v3006
        %v3541 = vpop.f32.mrb[0].mxu0
        %v3542 = vadd.f32 %v2874, %v3541
        %v3543 = vpop.f32.mrb[0].mxu0
        %3544 = vmatprep.mubr.f32.mxu0 0.0
        %3545 = vmatmul.mubr.f32.gmra.mrb[0].mxu0 %v3009
        %v3546 = vpop.f32.mrb[0].mxu0
        %v3547 = vadd.f32 %v2874, %v3546
        %v3548 = vpop.f32.mrb[0].mxu0
        %3549 = vmatprep.mubr.f32.mxu0 0.0
        %3550 = vmatmul.mubr.f32.gmra.mrb[0].mxu0 %v3012
        %v3551 = vpop.f32.mrb[0].mxu0
        %v3552 = vadd.f32 %v2874, %v3551
        %v3553 = vpop.f32.mrb[0].mxu0
        %3554 = vmatprep.mubr.f32.mxu0 0.0
        %3555 = vmatmul.mubr.f32.gmra.mrb[0].mxu0 %v3015
        %v3556 = vpop.f32.mrb[0].mxu0
        %v3557 = vadd.f32 %v2874, %v3556
        %v3558 = vpop.f32.mrb[0].mxu0
        %3559 = vmatprep.mubr.f32.mxu0 0.0
        %3560 = vmatmul.mubr.f32.gmra.mrb[0].mxu0 %v3018
        %v3561 = vpop.f32.mrb[0].mxu0
        %v3562 = vadd.f32 %v2874, %v3561
        %v3563 = vpop.f32.mrb[0].mxu0
        %3564 = vmatprep.mubr.f32.mxu0 0.0
        %3565 = vmatmul.mubr.f32.gmra.mrb[0].mxu0 %v3021
        %v3566 = vpop.f32.mrb[0].mxu0
        %v3567 = vadd.f32 %v2874, %v3566
        %v3568 = vpop.f32.mrb[0].mxu0
        %3569 = vmatprep.mubr.f32.mxu0 0.0
        %3570 = vmatmul.mubr.f32.gmra.mrb[0].mxu0 %v3024
        %v3571 = vpop.f32.mrb[0].mxu0
        %v3572 = vadd.f32 %v2874, %v3571
        %v3573 = vpop.f32.mrb[0].mxu0
        %3574 = vmatprep.mubr.f32.mxu0 0.0
        %3575 = vmatmul.mubr.f32.gmra.mrb[0].mxu0 %v3027
        %v3576 = vpop.f32.mrb[0].mxu0
        %v3577 = vadd.f32 %v2874, %v3576
        %v3578 = vpop.f32.mrb[0].mxu0
        %3579 = vmatprep.mubr.f32.mxu0 0.0
        %3580 = vmatmul.mubr.f32.gmra.mrb[0].mxu0 %v3030
        %v3581 = vpop.f32.mrb[0].mxu0
        %v3582 = vadd.f32 %v2874, %v3581
        %v3583 = vpop.f32.mrb[0].mxu0
        %3584 = vmatprep.mubr.f32.mxu0 0.0
        %3585 = vmatmul.mubr.f32.gmra.mrb[0].mxu0 %v3033
        %v3586 = vpop.f32.mrb[0].mxu0
        %v3587 = vadd.f32 %v2874, %v3586
        %v3588 = vpop.f32.mrb[0].mxu0
        %3589 = vmatprep.mubr.f32.mxu0 0.0
        %3590 = vmatmul.mubr.f32.gmra.mrb[0].mxu0 %v3036
        %v3591 = vpop.f32.mrb[0].mxu0
        %v3592 = vadd.f32 %v2874, %v3591
        %v3593 = vpop.f32.mrb[0].mxu0
        %3594 = vmatprep.mubr.f32.mxu0 0.0
        %3595 = vmatmul.mubr.f32.gmra.mrb[0].mxu0 %v3039
        %v3596 = vpop.f32.mrb[0].mxu0
        %v3597 = vadd.f32 %v2874, %v3596
        %v3598 = vpop.f32.mrb[0].mxu0
        %3599 = vmatprep.mubr.f32.mxu0 0.0
        %3600 = vmatmul.mubr.f32.gmra.mrb[0].mxu0 %v3042
        %v3601 = vpop.f32.mrb[0].mxu0
        %v3602 = vadd.f32 %v2874, %v3601
        %v3603 = vpop.f32.mrb[0].mxu0
        %3604 = vmatprep.mubr.f32.mxu0 0.0
        %3605 = vmatmul.mubr.f32.gmra.mrb[0].mxu0 %v3045
        %v3606 = vpop.f32.mrb[0].mxu0
        %v3607 = vadd.f32 %v2874, %v3606
        %v3608 = vpop.f32.mrb[0].mxu0
        %3609 = vmatprep.mubr.f32.mxu0 0.0
        %3610 = vmatmul.mubr.f32.gmra.mrb[0].mxu0 %v3048
        %v3611 = vpop.f32.mrb[0].mxu0
        %v3612 = vadd.f32 %v2874, %v3611
        %v3613 = vpop.f32.mrb[0].mxu0
        %3614 = vmatprep.mubr.f32.mxu0 0.0
        %3615 = vmatmul.mubr.f32.gmra.mrb[0].mxu0 %v3051
        %v3616 = vpop.f32.mrb[0].mxu0
        %v3617 = vadd.f32 %v2874, %v3616
        %v3618 = vpop.f32.mrb[0].mxu0
        %3619 = vmatprep.mubr.f32.mxu0 0.0
        %3620 = vmatmul.mubr.f32.gmra.mrb[0].mxu0 %v3054
        %v3621 = vpop.f32.mrb[0].mxu0
        %v3622 = vadd.f32 %v2874, %v3621
        %v3623 = vpop.f32.mrb[0].mxu0
        %3624 = vmatprep.mubr.f32.mxu0 0.0
        %3625 = vmatmul.mubr.f32.gmra.mrb[0].mxu0 %v3057
        %v3626 = vpop.f32.mrb[0].mxu0
        %v3627 = vadd.f32 %v2874, %v3626
        %v3628 = vpop.f32.mrb[0].mxu0
        %3629 = vmatprep.mubr.f32.mxu0 0.0
        %3630 = vmatmul.mubr.f32.gmra.mrb[0].mxu0 %v3060
        %v3631 = vpop.f32.mrb[0].mxu0
        %v3632 = vadd.f32 %v2874, %v3631
        %v3633 = vpop.f32.mrb[0].mxu0
        %3634 = vmatprep.mubr.f32.mxu0 0.0
        %3635 = vmatmul.mubr.f32.gmra.mrb[0].mxu0 %v3063
        %v3636 = vpop.f32.mrb[0].mxu0
        %v3637 = vadd.f32 %v2874, %v3636
        %v3638 = vpop.f32.mrb[0].mxu0
        %3639 = vmatprep.mubr.f32.mxu0 0.0
        %3640 = vmatmul.mubr.f32.gmra.mrb[0].mxu0 %v3066
        %v3641 = vpop.f32.mrb[0].mxu0
        %v3642 = vadd.f32 %v2874, %v3641
        %v3643 = vpop.f32.mrb[0].mxu0
        %3644 = vmatprep.mubr.f32.mxu0 0.0
        %3645 = vmatmul.mubr.f32.gmra.mrb[0].mxu0 %v3069
        %v3646 = vpop.f32.mrb[0].mxu0
        %v3647 = vadd.f32 %v2874, %v3646
        %v3648 = vpop.f32.mrb[0].mxu0
        %3649 = vmatprep.mubr.f32.mxu0 0.0
        %3650 = vmatmul.mubr.f32.gmra.mrb[0].mxu0 %v3072
        %v3651 = vpop.f32.mrb[0].mxu0
        %v3652 = vadd.f32 %v2874, %v3651
        %v3653 = vpop.f32.mrb[0].mxu0
        %3654 = vmatprep.mubr.f32.mxu0 0.0
        %3655 = vmatmul.mubr.f32.gmra.mrb[0].mxu0 %v3075
        %v3656 = vpop.f32.mrb[0].mxu0
        %v3657 = vadd.f32 %v2874, %v3656
        %v3658 = vpop.f32.mrb[0].mxu0
        %3659 = vmatprep.mubr.f32.mxu0 0.0
        %3660 = vmatmul.mubr.f32.gmra.mrb[0].mxu0 %v3078
        %v3661 = vpop.f32.mrb[0].mxu0
        %v3662 = vadd.f32 %v2874, %v3661
        %v3663 = vpop.f32.mrb[0].mxu0
        %3664 = vmatprep.mubr.f32.mxu0 0.0
        %3665 = vmatmul.mubr.f32.gmra.mrb[0].mxu0 %v3081
        %v3666 = vpop.f32.mrb[0].mxu0
        %v3667 = vadd.f32 %v2874, %v3666
        %v3668 = vpop.f32.mrb[0].mxu0
        %3669 = vmatprep.mubr.f32.mxu0 0.0
        %3670 = vmatmul.mubr.f32.gmra.mrb[0].mxu0 %v3084
        %v3671 = vpop.f32.mrb[0].mxu0
        %v3672 = vadd.f32 %v2874, %v3671
        %v3673 = vpop.f32.mrb[0].mxu0
        %3674 = vmatprep.mubr.f32.mxu0 0.0
        %3675 = vmatmul.mubr.f32.gmra.mrb[0].mxu0 %v3087
        %v3676 = vpop.f32.mrb[0].mxu0
        %v3677 = vadd.f32 %v2874, %v3676
        %v3678 = vpop.f32.mrb[0].mxu0
        %3679 = vmatprep.mubr.f32.mxu0 0.0
        %3680 = vmatmul.mubr.f32.gmra.mrb[0].mxu0 %v3090
        %v3681 = vpop.f32.mrb[0].mxu0
        %v3682 = vadd.f32 %v2874, %v3681
        %v3683 = vpop.f32.mrb[0].mxu0
        %3684 = vmatprep.mubr.f32.mxu0 0.0
        %3685 = vmatmul.mubr.f32.gmra.mrb[0].mxu0 %v3093
        %v3686 = vpop.f32.mrb[0].mxu0
        %v3687 = vadd.f32 %v2874, %v3686
        %v3688 = vpop.f32.mrb[0].mxu0
        %3689 = vmatprep.mubr.f32.mxu0 0.0
        %3690 = vmatmul.mubr.f32.gmra.mrb[0].mxu0 %v3096
        %v3691 = vpop.f32.mrb[0].mxu0
        %v3692 = vadd.f32 %v2874, %v3691
        %v3693 = vpop.f32.mrb[0].mxu0
        %3694 = vmatprep.mubr.f32.mxu0 0.0
        %3695 = vmatmul.mubr.f32.gmra.mrb[0].mxu0 %v3099
        %v3696 = vpop.f32.mrb[0].mxu0
        %v3697 = vadd.f32 %v2874, %v3696
        %v3698 = vpop.f32.mrb[0].mxu0
        %3699 = vmatprep.mubr.f32.mxu0 0.0
        %3700 = vmatmul.mubr.f32.gmra.mrb[0].mxu0 %v3102
        %v3701 = vpop.f32.mrb[0].mxu0
        %v3702 = vadd.f32 %v2874, %v3701
        %v3703 = vpop.f32.mrb[0].mxu0
        %3704 = vmatprep.mubr.f32.mxu0 0.0
        %3705 = vmatmul.mubr.f32.gmra.mrb[0].mxu0 %v3105
        %v3706 = vpop.f32.mrb[0].mxu0
        %v3707 = vadd.f32 %v2874, %v3706
        %v3708 = vpop.f32.mrb[0].mxu0
        %3709 = vmatprep.mubr.f32.mxu0 0.0
        %3710 = vmatmul.mubr.f32.gmra.mrb[0].mxu0 %v3108
        %v3711 = vpop.f32.mrb[0].mxu0
        %v3712 = vadd.f32 %v2874, %v3711
        %v3713 = vpop.f32.mrb[0].mxu0
        %3714 = vmatprep.mubr.f32.mxu0 0.0
        %3715 = vmatmul.mubr.f32.gmra.mrb[0].mxu0 %v3111
        %v3716 = vpop.f32.mrb[0].mxu0
        %v3717 = vadd.f32 %v2874, %v3716
        %v3718 = vpop.f32.mrb[0].mxu0
        %3719 = vmatprep.mubr.f32.mxu0 0.0
        %3720 = vmatmul.mubr.f32.gmra.mrb[0].mxu0 %v3114
        %v3721 = vpop.f32.mrb[0].mxu0
        %v3722 = vadd.f32 %v2874, %v3721
        %v3723 = vpop.f32.mrb[0].mxu0
        %3724 = vmatprep.mubr.f32.mxu0 0.0
        %3725 = vmatmul.mubr.f32.gmra.mrb[0].mxu0 %v3117
        %v3726 = vpop.f32.mrb[0].mxu0
        %v3727 = vadd.f32 %v2874, %v3726
        %v3728 = vpop.f32.mrb[0].mxu0
        %3729 = vmatprep.mubr.f32.mxu0 0.0
        %3730 = vmatmul.mubr.f32.gmra.mrb[0].mxu0 %v3120
        %v3731 = vpop.f32.mrb[0].mxu0
        %v3732 = vadd.f32 %v2874, %v3731
        %v3733 = vpop.f32.mrb[0].mxu0
        %3734 = vmatprep.mubr.f32.mxu0 0.0
        %3735 = vmatmul.mubr.f32.gmra.mrb[0].mxu0 %v3123
        %v3736 = vpop.f32.mrb[0].mxu0
        %v3737 = vadd.f32 %v2874, %v3736
        %v3738 = vpop.f32.mrb[0].mxu0
        %3739 = vmatprep.mubr.f32.mxu0 0.0
        %3740 = vmatmul.mubr.f32.gmra.mrb[0].mxu0 %v3126
        %v3741 = vpop.f32.mrb[0].mxu0
        %v3742 = vadd.f32 %v2874, %v3741
        %v3743 = vpop.f32.mrb[0].mxu0
        %3744 = vmatprep.mubr.f32.mxu0 0.0
        %3745 = vmatmul.mubr.f32.gmra.mrb[0].mxu0 %v3129
        %v3746 = vpop.f32.mrb[0].mxu0
        %v3747 = vadd.f32 %v2874, %v3746
        %v3748 = vpop.f32.mrb[0].mxu0
        %3749 = vmatprep.mubr.f32.mxu0 0.0
        %3750 = vmatmul.mubr.f32.gmra.mrb[0].mxu0 %v3132
        %v3751 = vpop.f32.mrb[0].mxu0
        %v3752 = vadd.f32 %v2874, %v3751
        %v3753 = vpop.f32.mrb[0].mxu0
        %3754 = vmatprep.mubr.f32.mxu0 0.0
        %3755 = vmatmul.mubr.f32.gmra.mrb[0].mxu0 %v3135
        %v3756 = vpop.f32.mrb[0].mxu0
        %v3757 = vadd.f32 %v2874, %v3756
        %v3758 = vpop.f32.mrb[0].mxu0
        %3759 = vmatprep.mubr.f32.mxu0 0.0
        %3760 = vmatmul.mubr.f32.gmra.mrb[0].mxu0 %v3138
        %v3761 = vpop.f32.mrb[0].mxu0
        %v3762 = vadd.f32 %v2874, %v3761
        %v3763 = vpop.f32.mrb[0].mxu0
        %3764 = vmatprep.mubr.f32.mxu0 0.0
        %3765 = vmatmul.mubr.f32.gmra.mrb[0].mxu0 %v3141
        %v3766 = vpop.f32.mrb[0].mxu0
        %v3767 = vadd.f32 %v2874, %v3766
        %v3768 = vpop.f32.mrb[0].mxu0
        %3769 = vmatprep.mubr.f32.mxu0 0.0
        %3770 = vmatmul.mubr.f32.gmra.mrb[0].mxu0 %v3144
        %v3771 = vpop.f32.mrb[0].mxu0
        %v3772 = vadd.f32 %v2874, %v3771
        %v3773 = vpop.f32.mrb[0].mxu0
        %3774 = vmatprep.mubr.f32.mxu0 0.0
        %3775 = vmatmul.mubr.f32.gmra.mrb[0].mxu0 %v3147
        %v3776 = vpop.f32.mrb[0].mxu0
        %v3777 = vadd.f32 %v2874, %v3776
        %v3778 = vpop.f32.mrb[0].mxu0
        %3779 = vmatprep.mubr.f32.mxu0 0.0
        %3780 = vmatmul.mubr.f32.gmra.mrb[0].mxu0 %v3150
        %v3781 = vpop.f32.mrb[0].mxu0
        %v3782 = vadd.f32 %v2874, %v3781
        %v3783 = vpop.f32.mrb[0].mxu0
        %3784 = vmatprep.mubr.f32.mxu0 0.0
        %3785 = vmatmul.mubr.f32.gmra.mrb[0].mxu0 %v3153
        %v3786 = vpop.f32.mrb[0].mxu0
        %v3787 = vadd.f32 %v2874, %v3786
        %v3788 = vpop.f32.mrb[0].mxu0
        %3789 = vmatprep.mubr.f32.mxu0 0.0
        %3790 = vmatmul.mubr.f32.gmra.mrb[0].mxu0 %v3156
        %v3791 = vpop.f32.mrb[0].mxu0
        %v3792 = vadd.f32 %v2874, %v3791
        %v3793 = vpop.f32.mrb[0].mxu0
        %3794 = vmatprep.mubr.f32.mxu0 0.0
        %3795 = vmatmul.mubr.f32.gmra.mrb[0].mxu0 %v3159
        %v3796 = vpop.f32.mrb[0].mxu0
        %v3797 = vadd.f32 %v2874, %v3796
        %v3798 = vpop.f32.mrb[0].mxu0
        %3799 = vmatprep.mubr.f32.mxu0 0.0
        %3800 = vmatmul.mubr.f32.gmra.mrb[0].mxu0 %v3162
        %v3801 = vpop.f32.mrb[0].mxu0
        %v3802 = vadd.f32 %v2874, %v3801
        %v3803 = vpop.f32.mrb[0].mxu0
        %3804 = vmatprep.mubr.f32.mxu0 0.0
        %3805 = vmatmul.mubr.f32.gmra.mrb[0].mxu0 %v3165
        %v3806 = vpop.f32.mrb[0].mxu0
        %v3807 = vadd.f32 %v2874, %v3806
        %v3808 = vpop.f32.mrb[0].mxu0
        %3809 = vmatprep.mubr.f32.mxu0 0.0
        %3810 = vmatmul.mubr.f32.gmra.mrb[0].mxu0 %v3168
        %v3811 = vpop.f32.mrb[0].mxu0
        %v3812 = vadd.f32 %v2874, %v3811
        %v3813 = vpop.f32.mrb[0].mxu0
        %3814 = vmatprep.mubr.f32.mxu0 0.0
        %3815 = vmatmul.mubr.f32.gmra.mrb[0].mxu0 %v3171
        %v3816 = vpop.f32.mrb[0].mxu0
        %v3817 = vadd.f32 %v2874, %v3816
        %v3818 = vpop.f32.mrb[0].mxu0
        %3819 = vmatprep.mubr.f32.mxu0 0.0
        %3820 = vmatmul.mubr.f32.gmra.mrb[0].mxu0 %v3174
        %v3821 = vpop.f32.mrb[0].mxu0
        %v3822 = vadd.f32 %v2874, %v3821
        %v3823 = vpop.f32.mrb[0].mxu0
        %3824 = vmatprep.mubr.f32.mxu0 0.0
        %3825 = vmatmul.mubr.f32.gmra.mrb[0].mxu0 %v3177
        %v3826 = vpop.f32.mrb[0].mxu0
        %v3827 = vadd.f32 %v2874, %v3826
        %v3828 = vpop.f32.mrb[0].mxu0
        %3829 = vmatprep.mubr.f32.mxu0 0.0
        %3830 = vmatmul.mubr.f32.gmra.mrb[0].mxu0 %v3180
        %v3831 = vpop.f32.mrb[0].mxu0
        %v3832 = vadd.f32 %v2874, %v3831
        %v3833 = vpop.f32.mrb[0].mxu0
        %3834 = vmatprep.mubr.f32.mxu0 0.0
        %3835 = vmatmul.mubr.f32.gmra.mrb[0].mxu0 %v3183
        %v3836 = vpop.f32.mrb[0].mxu0
        %v3837 = vadd.f32 %v2874, %v3836
        %v3838 = vpop.f32.mrb[0].mxu0
        %3839 = vmatprep.mubr.f32.mxu0 0.0
        %3840 = vmatmul.mubr.f32.gmra.mrb[0].mxu0 %v3186
        %v3841 = vpop.f32.mrb[0].mxu0
        %v3842 = vadd.f32 %v2874, %v3841
        %v3843 = vpop.f32.mrb[0].mxu0
        %3844 = vmatprep.mubr.f32.mxu0 0.0
        %3845 = vmatmul.mubr.f32.gmra.mrb[0].mxu0 %v3189
        %v3846 = vpop.f32.mrb[0].mxu0
        %v3847 = vadd.f32 %v2874, %v3846
        %v3848 = vpop.f32.mrb[0].mxu0
        %3849 = vmatprep.mubr.f32.mxu0 0.0
        %3850 = vmatmul.mubr.f32.gmra.mrb[0].mxu0 %v3192
        %v3851 = vpop.f32.mrb[0].mxu0
        %v3852 = vadd.f32 %v2874, %v3851
        %v3853 = vpop.f32.mrb[0].mxu0
        %3854 = vmatprep.mubr.f32.mxu0 0.0
        %3855 = vmatmul.mubr.f32.gmra.mrb[0].mxu0 %v3195
        %v3856 = vpop.f32.mrb[0].mxu0
        %v3857 = vadd.f32 %v2874, %v3856
        %v3858 = vpop.f32.mrb[0].mxu0
        %3859 = vmatprep.mubr.f32.mxu0 0.0
        %3860 = vmatmul.mubr.f32.gmra.mrb[0].mxu0 %v3198
        %v3861 = vpop.f32.mrb[0].mxu0
        %v3862 = vadd.f32 %v2874, %v3861
        %v3863 = vpop.f32.mrb[0].mxu0
        %3864 = vmatprep.mubr.f32.mxu0 0.0
        %3865 = vmatmul.mubr.f32.gmra.mrb[0].mxu0 %v3201
        %v3866 = vpop.f32.mrb[0].mxu0
        %v3867 = vadd.f32 %v2874, %v3866
        %v3868 = vpop.f32.mrb[0].mxu0
        %3869 = vmatprep.mubr.f32.mxu0 0.0
        %3870 = vmatmul.mubr.f32.gmra.mrb[0].mxu0 %v3204
        %v3871 = vpop.f32.mrb[0].mxu0
        %v3872 = vadd.f32 %v2874, %v3871
        %v3873 = vpop.f32.mrb[0].mxu0
        %3874 = vmatprep.mubr.f32.mxu0 0.0
        %3875 = vmatmul.mubr.f32.gmra.mrb[0].mxu0 %v3207
        %v3876 = vpop.f32.mrb[0].mxu0
        %v3877 = vadd.f32 %v2874, %v3876
        %v3878 = vpop.f32.mrb[0].mxu0
        %3879 = vmatprep.mubr.f32.mxu0 0.0
        %3880 = vmatmul.mubr.f32.gmra.mrb[0].mxu0 %v3210
        %v3881 = vpop.f32.mrb[0].mxu0
        %v3882 = vadd.f32 %v2874, %v3881
        %v3883 = vpop.f32.mrb[0].mxu0
        %3884 = vmatprep.mubr.f32.mxu0 0.0
        %3885 = vmatmul.mubr.f32.gmra.mrb[0].mxu0 %v3213
        %v3886 = vpop.f32.mrb[0].mxu0
        %v3887 = vadd.f32 %v2874, %v3886
        %v3888 = vpop.f32.mrb[0].mxu0
        %3889 = vmatprep.mubr.f32.mxu0 0.0
        %3890 = vmatmul.mubr.f32.gmra.mrb[0].mxu0 %v3216
        %v3891 = vpop.f32.mrb[0].mxu0
        %v3892 = vadd.f32 %v2874, %v3891
        %v3893 = vpop.f32.mrb[0].mxu0
        %3894 = vmatprep.mubr.f32.mxu0 0.0
        %3895 = vmatmul.mubr.f32.gmra.mrb[0].mxu0 %v3219
        %v3896 = vpop.f32.mrb[0].mxu0
        %v3897 = vadd.f32 %v2874, %v3896
        %v3898 = vpop.f32.mrb[0].mxu0
        %3899 = vmatprep.mubr.f32.mxu0 0.0
        %3900 = vmatmul.mubr.f32.gmra.mrb[0].mxu0 %v3222
        %v3901 = vpop.f32.mrb[0].mxu0
        %v3902 = vadd.f32 %v2874, %v3901
        %v3903 = vpop.f32.mrb[0].mxu0
        %3904 = vmatprep.mubr.f32.mxu0 0.0
        %3905 = vmatmul.mubr.f32.gmra.mrb[0].mxu0 %v3225
        %v3906 = vpop.f32.mrb[0].mxu0
        %v3907 = vadd.f32 %v2874, %v3906
        %v3908 = vpop.f32.mrb[0].mxu0
        %3909 = vmatprep.mubr.f32.mxu0 0.0
        %3910 = vmatmul.mubr.f32.gmra.mrb[0].mxu0 %v3228
        %v3911 = vpop.f32.mrb[0].mxu0
        %v3912 = vadd.f32 %v2874, %v3911
        %v3913 = vpop.f32.mrb[0].mxu0
        %3914 = vmatprep.mubr.f32.mxu0 0.0
        %3915 = vmatmul.mubr.f32.gmra.mrb[0].mxu0 %v3231
        %v3916 = vpop.f32.mrb[0].mxu0
        %v3917 = vadd.f32 %v2874, %v3916
        %v3918 = vpop.f32.mrb[0].mxu0
        %3919 = vmatprep.mubr.f32.mxu0 0.0
        %3920 = vmatmul.mubr.f32.gmra.mrb[0].mxu0 %v3234
        %v3921 = vpop.f32.mrb[0].mxu0
        %v3922 = vadd.f32 %v2874, %v3921
        %v3923 = vpop.f32.mrb[0].mxu0
        %3924 = vmatprep.mubr.f32.mxu0 0.0
        %3925 = vmatmul.mubr.f32.gmra.mrb[0].mxu0 %v3237
        %v3926 = vpop.f32.mrb[0].mxu0
        %v3927 = vadd.f32 %v2874, %v3926
        %v3928 = vpop.f32.mrb[0].mxu0
        %3929 = vmatprep.mubr.f32.mxu0 0.0
        %3930 = vmatmul.mubr.f32.gmra.mrb[0].mxu0 %v3240
        %v3931 = vpop.f32.mrb[0].mxu0
        %v3932 = vadd.f32 %v2874, %v3931
        %v3933 = vpop.f32.mrb[0].mxu0
        %3934 = vmatprep.mubr.f32.mxu0 0.0
        %3935 = vmatmul.mubr.f32.gmra.mrb[0].mxu0 %v3243
        %v3936 = vpop.f32.mrb[0].mxu0
        %v3937 = vadd.f32 %v2874, %v3936
        %v3938 = vpop.f32.mrb[0].mxu0
        %3939 = vmatprep.mubr.f32.mxu0 0.0
        %3940 = vmatmul.mubr.f32.gmra.mrb[0].mxu0 %v3246
        %v3941 = vpop.f32.mrb[0].mxu0
        %v3942 = vadd.f32 %v2874, %v3941
        %v3943 = vpop.f32.mrb[0].mxu0
        %3944 = vmatprep.mubr.f32.mxu0 0.0
        %3945 = vmatmul.mubr.f32.gmra.mrb[0].mxu0 %v3249
        %v3946 = vpop.f32.mrb[0].mxu0
        %v3947 = vadd.f32 %v2874, %v3946
        %v3948 = vpop.f32.mrb[0].mxu0
        %3949 = vmatprep.mubr.f32.mxu0 0.0
        %3950 = vmatmul.mubr.f32.gmra.mrb[0].mxu0 %v3252
        %v3951 = vpop.f32.mrb[0].mxu0
        %v3952 = vadd.f32 %v2874, %v3951
        %v3953 = vpop.f32.mrb[0].mxu0
        %3954 = vmatprep.mubr.f32.mxu0 0.0
        %3955 = vmatmul.mubr.f32.gmra.mrb[0].mxu0 %v3255
        %v3956 = vpop.f32.mrb[0].mxu0
        %v3957 = vadd.f32 %v2874, %v3956
        %v3958 = vpop.f32.mrb[0].mxu0
        %3959 = vmatprep.mubr.f32.mxu0 0.0
        %3960 = vmatmul.mubr.f32.gmra.mrb[0].mxu0 %v3258
        %v3961 = vpop.f32.mrb[0].mxu0
        %v3962 = vadd.f32 %v2874, %v3961
        %v3963 = vpop.f32.mrb[0].mxu0
        %3964 = vdwg.mxu0
        %3965 = vmax.xlane.f32.xlu0 %v3327
        %v3966 = vpop.xlane.xlu0 %3965
        %3967 = vmax.xlane.f32.xlu0 %v3332
        %v3968 = vpop.xlane.xlu0 %3967
        %3969 = vmax.xlane.f32.xlu0 %v3337
        %v3970 = vpop.xlane.xlu0 %3969
        %3971 = vmax.xlane.f32.xlu0 %v3342
        %v3972 = vpop.xlane.xlu0 %3971
        %3973 = vmax.xlane.f32.xlu0 %v3347
        %v3974 = vpop.xlane.xlu0 %3973
        %3975 = vmax.xlane.f32.xlu0 %v3352
        %v3976 = vpop.xlane.xlu0 %3975
        %3977 = vmax.xlane.f32.xlu0 %v3357
        %v3978 = vpop.xlane.xlu0 %3977
        %3979 = vmax.xlane.f32.xlu0 %v3362
        %v3980 = vpop.xlane.xlu0 %3979
        %3981 = vmax.xlane.f32.xlu0 %v3367
        %v3982 = vpop.xlane.xlu0 %3981
        %3983 = vmax.xlane.f32.xlu0 %v3372
        %v3984 = vpop.xlane.xlu0 %3983
        %3985 = vmax.xlane.f32.xlu0 %v3377
        %v3986 = vpop.xlane.xlu0 %3985
        %3987 = vmax.xlane.f32.xlu0 %v3382
        %v3988 = vpop.xlane.xlu0 %3987
        %3989 = vmax.xlane.f32.xlu0 %v3387
        %v3990 = vpop.xlane.xlu0 %3989
        %3991 = vmax.xlane.f32.xlu0 %v3392
        %v3992 = vpop.xlane.xlu0 %3991
        %3993 = vmax.xlane.f32.xlu0 %v3397
        %v3994 = vpop.xlane.xlu0 %3993
        %3995 = vmax.xlane.f32.xlu0 %v3402
        %v3996 = vpop.xlane.xlu0 %3995
        %3997 = vmax.xlane.f32.xlu0 %v3407
        %v3998 = vpop.xlane.xlu0 %3997
        %3999 = vmax.xlane.f32.xlu0 %v3412
        %v4000 = vpop.xlane.xlu0 %3999
        %4001 = vmax.xlane.f32.xlu0 %v3417
        %v4002 = vpop.xlane.xlu0 %4001
        %4003 = vmax.xlane.f32.xlu0 %v3422
        %v4004 = vpop.xlane.xlu0 %4003
        %4005 = vmax.xlane.f32.xlu0 %v3427
        %v4006 = vpop.xlane.xlu0 %4005
        %4007 = vmax.xlane.f32.xlu0 %v3432
        %v4008 = vpop.xlane.xlu0 %4007
        %4009 = vmax.xlane.f32.xlu0 %v3437
        %v4010 = vpop.xlane.xlu0 %4009
        %4011 = vmax.xlane.f32.xlu0 %v3442
        %v4012 = vpop.xlane.xlu0 %4011
        %4013 = vmax.xlane.f32.xlu0 %v3447
        %v4014 = vpop.xlane.xlu0 %4013
        %4015 = vmax.xlane.f32.xlu0 %v3452
        %v4016 = vpop.xlane.xlu0 %4015
        %4017 = vmax.xlane.f32.xlu0 %v3457
        %v4018 = vpop.xlane.xlu0 %4017
        %4019 = vmax.xlane.f32.xlu0 %v3462
        %v4020 = vpop.xlane.xlu0 %4019
        %4021 = vmax.xlane.f32.xlu0 %v3467
        %v4022 = vpop.xlane.xlu0 %4021
        %4023 = vmax.xlane.f32.xlu0 %v3472
        %v4024 = vpop.xlane.xlu0 %4023
        %4025 = vmax.xlane.f32.xlu0 %v3477
        %v4026 = vpop.xlane.xlu0 %4025
        %4027 = vmax.xlane.f32.xlu0 %v3482
        %v4028 = vpop.xlane.xlu0 %4027
        %4029 = vmax.xlane.f32.xlu0 %v3487
        %v4030 = vpop.xlane.xlu0 %4029
        %4031 = vmax.xlane.f32.xlu0 %v3492
        %v4032 = vpop.xlane.xlu0 %4031
        %4033 = vmax.xlane.f32.xlu0 %v3497
        %v4034 = vpop.xlane.xlu0 %4033
        %4035 = vmax.xlane.f32.xlu0 %v3502
        %v4036 = vpop.xlane.xlu0 %4035
        %4037 = vmax.xlane.f32.xlu0 %v3507
        %v4038 = vpop.xlane.xlu0 %4037
        %4039 = vmax.xlane.f32.xlu0 %v3512
        %v4040 = vpop.xlane.xlu0 %4039
        %4041 = vmax.xlane.f32.xlu0 %v3517
        %v4042 = vpop.xlane.xlu0 %4041
        %4043 = vmax.xlane.f32.xlu0 %v3522
        %v4044 = vpop.xlane.xlu0 %4043
        %4045 = vmax.xlane.f32.xlu0 %v3527
        %v4046 = vpop.xlane.xlu0 %4045
        %4047 = vmax.xlane.f32.xlu0 %v3532
        %v4048 = vpop.xlane.xlu0 %4047
        %4049 = vmax.xlane.f32.xlu0 %v3537
        %v4050 = vpop.xlane.xlu0 %4049
        %4051 = vmax.xlane.f32.xlu0 %v3542
        %v4052 = vpop.xlane.xlu0 %4051
        %4053 = vmax.xlane.f32.xlu0 %v3547
        %v4054 = vpop.xlane.xlu0 %4053
        %4055 = vmax.xlane.f32.xlu0 %v3552
        %v4056 = vpop.xlane.xlu0 %4055
        %4057 = vmax.xlane.f32.xlu0 %v3557
        %v4058 = vpop.xlane.xlu0 %4057
        %4059 = vmax.xlane.f32.xlu0 %v3562
        %v4060 = vpop.xlane.xlu0 %4059
        %4061 = vmax.xlane.f32.xlu0 %v3567
        %v4062 = vpop.xlane.xlu0 %4061
        %4063 = vmax.xlane.f32.xlu0 %v3572
        %v4064 = vpop.xlane.xlu0 %4063
        %4065 = vmax.xlane.f32.xlu0 %v3577
        %v4066 = vpop.xlane.xlu0 %4065
        %4067 = vmax.xlane.f32.xlu0 %v3582
        %v4068 = vpop.xlane.xlu0 %4067
        %4069 = vmax.xlane.f32.xlu0 %v3587
        %v4070 = vpop.xlane.xlu0 %4069
        %4071 = vmax.xlane.f32.xlu0 %v3592
        %v4072 = vpop.xlane.xlu0 %4071
        %4073 = vmax.xlane.f32.xlu0 %v3597
        %v4074 = vpop.xlane.xlu0 %4073
        %4075 = vmax.xlane.f32.xlu0 %v3602
        %v4076 = vpop.xlane.xlu0 %4075
        %4077 = vmax.xlane.f32.xlu0 %v3607
        %v4078 = vpop.xlane.xlu0 %4077
        %4079 = vmax.xlane.f32.xlu0 %v3612
        %v4080 = vpop.xlane.xlu0 %4079
        %4081 = vmax.xlane.f32.xlu0 %v3617
        %v4082 = vpop.xlane.xlu0 %4081
        %4083 = vmax.xlane.f32.xlu0 %v3622
        %v4084 = vpop.xlane.xlu0 %4083
        %4085 = vmax.xlane.f32.xlu0 %v3627
        %v4086 = vpop.xlane.xlu0 %4085
        %4087 = vmax.xlane.f32.xlu0 %v3632
        %v4088 = vpop.xlane.xlu0 %4087
        %4089 = vmax.xlane.f32.xlu0 %v3637
        %v4090 = vpop.xlane.xlu0 %4089
        %4091 = vmax.xlane.f32.xlu0 %v3642
        %v4092 = vpop.xlane.xlu0 %4091
        %4093 = vmax.xlane.f32.xlu0 %v3647
        %v4094 = vpop.xlane.xlu0 %4093
        %4095 = vmax.xlane.f32.xlu0 %v3652
        %v4096 = vpop.xlane.xlu0 %4095
        %4097 = vmax.xlane.f32.xlu0 %v3657
        %v4098 = vpop.xlane.xlu0 %4097
        %4099 = vmax.xlane.f32.xlu0 %v3662
        %v4100 = vpop.xlane.xlu0 %4099
        %4101 = vmax.xlane.f32.xlu0 %v3667
        %v4102 = vpop.xlane.xlu0 %4101
        %4103 = vmax.xlane.f32.xlu0 %v3672
        %v4104 = vpop.xlane.xlu0 %4103
        %4105 = vmax.xlane.f32.xlu0 %v3677
        %v4106 = vpop.xlane.xlu0 %4105
        %4107 = vmax.xlane.f32.xlu0 %v3682
        %v4108 = vpop.xlane.xlu0 %4107
        %4109 = vmax.xlane.f32.xlu0 %v3687
        %v4110 = vpop.xlane.xlu0 %4109
        %4111 = vmax.xlane.f32.xlu0 %v3692
        %v4112 = vpop.xlane.xlu0 %4111
        %4113 = vmax.xlane.f32.xlu0 %v3697
        %v4114 = vpop.xlane.xlu0 %4113
        %4115 = vmax.xlane.f32.xlu0 %v3702
        %v4116 = vpop.xlane.xlu0 %4115
        %4117 = vmax.xlane.f32.xlu0 %v3707
        %v4118 = vpop.xlane.xlu0 %4117
        %4119 = vmax.xlane.f32.xlu0 %v3712
        %v4120 = vpop.xlane.xlu0 %4119
        %4121 = vmax.xlane.f32.xlu0 %v3717
        %v4122 = vpop.xlane.xlu0 %4121
        %4123 = vmax.xlane.f32.xlu0 %v3722
        %v4124 = vpop.xlane.xlu0 %4123
        %4125 = vmax.xlane.f32.xlu0 %v3727
        %v4126 = vpop.xlane.xlu0 %4125
        %4127 = vmax.xlane.f32.xlu0 %v3732
        %v4128 = vpop.xlane.xlu0 %4127
        %4129 = vmax.xlane.f32.xlu0 %v3737
        %v4130 = vpop.xlane.xlu0 %4129
        %4131 = vmax.xlane.f32.xlu0 %v3742
        %v4132 = vpop.xlane.xlu0 %4131
        %4133 = vmax.xlane.f32.xlu0 %v3747
        %v4134 = vpop.xlane.xlu0 %4133
        %4135 = vmax.xlane.f32.xlu0 %v3752
        %v4136 = vpop.xlane.xlu0 %4135
        %4137 = vmax.xlane.f32.xlu0 %v3757
        %v4138 = vpop.xlane.xlu0 %4137
        %4139 = vmax.xlane.f32.xlu0 %v3762
        %v4140 = vpop.xlane.xlu0 %4139
        %4141 = vmax.xlane.f32.xlu0 %v3767
        %v4142 = vpop.xlane.xlu0 %4141
        %4143 = vmax.xlane.f32.xlu0 %v3772
        %v4144 = vpop.xlane.xlu0 %4143
        %4145 = vmax.xlane.f32.xlu0 %v3777
        %v4146 = vpop.xlane.xlu0 %4145
        %4147 = vmax.xlane.f32.xlu0 %v3782
        %v4148 = vpop.xlane.xlu0 %4147
        %4149 = vmax.xlane.f32.xlu0 %v3787
        %v4150 = vpop.xlane.xlu0 %4149
        %4151 = vmax.xlane.f32.xlu0 %v3792
        %v4152 = vpop.xlane.xlu0 %4151
        %4153 = vmax.xlane.f32.xlu0 %v3797
        %v4154 = vpop.xlane.xlu0 %4153
        %4155 = vmax.xlane.f32.xlu0 %v3802
        %v4156 = vpop.xlane.xlu0 %4155
        %4157 = vmax.xlane.f32.xlu0 %v3807
        %v4158 = vpop.xlane.xlu0 %4157
        %4159 = vmax.xlane.f32.xlu0 %v3812
        %v4160 = vpop.xlane.xlu0 %4159
        %4161 = vmax.xlane.f32.xlu0 %v3817
        %v4162 = vpop.xlane.xlu0 %4161
        %4163 = vmax.xlane.f32.xlu0 %v3822
        %v4164 = vpop.xlane.xlu0 %4163
        %4165 = vmax.xlane.f32.xlu0 %v3827
        %v4166 = vpop.xlane.xlu0 %4165
        %4167 = vmax.xlane.f32.xlu0 %v3832
        %v4168 = vpop.xlane.xlu0 %4167
        %4169 = vmax.xlane.f32.xlu0 %v3837
        %v4170 = vpop.xlane.xlu0 %4169
        %4171 = vmax.xlane.f32.xlu0 %v3842
        %v4172 = vpop.xlane.xlu0 %4171
        %4173 = vmax.xlane.f32.xlu0 %v3847
        %v4174 = vpop.xlane.xlu0 %4173
        %4175 = vmax.xlane.f32.xlu0 %v3852
        %v4176 = vpop.xlane.xlu0 %4175
        %4177 = vmax.xlane.f32.xlu0 %v3857
        %v4178 = vpop.xlane.xlu0 %4177
        %4179 = vmax.xlane.f32.xlu0 %v3862
        %v4180 = vpop.xlane.xlu0 %4179
        %4181 = vmax.xlane.f32.xlu0 %v3867
        %v4182 = vpop.xlane.xlu0 %4181
        %4183 = vmax.xlane.f32.xlu0 %v3872
        %v4184 = vpop.xlane.xlu0 %4183
        %4185 = vmax.xlane.f32.xlu0 %v3877
        %v4186 = vpop.xlane.xlu0 %4185
        %4187 = vmax.xlane.f32.xlu0 %v3882
        %v4188 = vpop.xlane.xlu0 %4187
        %4189 = vmax.xlane.f32.xlu0 %v3887
        %v4190 = vpop.xlane.xlu0 %4189
        %4191 = vmax.xlane.f32.xlu0 %v3892
        %v4192 = vpop.xlane.xlu0 %4191
        %4193 = vmax.xlane.f32.xlu0 %v3897
        %v4194 = vpop.xlane.xlu0 %4193
        %4195 = vmax.xlane.f32.xlu0 %v3902
        %v4196 = vpop.xlane.xlu0 %4195
        %4197 = vmax.xlane.f32.xlu0 %v3907
        %v4198 = vpop.xlane.xlu0 %4197
        %4199 = vmax.xlane.f32.xlu0 %v3912
        %v4200 = vpop.xlane.xlu0 %4199
        %4201 = vmax.xlane.f32.xlu0 %v3917
        %v4202 = vpop.xlane.xlu0 %4201
        %4203 = vmax.xlane.f32.xlu0 %v3922
        %v4204 = vpop.xlane.xlu0 %4203
        %4205 = vmax.xlane.f32.xlu0 %v3927
        %v4206 = vpop.xlane.xlu0 %4205
        %4207 = vmax.xlane.f32.xlu0 %v3932
        %v4208 = vpop.xlane.xlu0 %4207
        %4209 = vmax.xlane.f32.xlu0 %v3937
        %v4210 = vpop.xlane.xlu0 %4209
        %4211 = vmax.xlane.f32.xlu0 %v3942
        %v4212 = vpop.xlane.xlu0 %4211
        %4213 = vmax.xlane.f32.xlu0 %v3947
        %v4214 = vpop.xlane.xlu0 %4213
        %4215 = vmax.xlane.f32.xlu0 %v3952
        %v4216 = vpop.xlane.xlu0 %4215
        %4217 = vmax.xlane.f32.xlu0 %v3957
        %v4218 = vpop.xlane.xlu0 %4217
        %4219 = vmax.xlane.f32.xlu0 %v3962
        %v4220 = vpop.xlane.xlu0 %4219
        %v4221 = vsub.f32 %v3327, %v3966
        %v4222 = vsub.f32 %v3332, %v3968
        %v4223 = vsub.f32 %v3337, %v3970
        %v4224 = vsub.f32 %v3342, %v3972
        %v4225 = vsub.f32 %v3347, %v3974
        %v4226 = vsub.f32 %v3352, %v3976
        %v4227 = vsub.f32 %v3357, %v3978
        %v4228 = vsub.f32 %v3362, %v3980
        %v4229 = vsub.f32 %v3367, %v3982
        %v4230 = vsub.f32 %v3372, %v3984
        %v4231 = vsub.f32 %v3377, %v3986
        %v4232 = vsub.f32 %v3382, %v3988
        %v4233 = vsub.f32 %v3387, %v3990
        %v4234 = vsub.f32 %v3392, %v3992
        %v4235 = vsub.f32 %v3397, %v3994
        %v4236 = vsub.f32 %v3402, %v3996
        %v4237 = vsub.f32 %v3407, %v3998
        %v4238 = vsub.f32 %v3412, %v4000
        %v4239 = vsub.f32 %v3417, %v4002
        %v4240 = vsub.f32 %v3422, %v4004
        %v4241 = vsub.f32 %v3427, %v4006
        %v4242 = vsub.f32 %v3432, %v4008
        %v4243 = vsub.f32 %v3437, %v4010
        %v4244 = vsub.f32 %v3442, %v4012
        %v4245 = vsub.f32 %v3447, %v4014
        %v4246 = vsub.f32 %v3452, %v4016
        %v4247 = vsub.f32 %v3457, %v4018
        %v4248 = vsub.f32 %v3462, %v4020
        %v4249 = vsub.f32 %v3467, %v4022
        %v4250 = vsub.f32 %v3472, %v4024
        %v4251 = vsub.f32 %v3477, %v4026
        %v4252 = vsub.f32 %v3482, %v4028
        %v4253 = vsub.f32 %v3487, %v4030
        %v4254 = vsub.f32 %v3492, %v4032
        %v4255 = vsub.f32 %v3497, %v4034
        %v4256 = vsub.f32 %v3502, %v4036
        %v4257 = vsub.f32 %v3507, %v4038
        %v4258 = vsub.f32 %v3512, %v4040
        %v4259 = vsub.f32 %v3517, %v4042
        %v4260 = vsub.f32 %v3522, %v4044
        %v4261 = vsub.f32 %v3527, %v4046
        %v4262 = vsub.f32 %v3532, %v4048
        %v4263 = vsub.f32 %v3537, %v4050
        %v4264 = vsub.f32 %v3542, %v4052
        %v4265 = vsub.f32 %v3547, %v4054
        %v4266 = vsub.f32 %v3552, %v4056
        %v4267 = vsub.f32 %v3557, %v4058
        %v4268 = vsub.f32 %v3562, %v4060
        %v4269 = vsub.f32 %v3567, %v4062
        %v4270 = vsub.f32 %v3572, %v4064
        %v4271 = vsub.f32 %v3577, %v4066
        %v4272 = vsub.f32 %v3582, %v4068
        %v4273 = vsub.f32 %v3587, %v4070
        %v4274 = vsub.f32 %v3592, %v4072
        %v4275 = vsub.f32 %v3597, %v4074
        %v4276 = vsub.f32 %v3602, %v4076
        %v4277 = vsub.f32 %v3607, %v4078
        %v4278 = vsub.f32 %v3612, %v4080
        %v4279 = vsub.f32 %v3617, %v4082
        %v4280 = vsub.f32 %v3622, %v4084
        %v4281 = vsub.f32 %v3627, %v4086
        %v4282 = vsub.f32 %v3632, %v4088
        %v4283 = vsub.f32 %v3637, %v4090
        %v4284 = vsub.f32 %v3642, %v4092
        %v4285 = vsub.f32 %v3647, %v4094
        %v4286 = vsub.f32 %v3652, %v4096
        %v4287 = vsub.f32 %v3657, %v4098
        %v4288 = vsub.f32 %v3662, %v4100
        %v4289 = vsub.f32 %v3667, %v4102
        %v4290 = vsub.f32 %v3672, %v4104
        %v4291 = vsub.f32 %v3677, %v4106
        %v4292 = vsub.f32 %v3682, %v4108
        %v4293 = vsub.f32 %v3687, %v4110
        %v4294 = vsub.f32 %v3692, %v4112
        %v4295 = vsub.f32 %v3697, %v4114
        %v4296 = vsub.f32 %v3702, %v4116
        %v4297 = vsub.f32 %v3707, %v4118
        %v4298 = vsub.f32 %v3712, %v4120
        %v4299 = vsub.f32 %v3717, %v4122
        %v4300 = vsub.f32 %v3722, %v4124
        %v4301 = vsub.f32 %v3727, %v4126
        %v4302 = vsub.f32 %v3732, %v4128
        %v4303 = vsub.f32 %v3737, %v4130
        %v4304 = vsub.f32 %v3742, %v4132
        %v4305 = vsub.f32 %v3747, %v4134
        %v4306 = vsub.f32 %v3752, %v4136
        %v4307 = vsub.f32 %v3757, %v4138
        %v4308 = vsub.f32 %v3762, %v4140
        %v4309 = vsub.f32 %v3767, %v4142
        %v4310 = vsub.f32 %v3772, %v4144
        %v4311 = vsub.f32 %v3777, %v4146
        %v4312 = vsub.f32 %v3782, %v4148
        %v4313 = vsub.f32 %v3787, %v4150
        %v4314 = vsub.f32 %v3792, %v4152
        %v4315 = vsub.f32 %v3797, %v4154
        %v4316 = vsub.f32 %v3802, %v4156
        %v4317 = vsub.f32 %v3807, %v4158
        %v4318 = vsub.f32 %v3812, %v4160
        %v4319 = vsub.f32 %v3817, %v4162
        %v4320 = vsub.f32 %v3822, %v4164
        %v4321 = vsub.f32 %v3827, %v4166
        %v4322 = vsub.f32 %v3832, %v4168
        %v4323 = vsub.f32 %v3837, %v4170
        %v4324 = vsub.f32 %v3842, %v4172
        %v4325 = vsub.f32 %v3847, %v4174
        %v4326 = vsub.f32 %v3852, %v4176
        %v4327 = vsub.f32 %v3857, %v4178
        %v4328 = vsub.f32 %v3862, %v4180
        %v4329 = vsub.f32 %v3867, %v4182
        %v4330 = vsub.f32 %v3872, %v4184
        %v4331 = vsub.f32 %v3877, %v4186
        %v4332 = vsub.f32 %v3882, %v4188
        %v4333 = vsub.f32 %v3887, %v4190
        %v4334 = vsub.f32 %v3892, %v4192
        %v4335 = vsub.f32 %v3897, %v4194
        %v4336 = vsub.f32 %v3902, %v4196
        %v4337 = vsub.f32 %v3907, %v4198
        %v4338 = vsub.f32 %v3912, %v4200
        %v4339 = vsub.f32 %v3917, %v4202
        %v4340 = vsub.f32 %v3922, %v4204
        %v4341 = vsub.f32 %v3927, %v4206
        %v4342 = vsub.f32 %v3932, %v4208
        %v4343 = vsub.f32 %v3937, %v4210
        %v4344 = vsub.f32 %v3942, %v4212
        %v4345 = vsub.f32 %v3947, %v4214
        %v4346 = vsub.f32 %v3952, %v4216
        %v4347 = vsub.f32 %v3957, %v4218
        %v4348 = vsub.f32 %v3962, %v4220
        %v4349 = vmul.f32 %v4221, 1.442695
        %v4350 = vpow.pop %v4349
        %v4351 = vmul.f32 %v4222, 1.442695
        %v4352 = vpow.pop %v4351
        %v4353 = vmul.f32 %v4223, 1.442695
        %v4354 = vpow.pop %v4353
        %v4355 = vmul.f32 %v4224, 1.442695
        %v4356 = vpow.pop %v4355
        %v4357 = vmul.f32 %v4225, 1.442695
        %v4358 = vpow.pop %v4357
        %v4359 = vmul.f32 %v4226, 1.442695
        %v4360 = vpow.pop %v4359
        %v4361 = vmul.f32 %v4227, 1.442695
        %v4362 = vpow.pop %v4361
        %v4363 = vmul.f32 %v4228, 1.442695
        %v4364 = vpow.pop %v4363
        %v4365 = vmul.f32 %v4229, 1.442695
        %v4366 = vpow.pop %v4365
        %v4367 = vmul.f32 %v4230, 1.442695
        %v4368 = vpow.pop %v4367
        %v4369 = vmul.f32 %v4231, 1.442695
        %v4370 = vpow.pop %v4369
        %v4371 = vmul.f32 %v4232, 1.442695
        %v4372 = vpow.pop %v4371
        %v4373 = vmul.f32 %v4233, 1.442695
        %v4374 = vpow.pop %v4373
        %v4375 = vmul.f32 %v4234, 1.442695
        %v4376 = vpow.pop %v4375
        %v4377 = vmul.f32 %v4235, 1.442695
        %v4378 = vpow.pop %v4377
        %v4379 = vmul.f32 %v4236, 1.442695
        %v4380 = vpow.pop %v4379
        %v4381 = vmul.f32 %v4237, 1.442695
        %v4382 = vpow.pop %v4381
        %v4383 = vmul.f32 %v4238, 1.442695
        %v4384 = vpow.pop %v4383
        %v4385 = vmul.f32 %v4239, 1.442695
        %v4386 = vpow.pop %v4385
        %v4387 = vmul.f32 %v4240, 1.442695
        %v4388 = vpow.pop %v4387
        %v4389 = vmul.f32 %v4241, 1.442695
        %v4390 = vpow.pop %v4389
        %v4391 = vmul.f32 %v4242, 1.442695
        %v4392 = vpow.pop %v4391
        %v4393 = vmul.f32 %v4243, 1.442695
        %v4394 = vpow.pop %v4393
        %v4395 = vmul.f32 %v4244, 1.442695
        %v4396 = vpow.pop %v4395
        %v4397 = vmul.f32 %v4245, 1.442695
        %v4398 = vpow.pop %v4397
        %v4399 = vmul.f32 %v4246, 1.442695
        %v4400 = vpow.pop %v4399
        %v4401 = vmul.f32 %v4247, 1.442695
        %v4402 = vpow.pop %v4401
        %v4403 = vmul.f32 %v4248, 1.442695
        %v4404 = vpow.pop %v4403
        %v4405 = vmul.f32 %v4249, 1.442695
        %v4406 = vpow.pop %v4405
        %v4407 = vmul.f32 %v4250, 1.442695
        %v4408 = vpow.pop %v4407
        %v4409 = vmul.f32 %v4251, 1.442695
        %v4410 = vpow.pop %v4409
        %v4411 = vmul.f32 %v4252, 1.442695
        %v4412 = vpow.pop %v4411
        %v4413 = vmul.f32 %v4253, 1.442695
        %v4414 = vpow.pop %v4413
        %v4415 = vmul.f32 %v4254, 1.442695
        %v4416 = vpow.pop %v4415
        %v4417 = vmul.f32 %v4255, 1.442695
        %v4418 = vpow.pop %v4417
        %v4419 = vmul.f32 %v4256, 1.442695
        %v4420 = vpow.pop %v4419
        %v4421 = vmul.f32 %v4257, 1.442695
        %v4422 = vpow.pop %v4421
        %v4423 = vmul.f32 %v4258, 1.442695
        %v4424 = vpow.pop %v4423
        %v4425 = vmul.f32 %v4259, 1.442695
        %v4426 = vpow.pop %v4425
        %v4427 = vmul.f32 %v4260, 1.442695
        %v4428 = vpow.pop %v4427
        %v4429 = vmul.f32 %v4261, 1.442695
        %v4430 = vpow.pop %v4429
        %v4431 = vmul.f32 %v4262, 1.442695
        %v4432 = vpow.pop %v4431
        %v4433 = vmul.f32 %v4263, 1.442695
        %v4434 = vpow.pop %v4433
        %v4435 = vmul.f32 %v4264, 1.442695
        %v4436 = vpow.pop %v4435
        %v4437 = vmul.f32 %v4265, 1.442695
        %v4438 = vpow.pop %v4437
        %v4439 = vmul.f32 %v4266, 1.442695
        %v4440 = vpow.pop %v4439
        %v4441 = vmul.f32 %v4267, 1.442695
        %v4442 = vpow.pop %v4441
        %v4443 = vmul.f32 %v4268, 1.442695
        %v4444 = vpow.pop %v4443
        %v4445 = vmul.f32 %v4269, 1.442695
        %v4446 = vpow.pop %v4445
        %v4447 = vmul.f32 %v4270, 1.442695
        %v4448 = vpow.pop %v4447
        %v4449 = vmul.f32 %v4271, 1.442695
        %v4450 = vpow.pop %v4449
        %v4451 = vmul.f32 %v4272, 1.442695
        %v4452 = vpow.pop %v4451
        %v4453 = vmul.f32 %v4273, 1.442695
        %v4454 = vpow.pop %v4453
        %v4455 = vmul.f32 %v4274, 1.442695
        %v4456 = vpow.pop %v4455
        %v4457 = vmul.f32 %v4275, 1.442695
        %v4458 = vpow.pop %v4457
        %v4459 = vmul.f32 %v4276, 1.442695
        %v4460 = vpow.pop %v4459
        %v4461 = vmul.f32 %v4277, 1.442695
        %v4462 = vpow.pop %v4461
        %v4463 = vmul.f32 %v4278, 1.442695
        %v4464 = vpow.pop %v4463
        %v4465 = vmul.f32 %v4279, 1.442695
        %v4466 = vpow.pop %v4465
        %v4467 = vmul.f32 %v4280, 1.442695
        %v4468 = vpow.pop %v4467
        %v4469 = vmul.f32 %v4281, 1.442695
        %v4470 = vpow.pop %v4469
        %v4471 = vmul.f32 %v4282, 1.442695
        %v4472 = vpow.pop %v4471
        %v4473 = vmul.f32 %v4283, 1.442695
        %v4474 = vpow.pop %v4473
        %v4475 = vmul.f32 %v4284, 1.442695
        %v4476 = vpow.pop %v4475
        %v4477 = vmul.f32 %v4285, 1.442695
        %v4478 = vpow.pop %v4477
        %v4479 = vmul.f32 %v4286, 1.442695
        %v4480 = vpow.pop %v4479
        %v4481 = vmul.f32 %v4287, 1.442695
        %v4482 = vpow.pop %v4481
        %v4483 = vmul.f32 %v4288, 1.442695
        %v4484 = vpow.pop %v4483
        %v4485 = vmul.f32 %v4289, 1.442695
        %v4486 = vpow.pop %v4485
        %v4487 = vmul.f32 %v4290, 1.442695
        %v4488 = vpow.pop %v4487
        %v4489 = vmul.f32 %v4291, 1.442695
        %v4490 = vpow.pop %v4489
        %v4491 = vmul.f32 %v4292, 1.442695
        %v4492 = vpow.pop %v4491
        %v4493 = vmul.f32 %v4293, 1.442695
        %v4494 = vpow.pop %v4493
        %v4495 = vmul.f32 %v4294, 1.442695
        %v4496 = vpow.pop %v4495
        %v4497 = vmul.f32 %v4295, 1.442695
        %v4498 = vpow.pop %v4497
        %v4499 = vmul.f32 %v4296, 1.442695
        %v4500 = vpow.pop %v4499
        %v4501 = vmul.f32 %v4297, 1.442695
        %v4502 = vpow.pop %v4501
        %v4503 = vmul.f32 %v4298, 1.442695
        %v4504 = vpow.pop %v4503
        %v4505 = vmul.f32 %v4299, 1.442695
        %v4506 = vpow.pop %v4505
        %v4507 = vmul.f32 %v4300, 1.442695
        %v4508 = vpow.pop %v4507
        %v4509 = vmul.f32 %v4301, 1.442695
        %v4510 = vpow.pop %v4509
        %v4511 = vmul.f32 %v4302, 1.442695
        %v4512 = vpow.pop %v4511
        %v4513 = vmul.f32 %v4303, 1.442695
        %v4514 = vpow.pop %v4513
        %v4515 = vmul.f32 %v4304, 1.442695
        %v4516 = vpow.pop %v4515
        %v4517 = vmul.f32 %v4305, 1.442695
        %v4518 = vpow.pop %v4517
        %v4519 = vmul.f32 %v4306, 1.442695
        %v4520 = vpow.pop %v4519
        %v4521 = vmul.f32 %v4307, 1.442695
        %v4522 = vpow.pop %v4521
        %v4523 = vmul.f32 %v4308, 1.442695
        %v4524 = vpow.pop %v4523
        %v4525 = vmul.f32 %v4309, 1.442695
        %v4526 = vpow.pop %v4525
        %v4527 = vmul.f32 %v4310, 1.442695
        %v4528 = vpow.pop %v4527
        %v4529 = vmul.f32 %v4311, 1.442695
        %v4530 = vpow.pop %v4529
        %v4531 = vmul.f32 %v4312, 1.442695
        %v4532 = vpow.pop %v4531
        %v4533 = vmul.f32 %v4313, 1.442695
        %v4534 = vpow.pop %v4533
        %v4535 = vmul.f32 %v4314, 1.442695
        %v4536 = vpow.pop %v4535
        %v4537 = vmul.f32 %v4315, 1.442695
        %v4538 = vpow.pop %v4537
        %v4539 = vmul.f32 %v4316, 1.442695
        %v4540 = vpow.pop %v4539
        %v4541 = vmul.f32 %v4317, 1.442695
        %v4542 = vpow.pop %v4541
        %v4543 = vmul.f32 %v4318, 1.442695
        %v4544 = vpow.pop %v4543
        %v4545 = vmul.f32 %v4319, 1.442695
        %v4546 = vpow.pop %v4545
        %v4547 = vmul.f32 %v4320, 1.442695
        %v4548 = vpow.pop %v4547
        %v4549 = vmul.f32 %v4321, 1.442695
        %v4550 = vpow.pop %v4549
        %v4551 = vmul.f32 %v4322, 1.442695
        %v4552 = vpow.pop %v4551
        %v4553 = vmul.f32 %v4323, 1.442695
        %v4554 = vpow.pop %v4553
        %v4555 = vmul.f32 %v4324, 1.442695
        %v4556 = vpow.pop %v4555
        %v4557 = vmul.f32 %v4325, 1.442695
        %v4558 = vpow.pop %v4557
        %v4559 = vmul.f32 %v4326, 1.442695
        %v4560 = vpow.pop %v4559
        %v4561 = vmul.f32 %v4327, 1.442695
        %v4562 = vpow.pop %v4561
        %v4563 = vmul.f32 %v4328, 1.442695
        %v4564 = vpow.pop %v4563
        %v4565 = vmul.f32 %v4329, 1.442695
        %v4566 = vpow.pop %v4565
        %v4567 = vmul.f32 %v4330, 1.442695
        %v4568 = vpow.pop %v4567
        %v4569 = vmul.f32 %v4331, 1.442695
        %v4570 = vpow.pop %v4569
        %v4571 = vmul.f32 %v4332, 1.442695
        %v4572 = vpow.pop %v4571
        %v4573 = vmul.f32 %v4333, 1.442695
        %v4574 = vpow.pop %v4573
        %v4575 = vmul.f32 %v4334, 1.442695
        %v4576 = vpow.pop %v4575
        %v4577 = vmul.f32 %v4335, 1.442695
        %v4578 = vpow.pop %v4577
        %v4579 = vmul.f32 %v4336, 1.442695
        %v4580 = vpow.pop %v4579
        %v4581 = vmul.f32 %v4337, 1.442695
        %v4582 = vpow.pop %v4581
        %v4583 = vmul.f32 %v4338, 1.442695
        %v4584 = vpow.pop %v4583
        %v4585 = vmul.f32 %v4339, 1.442695
        %v4586 = vpow.pop %v4585
        %v4587 = vmul.f32 %v4340, 1.442695
        %v4588 = vpow.pop %v4587
        %v4589 = vmul.f32 %v4341, 1.442695
        %v4590 = vpow.pop %v4589
        %v4591 = vmul.f32 %v4342, 1.442695
        %v4592 = vpow.pop %v4591
        %v4593 = vmul.f32 %v4343, 1.442695
        %v4594 = vpow.pop %v4593
        %v4595 = vmul.f32 %v4344, 1.442695
        %v4596 = vpow.pop %v4595
        %v4597 = vmul.f32 %v4345, 1.442695
        %v4598 = vpow.pop %v4597
        %v4599 = vmul.f32 %v4346, 1.442695
        %v4600 = vpow.pop %v4599
        %v4601 = vmul.f32 %v4347, 1.442695
        %v4602 = vpow.pop %v4601
        %v4603 = vmul.f32 %v4348, 1.442695
        %v4604 = vpow.pop %v4603
        %4605 = vadd.xlane.f32.xlu0 %v4350
        %v4606 = vpop.xlane.xlu0 %4605
        %4607 = vadd.xlane.f32.xlu0 %v4352
        %v4608 = vpop.xlane.xlu0 %4607
        %4609 = vadd.xlane.f32.xlu0 %v4354
        %v4610 = vpop.xlane.xlu0 %4609
        %4611 = vadd.xlane.f32.xlu0 %v4356
        %v4612 = vpop.xlane.xlu0 %4611
        %4613 = vadd.xlane.f32.xlu0 %v4358
        %v4614 = vpop.xlane.xlu0 %4613
        %4615 = vadd.xlane.f32.xlu0 %v4360
        %v4616 = vpop.xlane.xlu0 %4615
        %4617 = vadd.xlane.f32.xlu0 %v4362
        %v4618 = vpop.xlane.xlu0 %4617
        %4619 = vadd.xlane.f32.xlu0 %v4364
        %v4620 = vpop.xlane.xlu0 %4619
        %4621 = vadd.xlane.f32.xlu0 %v4366
        %v4622 = vpop.xlane.xlu0 %4621
        %4623 = vadd.xlane.f32.xlu0 %v4368
        %v4624 = vpop.xlane.xlu0 %4623
        %4625 = vadd.xlane.f32.xlu0 %v4370
        %v4626 = vpop.xlane.xlu0 %4625
        %4627 = vadd.xlane.f32.xlu0 %v4372
        %v4628 = vpop.xlane.xlu0 %4627
        %4629 = vadd.xlane.f32.xlu0 %v4374
        %v4630 = vpop.xlane.xlu0 %4629
        %4631 = vadd.xlane.f32.xlu0 %v4376
        %v4632 = vpop.xlane.xlu0 %4631
        %4633 = vadd.xlane.f32.xlu0 %v4378
        %v4634 = vpop.xlane.xlu0 %4633
        %4635 = vadd.xlane.f32.xlu0 %v4380
        %v4636 = vpop.xlane.xlu0 %4635
        %4637 = vadd.xlane.f32.xlu0 %v4382
        %v4638 = vpop.xlane.xlu0 %4637
        %4639 = vadd.xlane.f32.xlu0 %v4384
        %v4640 = vpop.xlane.xlu0 %4639
        %4641 = vadd.xlane.f32.xlu0 %v4386
        %v4642 = vpop.xlane.xlu0 %4641
        %4643 = vadd.xlane.f32.xlu0 %v4388
        %v4644 = vpop.xlane.xlu0 %4643
        %4645 = vadd.xlane.f32.xlu0 %v4390
        %v4646 = vpop.xlane.xlu0 %4645
        %4647 = vadd.xlane.f32.xlu0 %v4392
        %v4648 = vpop.xlane.xlu0 %4647
        %4649 = vadd.xlane.f32.xlu0 %v4394
        %v4650 = vpop.xlane.xlu0 %4649
        %4651 = vadd.xlane.f32.xlu0 %v4396
        %v4652 = vpop.xlane.xlu0 %4651
        %4653 = vadd.xlane.f32.xlu0 %v4398
        %v4654 = vpop.xlane.xlu0 %4653
        %4655 = vadd.xlane.f32.xlu0 %v4400
        %v4656 = vpop.xlane.xlu0 %4655
        %4657 = vadd.xlane.f32.xlu0 %v4402
        %v4658 = vpop.xlane.xlu0 %4657
        %4659 = vadd.xlane.f32.xlu0 %v4404
        %v4660 = vpop.xlane.xlu0 %4659
        %4661 = vadd.xlane.f32.xlu0 %v4406
        %v4662 = vpop.xlane.xlu0 %4661
        %4663 = vadd.xlane.f32.xlu0 %v4408
        %v4664 = vpop.xlane.xlu0 %4663
        %4665 = vadd.xlane.f32.xlu0 %v4410
        %v4666 = vpop.xlane.xlu0 %4665
        %4667 = vadd.xlane.f32.xlu0 %v4412
        %v4668 = vpop.xlane.xlu0 %4667
        %4669 = vadd.xlane.f32.xlu0 %v4414
        %v4670 = vpop.xlane.xlu0 %4669
        %4671 = vadd.xlane.f32.xlu0 %v4416
        %v4672 = vpop.xlane.xlu0 %4671
        %4673 = vadd.xlane.f32.xlu0 %v4418
        %v4674 = vpop.xlane.xlu0 %4673
        %4675 = vadd.xlane.f32.xlu0 %v4420
        %v4676 = vpop.xlane.xlu0 %4675
        %4677 = vadd.xlane.f32.xlu0 %v4422
        %v4678 = vpop.xlane.xlu0 %4677
        %4679 = vadd.xlane.f32.xlu0 %v4424
        %v4680 = vpop.xlane.xlu0 %4679
        %4681 = vadd.xlane.f32.xlu0 %v4426
        %v4682 = vpop.xlane.xlu0 %4681
        %4683 = vadd.xlane.f32.xlu0 %v4428
        %v4684 = vpop.xlane.xlu0 %4683
        %4685 = vadd.xlane.f32.xlu0 %v4430
        %v4686 = vpop.xlane.xlu0 %4685
        %4687 = vadd.xlane.f32.xlu0 %v4432
        %v4688 = vpop.xlane.xlu0 %4687
        %4689 = vadd.xlane.f32.xlu0 %v4434
        %v4690 = vpop.xlane.xlu0 %4689
        %4691 = vadd.xlane.f32.xlu0 %v4436
        %v4692 = vpop.xlane.xlu0 %4691
        %4693 = vadd.xlane.f32.xlu0 %v4438
        %v4694 = vpop.xlane.xlu0 %4693
        %4695 = vadd.xlane.f32.xlu0 %v4440
        %v4696 = vpop.xlane.xlu0 %4695
        %4697 = vadd.xlane.f32.xlu0 %v4442
        %v4698 = vpop.xlane.xlu0 %4697
        %4699 = vadd.xlane.f32.xlu0 %v4444
        %v4700 = vpop.xlane.xlu0 %4699
        %4701 = vadd.xlane.f32.xlu0 %v4446
        %v4702 = vpop.xlane.xlu0 %4701
        %4703 = vadd.xlane.f32.xlu0 %v4448
        %v4704 = vpop.xlane.xlu0 %4703
        %4705 = vadd.xlane.f32.xlu0 %v4450
        %v4706 = vpop.xlane.xlu0 %4705
        %4707 = vadd.xlane.f32.xlu0 %v4452
        %v4708 = vpop.xlane.xlu0 %4707
        %4709 = vadd.xlane.f32.xlu0 %v4454
        %v4710 = vpop.xlane.xlu0 %4709
        %4711 = vadd.xlane.f32.xlu0 %v4456
        %v4712 = vpop.xlane.xlu0 %4711
        %4713 = vadd.xlane.f32.xlu0 %v4458
        %v4714 = vpop.xlane.xlu0 %4713
        %4715 = vadd.xlane.f32.xlu0 %v4460
        %v4716 = vpop.xlane.xlu0 %4715
        %4717 = vadd.xlane.f32.xlu0 %v4462
        %v4718 = vpop.xlane.xlu0 %4717
        %4719 = vadd.xlane.f32.xlu0 %v4464
        %v4720 = vpop.xlane.xlu0 %4719
        %4721 = vadd.xlane.f32.xlu0 %v4466
        %v4722 = vpop.xlane.xlu0 %4721
        %4723 = vadd.xlane.f32.xlu0 %v4468
        %v4724 = vpop.xlane.xlu0 %4723
        %4725 = vadd.xlane.f32.xlu0 %v4470
        %v4726 = vpop.xlane.xlu0 %4725
        %4727 = vadd.xlane.f32.xlu0 %v4472
        %v4728 = vpop.xlane.xlu0 %4727
        %4729 = vadd.xlane.f32.xlu0 %v4474
        %v4730 = vpop.xlane.xlu0 %4729
        %4731 = vadd.xlane.f32.xlu0 %v4476
        %v4732 = vpop.xlane.xlu0 %4731
        %4733 = vadd.xlane.f32.xlu0 %v4478
        %v4734 = vpop.xlane.xlu0 %4733
        %4735 = vadd.xlane.f32.xlu0 %v4480
        %v4736 = vpop.xlane.xlu0 %4735
        %4737 = vadd.xlane.f32.xlu0 %v4482
        %v4738 = vpop.xlane.xlu0 %4737
        %4739 = vadd.xlane.f32.xlu0 %v4484
        %v4740 = vpop.xlane.xlu0 %4739
        %4741 = vadd.xlane.f32.xlu0 %v4486
        %v4742 = vpop.xlane.xlu0 %4741
        %4743 = vadd.xlane.f32.xlu0 %v4488
        %v4744 = vpop.xlane.xlu0 %4743
        %4745 = vadd.xlane.f32.xlu0 %v4490
        %v4746 = vpop.xlane.xlu0 %4745
        %4747 = vadd.xlane.f32.xlu0 %v4492
        %v4748 = vpop.xlane.xlu0 %4747
        %4749 = vadd.xlane.f32.xlu0 %v4494
        %v4750 = vpop.xlane.xlu0 %4749
        %4751 = vadd.xlane.f32.xlu0 %v4496
        %v4752 = vpop.xlane.xlu0 %4751
        %4753 = vadd.xlane.f32.xlu0 %v4498
        %v4754 = vpop.xlane.xlu0 %4753
        %4755 = vadd.xlane.f32.xlu0 %v4500
        %v4756 = vpop.xlane.xlu0 %4755
        %4757 = vadd.xlane.f32.xlu0 %v4502
        %v4758 = vpop.xlane.xlu0 %4757
        %4759 = vadd.xlane.f32.xlu0 %v4504
        %v4760 = vpop.xlane.xlu0 %4759
        %4761 = vadd.xlane.f32.xlu0 %v4506
        %v4762 = vpop.xlane.xlu0 %4761
        %4763 = vadd.xlane.f32.xlu0 %v4508
        %v4764 = vpop.xlane.xlu0 %4763
        %4765 = vadd.xlane.f32.xlu0 %v4510
        %v4766 = vpop.xlane.xlu0 %4765
        %4767 = vadd.xlane.f32.xlu0 %v4512
        %v4768 = vpop.xlane.xlu0 %4767
        %4769 = vadd.xlane.f32.xlu0 %v4514
        %v4770 = vpop.xlane.xlu0 %4769
        %4771 = vadd.xlane.f32.xlu0 %v4516
        %v4772 = vpop.xlane.xlu0 %4771
        %4773 = vadd.xlane.f32.xlu0 %v4518
        %v4774 = vpop.xlane.xlu0 %4773
        %4775 = vadd.xlane.f32.xlu0 %v4520
        %v4776 = vpop.xlane.xlu0 %4775
        %4777 = vadd.xlane.f32.xlu0 %v4522
        %v4778 = vpop.xlane.xlu0 %4777
        %4779 = vadd.xlane.f32.xlu0 %v4524
        %v4780 = vpop.xlane.xlu0 %4779
        %4781 = vadd.xlane.f32.xlu0 %v4526
        %v4782 = vpop.xlane.xlu0 %4781
        %4783 = vadd.xlane.f32.xlu0 %v4528
        %v4784 = vpop.xlane.xlu0 %4783
        %4785 = vadd.xlane.f32.xlu0 %v4530
        %v4786 = vpop.xlane.xlu0 %4785
        %4787 = vadd.xlane.f32.xlu0 %v4532
        %v4788 = vpop.xlane.xlu0 %4787
        %4789 = vadd.xlane.f32.xlu0 %v4534
        %v4790 = vpop.xlane.xlu0 %4789
        %4791 = vadd.xlane.f32.xlu0 %v4536
        %v4792 = vpop.xlane.xlu0 %4791
        %4793 = vadd.xlane.f32.xlu0 %v4538
        %v4794 = vpop.xlane.xlu0 %4793
        %4795 = vadd.xlane.f32.xlu0 %v4540
        %v4796 = vpop.xlane.xlu0 %4795
        %4797 = vadd.xlane.f32.xlu0 %v4542
        %v4798 = vpop.xlane.xlu0 %4797
        %4799 = vadd.xlane.f32.xlu0 %v4544
        %v4800 = vpop.xlane.xlu0 %4799
        %4801 = vadd.xlane.f32.xlu0 %v4546
        %v4802 = vpop.xlane.xlu0 %4801
        %4803 = vadd.xlane.f32.xlu0 %v4548
        %v4804 = vpop.xlane.xlu0 %4803
        %4805 = vadd.xlane.f32.xlu0 %v4550
        %v4806 = vpop.xlane.xlu0 %4805
        %4807 = vadd.xlane.f32.xlu0 %v4552
        %v4808 = vpop.xlane.xlu0 %4807
        %4809 = vadd.xlane.f32.xlu0 %v4554
        %v4810 = vpop.xlane.xlu0 %4809
        %4811 = vadd.xlane.f32.xlu0 %v4556
        %v4812 = vpop.xlane.xlu0 %4811
        %4813 = vadd.xlane.f32.xlu0 %v4558
        %v4814 = vpop.xlane.xlu0 %4813
        %4815 = vadd.xlane.f32.xlu0 %v4560
        %v4816 = vpop.xlane.xlu0 %4815
        %4817 = vadd.xlane.f32.xlu0 %v4562
        %v4818 = vpop.xlane.xlu0 %4817
        %4819 = vadd.xlane.f32.xlu0 %v4564
        %v4820 = vpop.xlane.xlu0 %4819
        %4821 = vadd.xlane.f32.xlu0 %v4566
        %v4822 = vpop.xlane.xlu0 %4821
        %4823 = vadd.xlane.f32.xlu0 %v4568
        %v4824 = vpop.xlane.xlu0 %4823
        %4825 = vadd.xlane.f32.xlu0 %v4570
        %v4826 = vpop.xlane.xlu0 %4825
        %4827 = vadd.xlane.f32.xlu0 %v4572
        %v4828 = vpop.xlane.xlu0 %4827
        %4829 = vadd.xlane.f32.xlu0 %v4574
        %v4830 = vpop.xlane.xlu0 %4829
        %4831 = vadd.xlane.f32.xlu0 %v4576
        %v4832 = vpop.xlane.xlu0 %4831
        %4833 = vadd.xlane.f32.xlu0 %v4578
        %v4834 = vpop.xlane.xlu0 %4833
        %4835 = vadd.xlane.f32.xlu0 %v4580
        %v4836 = vpop.xlane.xlu0 %4835
        %4837 = vadd.xlane.f32.xlu0 %v4582
        %v4838 = vpop.xlane.xlu0 %4837
        %4839 = vadd.xlane.f32.xlu0 %v4584
        %v4840 = vpop.xlane.xlu0 %4839
        %4841 = vadd.xlane.f32.xlu0 %v4586
        %v4842 = vpop.xlane.xlu0 %4841
        %4843 = vadd.xlane.f32.xlu0 %v4588
        %v4844 = vpop.xlane.xlu0 %4843
        %4845 = vadd.xlane.f32.xlu0 %v4590
        %v4846 = vpop.xlane.xlu0 %4845
        %4847 = vadd.xlane.f32.xlu0 %v4592
        %v4848 = vpop.xlane.xlu0 %4847
        %4849 = vadd.xlane.f32.xlu0 %v4594
        %v4850 = vpop.xlane.xlu0 %4849
        %4851 = vadd.xlane.f32.xlu0 %v4596
        %v4852 = vpop.xlane.xlu0 %4851
        %4853 = vadd.xlane.f32.xlu0 %v4598
        %v4854 = vpop.xlane.xlu0 %4853
        %4855 = vadd.xlane.f32.xlu0 %v4600
        %v4856 = vpop.xlane.xlu0 %4855
        %4857 = vadd.xlane.f32.xlu0 %v4602
        %v4858 = vpop.xlane.xlu0 %4857
        %4859 = vadd.xlane.f32.xlu0 %v4604
        %v4860 = vpop.xlane.xlu0 %4859
        %v4861 = vrcp.pop %v4606
        %v4862 = vmul.f32 %v4350, %v4861
        %v4863 = vrcp.pop %v4608
        %v4864 = vmul.f32 %v4352, %v4863
        %v4865 = vrcp.pop %v4610
        %v4866 = vmul.f32 %v4354, %v4865
        %v4867 = vrcp.pop %v4612
        %v4868 = vmul.f32 %v4356, %v4867
        %v4869 = vrcp.pop %v4614
        %v4870 = vmul.f32 %v4358, %v4869
        %v4871 = vrcp.pop %v4616
        %v4872 = vmul.f32 %v4360, %v4871
        %v4873 = vrcp.pop %v4618
        %v4874 = vmul.f32 %v4362, %v4873
        %v4875 = vrcp.pop %v4620
        %v4876 = vmul.f32 %v4364, %v4875
        %v4877 = vrcp.pop %v4622
        %v4878 = vmul.f32 %v4366, %v4877
        %v4879 = vrcp.pop %v4624
        %v4880 = vmul.f32 %v4368, %v4879
        %v4881 = vrcp.pop %v4626
        %v4882 = vmul.f32 %v4370, %v4881
        %v4883 = vrcp.pop %v4628
        %v4884 = vmul.f32 %v4372, %v4883
        %v4885 = vrcp.pop %v4630
        %v4886 = vmul.f32 %v4374, %v4885
        %v4887 = vrcp.pop %v4632
        %v4888 = vmul.f32 %v4376, %v4887
        %v4889 = vrcp.pop %v4634
        %v4890 = vmul.f32 %v4378, %v4889
        %v4891 = vrcp.pop %v4636
        %v4892 = vmul.f32 %v4380, %v4891
        %v4893 = vrcp.pop %v4638
        %v4894 = vmul.f32 %v4382, %v4893
        %v4895 = vrcp.pop %v4640
        %v4896 = vmul.f32 %v4384, %v4895
        %v4897 = vrcp.pop %v4642
        %v4898 = vmul.f32 %v4386, %v4897
        %v4899 = vrcp.pop %v4644
        %v4900 = vmul.f32 %v4388, %v4899
        %v4901 = vrcp.pop %v4646
        %v4902 = vmul.f32 %v4390, %v4901
        %v4903 = vrcp.pop %v4648
        %v4904 = vmul.f32 %v4392, %v4903
        %v4905 = vrcp.pop %v4650
        %v4906 = vmul.f32 %v4394, %v4905
        %v4907 = vrcp.pop %v4652
        %v4908 = vmul.f32 %v4396, %v4907
        %v4909 = vrcp.pop %v4654
        %v4910 = vmul.f32 %v4398, %v4909
        %v4911 = vrcp.pop %v4656
        %v4912 = vmul.f32 %v4400, %v4911
        %v4913 = vrcp.pop %v4658
        %v4914 = vmul.f32 %v4402, %v4913
        %v4915 = vrcp.pop %v4660
        %v4916 = vmul.f32 %v4404, %v4915
        %v4917 = vrcp.pop %v4662
        %v4918 = vmul.f32 %v4406, %v4917
        %v4919 = vrcp.pop %v4664
        %v4920 = vmul.f32 %v4408, %v4919
        %v4921 = vrcp.pop %v4666
        %v4922 = vmul.f32 %v4410, %v4921
        %v4923 = vrcp.pop %v4668
        %v4924 = vmul.f32 %v4412, %v4923
        %v4925 = vrcp.pop %v4670
        %v4926 = vmul.f32 %v4414, %v4925
        %v4927 = vrcp.pop %v4672
        %v4928 = vmul.f32 %v4416, %v4927
        %v4929 = vrcp.pop %v4674
        %v4930 = vmul.f32 %v4418, %v4929
        %v4931 = vrcp.pop %v4676
        %v4932 = vmul.f32 %v4420, %v4931
        %v4933 = vrcp.pop %v4678
        %v4934 = vmul.f32 %v4422, %v4933
        %v4935 = vrcp.pop %v4680
        %v4936 = vmul.f32 %v4424, %v4935
        %v4937 = vrcp.pop %v4682
        %v4938 = vmul.f32 %v4426, %v4937
        %v4939 = vrcp.pop %v4684
        %v4940 = vmul.f32 %v4428, %v4939
        %v4941 = vrcp.pop %v4686
        %v4942 = vmul.f32 %v4430, %v4941
        %v4943 = vrcp.pop %v4688
        %v4944 = vmul.f32 %v4432, %v4943
        %v4945 = vrcp.pop %v4690
        %v4946 = vmul.f32 %v4434, %v4945
        %v4947 = vrcp.pop %v4692
        %v4948 = vmul.f32 %v4436, %v4947
        %v4949 = vrcp.pop %v4694
        %v4950 = vmul.f32 %v4438, %v4949
        %v4951 = vrcp.pop %v4696
        %v4952 = vmul.f32 %v4440, %v4951
        %v4953 = vrcp.pop %v4698
        %v4954 = vmul.f32 %v4442, %v4953
        %v4955 = vrcp.pop %v4700
        %v4956 = vmul.f32 %v4444, %v4955
        %v4957 = vrcp.pop %v4702
        %v4958 = vmul.f32 %v4446, %v4957
        %v4959 = vrcp.pop %v4704
        %v4960 = vmul.f32 %v4448, %v4959
        %v4961 = vrcp.pop %v4706
        %v4962 = vmul.f32 %v4450, %v4961
        %v4963 = vrcp.pop %v4708
        %v4964 = vmul.f32 %v4452, %v4963
        %v4965 = vrcp.pop %v4710
        %v4966 = vmul.f32 %v4454, %v4965
        %v4967 = vrcp.pop %v4712
        %v4968 = vmul.f32 %v4456, %v4967
        %v4969 = vrcp.pop %v4714
        %v4970 = vmul.f32 %v4458, %v4969
        %v4971 = vrcp.pop %v4716
        %v4972 = vmul.f32 %v4460, %v4971
        %v4973 = vrcp.pop %v4718
        %v4974 = vmul.f32 %v4462, %v4973
        %v4975 = vrcp.pop %v4720
        %v4976 = vmul.f32 %v4464, %v4975
        %v4977 = vrcp.pop %v4722
        %v4978 = vmul.f32 %v4466, %v4977
        %v4979 = vrcp.pop %v4724
        %v4980 = vmul.f32 %v4468, %v4979
        %v4981 = vrcp.pop %v4726
        %v4982 = vmul.f32 %v4470, %v4981
        %v4983 = vrcp.pop %v4728
        %v4984 = vmul.f32 %v4472, %v4983
        %v4985 = vrcp.pop %v4730
        %v4986 = vmul.f32 %v4474, %v4985
        %v4987 = vrcp.pop %v4732
        %v4988 = vmul.f32 %v4476, %v4987
        %v4989 = vrcp.pop %v4734
        %v4990 = vmul.f32 %v4478, %v4989
        %v4991 = vrcp.pop %v4736
        %v4992 = vmul.f32 %v4480, %v4991
        %v4993 = vrcp.pop %v4738
        %v4994 = vmul.f32 %v4482, %v4993
        %v4995 = vrcp.pop %v4740
        %v4996 = vmul.f32 %v4484, %v4995
        %v4997 = vrcp.pop %v4742
        %v4998 = vmul.f32 %v4486, %v4997
        %v4999 = vrcp.pop %v4744
        %v5000 = vmul.f32 %v4488, %v4999
        %v5001 = vrcp.pop %v4746
        %v5002 = vmul.f32 %v4490, %v5001
        %v5003 = vrcp.pop %v4748
        %v5004 = vmul.f32 %v4492, %v5003
        %v5005 = vrcp.pop %v4750
        %v5006 = vmul.f32 %v4494, %v5005
        %v5007 = vrcp.pop %v4752
        %v5008 = vmul.f32 %v4496, %v5007
        %v5009 = vrcp.pop %v4754
        %v5010 = vmul.f32 %v4498, %v5009
        %v5011 = vrcp.pop %v4756
        %v5012 = vmul.f32 %v4500, %v5011
        %v5013 = vrcp.pop %v4758
        %v5014 = vmul.f32 %v4502, %v5013
        %v5015 = vrcp.pop %v4760
        %v5016 = vmul.f32 %v4504, %v5015
        %v5017 = vrcp.pop %v4762
        %v5018 = vmul.f32 %v4506, %v5017
        %v5019 = vrcp.pop %v4764
        %v5020 = vmul.f32 %v4508, %v5019
        %v5021 = vrcp.pop %v4766
        %v5022 = vmul.f32 %v4510, %v5021
        %v5023 = vrcp.pop %v4768
        %v5024 = vmul.f32 %v4512, %v5023
        %v5025 = vrcp.pop %v4770
        %v5026 = vmul.f32 %v4514, %v5025
        %v5027 = vrcp.pop %v4772
        %v5028 = vmul.f32 %v4516, %v5027
        %v5029 = vrcp.pop %v4774
        %v5030 = vmul.f32 %v4518, %v5029
        %v5031 = vrcp.pop %v4776
        %v5032 = vmul.f32 %v4520, %v5031
        %v5033 = vrcp.pop %v4778
        %v5034 = vmul.f32 %v4522, %v5033
        %v5035 = vrcp.pop %v4780
        %v5036 = vmul.f32 %v4524, %v5035
        %v5037 = vrcp.pop %v4782
        %v5038 = vmul.f32 %v4526, %v5037
        %v5039 = vrcp.pop %v4784
        %v5040 = vmul.f32 %v4528, %v5039
        %v5041 = vrcp.pop %v4786
        %v5042 = vmul.f32 %v4530, %v5041
        %v5043 = vrcp.pop %v4788
        %v5044 = vmul.f32 %v4532, %v5043
        %v5045 = vrcp.pop %v4790
        %v5046 = vmul.f32 %v4534, %v5045
        %v5047 = vrcp.pop %v4792
        %v5048 = vmul.f32 %v4536, %v5047
        %v5049 = vrcp.pop %v4794
        %v5050 = vmul.f32 %v4538, %v5049
        %v5051 = vrcp.pop %v4796
        %v5052 = vmul.f32 %v4540, %v5051
        %v5053 = vrcp.pop %v4798
        %v5054 = vmul.f32 %v4542, %v5053
        %v5055 = vrcp.pop %v4800
        %v5056 = vmul.f32 %v4544, %v5055
        %v5057 = vrcp.pop %v4802
        %v5058 = vmul.f32 %v4546, %v5057
        %v5059 = vrcp.pop %v4804
        %v5060 = vmul.f32 %v4548, %v5059
        %v5061 = vrcp.pop %v4806
        %v5062 = vmul.f32 %v4550, %v5061
        %v5063 = vrcp.pop %v4808
        %v5064 = vmul.f32 %v4552, %v5063
        %v5065 = vrcp.pop %v4810
        %v5066 = vmul.f32 %v4554, %v5065
        %v5067 = vrcp.pop %v4812
        %v5068 = vmul.f32 %v4556, %v5067
        %v5069 = vrcp.pop %v4814
        %v5070 = vmul.f32 %v4558, %v5069
        %v5071 = vrcp.pop %v4816
        %v5072 = vmul.f32 %v4560, %v5071
        %v5073 = vrcp.pop %v4818
        %v5074 = vmul.f32 %v4562, %v5073
        %v5075 = vrcp.pop %v4820
        %v5076 = vmul.f32 %v4564, %v5075
        %v5077 = vrcp.pop %v4822
        %v5078 = vmul.f32 %v4566, %v5077
        %v5079 = vrcp.pop %v4824
        %v5080 = vmul.f32 %v4568, %v5079
        %v5081 = vrcp.pop %v4826
        %v5082 = vmul.f32 %v4570, %v5081
        %v5083 = vrcp.pop %v4828
        %v5084 = vmul.f32 %v4572, %v5083
        %v5085 = vrcp.pop %v4830
        %v5086 = vmul.f32 %v4574, %v5085
        %v5087 = vrcp.pop %v4832
        %v5088 = vmul.f32 %v4576, %v5087
        %v5089 = vrcp.pop %v4834
        %v5090 = vmul.f32 %v4578, %v5089
        %v5091 = vrcp.pop %v4836
        %v5092 = vmul.f32 %v4580, %v5091
        %v5093 = vrcp.pop %v4838
        %v5094 = vmul.f32 %v4582, %v5093
        %v5095 = vrcp.pop %v4840
        %v5096 = vmul.f32 %v4584, %v5095
        %v5097 = vrcp.pop %v4842
        %v5098 = vmul.f32 %v4586, %v5097
        %v5099 = vrcp.pop %v4844
        %v5100 = vmul.f32 %v4588, %v5099
        %v5101 = vrcp.pop %v4846
        %v5102 = vmul.f32 %v4590, %v5101
        %v5103 = vrcp.pop %v4848
        %v5104 = vmul.f32 %v4592, %v5103
        %v5105 = vrcp.pop %v4850
        %v5106 = vmul.f32 %v4594, %v5105
        %v5107 = vrcp.pop %v4852
        %v5108 = vmul.f32 %v4596, %v5107
        %v5109 = vrcp.pop %v4854
        %v5110 = vmul.f32 %v4598, %v5109
        %v5111 = vrcp.pop %v4856
        %v5112 = vmul.f32 %v4600, %v5111
        %v5113 = vrcp.pop %v4858
        %v5114 = vmul.f32 %v4602, %v5113
        %v5115 = vrcp.pop %v4860
        %v5116 = vmul.f32 %v4604, %v5115
        %5117 = vst [vmem:[%s272] sm:$0xff] %v4862
        %5118 = vst [vmem:[%s272 + $0x8] sm:$0xff] %v4864
        %5119 = vst [vmem:[%s272 + $0x10] sm:$0xff] %v4866
        %5120 = vst [vmem:[%s272 + $0x18] sm:$0xff] %v4868
        %5121 = vst [vmem:[%s272 + $0x20] sm:$0xff] %v4870
        %5122 = vst [vmem:[%s272 + $0x28] sm:$0xff] %v4872
        %5123 = vst [vmem:[%s272 + $0x30] sm:$0xff] %v4874
        %5124 = vst [vmem:[%s272 + $0x38] sm:$0xff] %v4876
        %5125 = vst [vmem:[%s272 + $0x40] sm:$0xff] %v4878
        %5126 = vst [vmem:[%s272 + $0x48] sm:$0xff] %v4880
        %5127 = vst [vmem:[%s272 + $0x50] sm:$0xff] %v4882
        %5128 = vst [vmem:[%s272 + $0x58] sm:$0xff] %v4884
        %5129 = vst [vmem:[%s272 + $0x60] sm:$0xff] %v4886
        %5130 = vst [vmem:[%s272 + $0x68] sm:$0xff] %v4888
        %5131 = vst [vmem:[%s272 + $0x70] sm:$0xff] %v4890
        %5132 = vst [vmem:[%s272 + $0x78] sm:$0xff] %v4892
        %5133 = vst [vmem:[%s272 + $0x80] sm:$0xff] %v4894
        %5134 = vst [vmem:[%s272 + $0x88] sm:$0xff] %v4896
        %5135 = vst [vmem:[%s272 + $0x90] sm:$0xff] %v4898
        %5136 = vst [vmem:[%s272 + $0x98] sm:$0xff] %v4900
        %5137 = vst [vmem:[%s272 + $0xa0] sm:$0xff] %v4902
        %5138 = vst [vmem:[%s272 + $0xa8] sm:$0xff] %v4904
        %5139 = vst [vmem:[%s272 + $0xb0] sm:$0xff] %v4906
        %5140 = vst [vmem:[%s272 + $0xb8] sm:$0xff] %v4908
        %5141 = vst [vmem:[%s272 + $0xc0] sm:$0xff] %v4910
        %5142 = vst [vmem:[%s272 + $0xc8] sm:$0xff] %v4912
        %5143 = vst [vmem:[%s272 + $0xd0] sm:$0xff] %v4914
        %5144 = vst [vmem:[%s272 + $0xd8] sm:$0xff] %v4916
        %5145 = vst [vmem:[%s272 + $0xe0] sm:$0xff] %v4918
        %5146 = vst [vmem:[%s272 + $0xe8] sm:$0xff] %v4920
        %5147 = vst [vmem:[%s272 + $0xf0] sm:$0xff] %v4922
        %5148 = vst [vmem:[%s272 + $0xf8] sm:$0xff] %v4924
        %5149 = vst [vmem:[%s272 + $0x100] sm:$0xff] %v4926
        %5150 = vst [vmem:[%s272 + $0x108] sm:$0xff] %v4928
        %5151 = vst [vmem:[%s272 + $0x110] sm:$0xff] %v4930
        %5152 = vst [vmem:[%s272 + $0x118] sm:$0xff] %v4932
        %5153 = vst [vmem:[%s272 + $0x120] sm:$0xff] %v4934
        %5154 = vst [vmem:[%s272 + $0x128] sm:$0xff] %v4936
        %5155 = vst [vmem:[%s272 + $0x130] sm:$0xff] %v4938
        %5156 = vst [vmem:[%s272 + $0x138] sm:$0xff] %v4940
        %5157 = vst [vmem:[%s272 + $0x140] sm:$0xff] %v4942
        %5158 = vst [vmem:[%s272 + $0x148] sm:$0xff] %v4944
        %5159 = vst [vmem:[%s272 + $0x150] sm:$0xff] %v4946
        %5160 = vst [vmem:[%s272 + $0x158] sm:$0xff] %v4948
        %5161 = vst [vmem:[%s272 + $0x160] sm:$0xff] %v4950
        %5162 = vst [vmem:[%s272 + $0x168] sm:$0xff] %v4952
        %5163 = vst [vmem:[%s272 + $0x170] sm:$0xff] %v4954
        %5164 = vst [vmem:[%s272 + $0x178] sm:$0xff] %v4956
        %5165 = vst [vmem:[%s272 + $0x180] sm:$0xff] %v4958
        %5166 = vst [vmem:[%s272 + $0x188] sm:$0xff] %v4960
        %5167 = vst [vmem:[%s272 + $0x190] sm:$0xff] %v4962
        %5168 = vst [vmem:[%s272 + $0x198] sm:$0xff] %v4964
        %5169 = vst [vmem:[%s272 + $0x1a0] sm:$0xff] %v4966
        %5170 = vst [vmem:[%s272 + $0x1a8] sm:$0xff] %v4968
        %5171 = vst [vmem:[%s272 + $0x1b0] sm:$0xff] %v4970
        %5172 = vst [vmem:[%s272 + $0x1b8] sm:$0xff] %v4972
        %5173 = vst [vmem:[%s272 + $0x1c0] sm:$0xff] %v4974
        %5174 = vst [vmem:[%s272 + $0x1c8] sm:$0xff] %v4976
        %5175 = vst [vmem:[%s272 + $0x1d0] sm:$0xff] %v4978
        %5176 = vst [vmem:[%s272 + $0x1d8] sm:$0xff] %v4980
        %5177 = vst [vmem:[%s272 + $0x1e0] sm:$0xff] %v4982
        %5178 = vst [vmem:[%s272 + $0x1e8] sm:$0xff] %v4984
        %5179 = vst [vmem:[%s272 + $0x1f0] sm:$0xff] %v4986
        %5180 = vst [vmem:[%s272 + $0x1f8] sm:$0xff] %v4988
        %5181 = vst [vmem:[%s272 + $0x200] sm:$0xff] %v4990
        %5182 = vst [vmem:[%s272 + $0x208] sm:$0xff] %v4992
        %5183 = vst [vmem:[%s272 + $0x210] sm:$0xff] %v4994
        %5184 = vst [vmem:[%s272 + $0x218] sm:$0xff] %v4996
        %5185 = vst [vmem:[%s272 + $0x220] sm:$0xff] %v4998
        %5186 = vst [vmem:[%s272 + $0x228] sm:$0xff] %v5000
        %5187 = vst [vmem:[%s272 + $0x230] sm:$0xff] %v5002
        %5188 = vst [vmem:[%s272 + $0x238] sm:$0xff] %v5004
        %5189 = vst [vmem:[%s272 + $0x240] sm:$0xff] %v5006
        %5190 = vst [vmem:[%s272 + $0x248] sm:$0xff] %v5008
        %5191 = vst [vmem:[%s272 + $0x250] sm:$0xff] %v5010
        %5192 = vst [vmem:[%s272 + $0x258] sm:$0xff] %v5012
        %5193 = vst [vmem:[%s272 + $0x260] sm:$0xff] %v5014
        %5194 = vst [vmem:[%s272 + $0x268] sm:$0xff] %v5016
        %5195 = vst [vmem:[%s272 + $0x270] sm:$0xff] %v5018
        %5196 = vst [vmem:[%s272 + $0x278] sm:$0xff] %v5020
        %5197 = vst [vmem:[%s272 + $0x280] sm:$0xff] %v5022
        %5198 = vst [vmem:[%s272 + $0x288] sm:$0xff] %v5024
        %5199 = vst [vmem:[%s272 + $0x290] sm:$0xff] %v5026
        %5200 = vst [vmem:[%s272 + $0x298] sm:$0xff] %v5028
        %5201 = vst [vmem:[%s272 + $0x2a0] sm:$0xff] %v5030
        %5202 = vst [vmem:[%s272 + $0x2a8] sm:$0xff] %v5032
        %5203 = vst [vmem:[%s272 + $0x2b0] sm:$0xff] %v5034
        %5204 = vst [vmem:[%s272 + $0x2b8] sm:$0xff] %v5036
        %5205 = vst [vmem:[%s272 + $0x2c0] sm:$0xff] %v5038
        %5206 = vst [vmem:[%s272 + $0x2c8] sm:$0xff] %v5040
        %5207 = vst [vmem:[%s272 + $0x2d0] sm:$0xff] %v5042
        %5208 = vst [vmem:[%s272 + $0x2d8] sm:$0xff] %v5044
        %5209 = vst [vmem:[%s272 + $0x2e0] sm:$0xff] %v5046
        %5210 = vst [vmem:[%s272 + $0x2e8] sm:$0xff] %v5048
        %5211 = vst [vmem:[%s272 + $0x2f0] sm:$0xff] %v5050
        %5212 = vst [vmem:[%s272 + $0x2f8] sm:$0xff] %v5052
        %5213 = vst [vmem:[%s272 + $0x300] sm:$0xff] %v5054
        %5214 = vst [vmem:[%s272 + $0x308] sm:$0xff] %v5056
        %5215 = vst [vmem:[%s272 + $0x310] sm:$0xff] %v5058
        %5216 = vst [vmem:[%s272 + $0x318] sm:$0xff] %v5060
        %5217 = vst [vmem:[%s272 + $0x320] sm:$0xff] %v5062
        %5218 = vst [vmem:[%s272 + $0x328] sm:$0xff] %v5064
        %5219 = vst [vmem:[%s272 + $0x330] sm:$0xff] %v5066
        %5220 = vst [vmem:[%s272 + $0x338] sm:$0xff] %v5068
        %5221 = vst [vmem:[%s272 + $0x340] sm:$0xff] %v5070
        %5222 = vst [vmem:[%s272 + $0x348] sm:$0xff] %v5072
        %5223 = vst [vmem:[%s272 + $0x350] sm:$0xff] %v5074
        %5224 = vst [vmem:[%s272 + $0x358] sm:$0xff] %v5076
        %5225 = vst [vmem:[%s272 + $0x360] sm:$0xff] %v5078
        %5226 = vst [vmem:[%s272 + $0x368] sm:$0xff] %v5080
        %5227 = vst [vmem:[%s272 + $0x370] sm:$0xff] %v5082
        %5228 = vst [vmem:[%s272 + $0x378] sm:$0xff] %v5084
        %5229 = vst [vmem:[%s272 + $0x380] sm:$0xff] %v5086
        %5230 = vst [vmem:[%s272 + $0x388] sm:$0xff] %v5088
        %5231 = vst [vmem:[%s272 + $0x390] sm:$0xff] %v5090
        %5232 = vst [vmem:[%s272 + $0x398] sm:$0xff] %v5092
        %5233 = vst [vmem:[%s272 + $0x3a0] sm:$0xff] %v5094
        %5234 = vst [vmem:[%s272 + $0x3a8] sm:$0xff] %v5096
        %5235 = vst [vmem:[%s272 + $0x3b0] sm:$0xff] %v5098
        %5236 = vst [vmem:[%s272 + $0x3b8] sm:$0xff] %v5100
        %5237 = vst [vmem:[%s272 + $0x3c0] sm:$0xff] %v5102
        %5238 = vst [vmem:[%s272 + $0x3c8] sm:$0xff] %v5104
        %5239 = vst [vmem:[%s272 + $0x3d0] sm:$0xff] %v5106
        %5240 = vst [vmem:[%s272 + $0x3d8] sm:$0xff] %v5108
        %5241 = vst [vmem:[%s272 + $0x3e0] sm:$0xff] %v5110
        %5242 = vst [vmem:[%s272 + $0x3e8] sm:$0xff] %v5112
        %5243 = vst [vmem:[%s272 + $0x3f0] sm:$0xff] %v5114
        %5244 = vst [vmem:[%s272 + $0x3f8] sm:$0xff] %v5116
        %s5245 = sand.u32 %s181, 1
        %s5246 = scalar_lea.sflag [#allocation3], %s5245
        %s5247 = sand.u32 %s181, 1
        %s5248 = smul.addr %s5247, 1024
        %s5249 = scalar_lea.vmem [#allocation2], %s5248
        // Predicated region
        $region49: #{tpu_custom_call.1} parent=47 // pred_check
          %p5250 = pneg %p191
        $region50: #{tpu_custom_call.1} parent=47 // pred_check_branch
          %5252 = sbr.rel (%p5250) target = $region52
        $region51: #{tpu_custom_call.1} parent=47 // pred_region
          %s5253 = smul.u32 128, %s21
          %s5255 = ssub.s32 16384, 16384
          %5256 = vsyncadd %s5246, %s5255
          %s5257 = smul.addr %s5253, 128
          %s5258 = scalar_lea.hbm %s7, %s5257
          %s5259 = sshll.u32 %s5249, 4
          %s5260 = int_to_ptr.vmem [resolvable:$true] %s5259
          %5265 = dma.vmem_to_hbm [thread:$0]  %s5260, 16384, %s5258, %s5246, 128, 128, 8
        $region52: #{tpu_custom_call.1} parent=47 // pred_fallthru
          _
      $region48: #{tpu_custom_call.1} parent=5 // pred_fallthru
        _
      %p5266 = scmp.le.s32.totalorder 2, %s16
      // Predicated region
      $region53: #{tpu_custom_call.1} parent=5 // pred_check
        %p5267 = pneg %p5266
      $region54: #{tpu_custom_call.1} parent=5 // pred_check_branch
        %5269 = sbr.rel (%p5267) target = $region56
      $region55: #{tpu_custom_call.1} parent=5 // pred_region
        %s5270 = ssub.s32 %s16, 2
        // Predicated region
        $region57: #{tpu_custom_call.1} parent=55 // pred_check
          %p5271 = pneg %p197
        $region58: #{tpu_custom_call.1} parent=55 // pred_check_branch
          %5273 = sbr.rel (%p5271) target = $region60
        $region59: #{tpu_custom_call.1} parent=55 // pred_region
          %s5274 = sand.u32 %s182, 1
          %s5275 = scalar_lea.sflag [#allocation3], %s5274
          %s5276 = sand.u32 %s182, 1
          %s5277 = smul.addr %s5276, 1024
          %s5278 = scalar_lea.vmem [#allocation2], %s5277
          %5279 = dma.done %s5275, 16384
        $region60: #{tpu_custom_call.1} parent=55 // pred_fallthru
          _
      $region56: #{tpu_custom_call.1} parent=5 // pred_fallthru
        _
    $region6: #{tpu_custom_call.1} parent=1 // loop_footer
      %s20 = sadd.s32 1, %s16
    $region7: #{tpu_custom_call.1} parent=1 // loop_footer_branch
      %15 = sbr.rel target = $region3
    $region8: #{tpu_custom_call.1} parent=1 // loop_exit
      _
    %5280 = vsyncpa [#allocation3], 1
    %s5281 = scalar_lea.sflag [#allocation3], 1
    %5282 = vsyncpa %s5281, 1

</llo_original>
